<compile_context>
chip_gen: v6e
topology: v6e:2x2x1
jax: 0.10.0
libtpu: 0.0.40
codegen_flags: <defaults>
</compile_context>

<pallas_src>
import functools
import jax
import jax.numpy as jnp
from jax.experimental import pallas as pl
from jax.experimental.pallas import tpu as pltpu

TAU = 2.0
INV_TAU = 1.0 / TAU


def _lif(mem, x, thr):
    """One LIF step. mem/x f32. Returns (new_mem, spikes) both f32."""
    v = mem + (x - mem) * INV_TAU
    s = (v >= thr).astype(jnp.float32)
    return v * (1.0 - s), s


# --------------------------- fused MS block kernel ---------------------------

def _ms_block_kernel(x_ref,
                     w_qkv_ref, s_qkv_ref, b_qkv_ref,
                     w_proj_ref, s_proj_ref, b_proj_ref,
                     w_fc1_ref, s_fc1_ref, b_fc1_ref,
                     w_fc2_ref, s_fc2_ref, b_fc2_ref,
                     o_ref, *, T, bt, N, C, Hd):
    """One MS_Block_Conv (SSA + MLP) for `bt` batch elements, all T timesteps.

    The T loops are unrolled (T is a compile-time constant); membranes live in
    registers/compiler-managed VMEM temporaries, so no scratch is needed and
    every 1x1-conv is a single (T*bt*N, Cin) x (Cin, Cout) MXU matmul in bf16.
    """
    R = bt * N
    x_all = x_ref[...].reshape(T, R, C)                     # f32 residual stream

    # ---- shortcut_lif (thr=1) over T, then fused q/k/v 1x1-conv + folded BN --
    mem = jnp.zeros((R, C), jnp.float32)
    spikes = []
    for t in range(T):
        mem, s = _lif(mem, x_all[t], 1.0)
        spikes.append(s)
    s_in = jnp.concatenate(spikes, axis=0).astype(jnp.bfloat16)   # (T*R, C)
    qkv = jnp.dot(s_in, w_qkv_ref[...], preferred_element_type=jnp.float32)
    qkv = qkv * s_qkv_ref[...] + b_qkv_ref[...]
    qkv = qkv.reshape(T, R, 3 * C)

    # ---- q/k/v LIF (thr=1) + spike-driven attention core (per t) ------------
    #   kv   = sum_n (k_spike * v_spike)   (per channel; head split is a pure
    #                                       reshape so it is omitted)
    #   kv_s = talking_heads_lif(kv)       (thr=0.5)
    #   y    = q_spike * kv_s              (broadcast over tokens)
    #   out  = attn_lif(y)                 (thr=0.5)
    mem_qkv = jnp.zeros((R, 3 * C), jnp.float32)
    mem_kv = jnp.zeros((bt, C), jnp.float32)
    mem_attn = jnp.zeros((R, C), jnp.float32)
    attn_spikes = []
    for t in range(T):
        mem_qkv, sq = _lif(mem_qkv, qkv[t], 1.0)
        q = sq[:, :C]
        k = sq[:, C:2 * C]
        v = sq[:, 2 * C:]
        kv = jnp.sum((k * v).reshape(bt, N, C), axis=1)          # (bt, C)
        mem_kv, kv_s = _lif(mem_kv, kv, 0.5)                     # talking_heads_lif
        y = (q.reshape(bt, N, C) * kv_s[:, None, :]).reshape(R, C)
        mem_attn, sa = _lif(mem_attn, y, 0.5)                    # attn_lif
        attn_spikes.append(sa)
    s_attn = jnp.concatenate(attn_spikes, axis=0).astype(jnp.bfloat16)
    proj = jnp.dot(s_attn, w_proj_ref[...], preferred_element_type=jnp.float32)
    proj = proj * s_proj_ref[...] + b_proj_ref[...]
    x2 = proj + x_all.reshape(T * R, C)                          # residual #1

    # ---- MS_MLP_Conv: fc1_lif -> fc1+BN -> fc2_lif -> fc2+BN -> residual ----
    x2_t = x2.reshape(T, R, C)
    mem_fc1 = jnp.zeros((R, C), jnp.float32)
    s1 = []
    for t in range(T):
        mem_fc1, s = _lif(mem_fc1, x2_t[t], 1.0)
        s1.append(s)
    s1_all = jnp.concatenate(s1, axis=0).astype(jnp.bfloat16)
    h = jnp.dot(s1_all, w_fc1_ref[...], preferred_element_type=jnp.float32)
    h = (h * s_fc1_ref[...] + b_fc1_ref[...]).reshape(T, R, Hd)

    mem_fc2 = jnp.zeros((R, Hd), jnp.float32)
    s2 = []
    for t in range(T):
        mem_fc2, s = _lif(mem_fc2, h[t], 1.0)
        s2.append(s)
    s2_all = jnp.concatenate(s2, axis=0).astype(jnp.bfloat16)
    y = jnp.dot(s2_all, w_fc2_ref[...], preferred_element_type=jnp.float32)
    y = y * s_fc2_ref[...] + b_fc2_ref[...]

    o_ref[...] = (y + x2).reshape(T, bt, N, C)                   # residual #2


def ms_block(x, p, *, bt):
    """One MS_Block_Conv. x: (T, B, N, C) f32 -> same shape."""
    T, B, N, C = x.shape
    Hd = p["w_fc1"].shape[1]
    assert B % bt == 0

    x_spec = pl.BlockSpec((T, bt, N, C), lambda b: (0, b, 0, 0))

    def const_spec(a):
        return pl.BlockSpec(a.shape, lambda b: (0, 0))

    weights = (p["w_qkv"], p["s_qkv"], p["b_qkv"],
               p["w_proj"], p["s_proj"], p["b_proj"],
               p["w_fc1"], p["s_fc1"], p["b_fc1"],
               p["w_fc2"], p["s_fc2"], p["b_fc2"])

    return pl.pallas_call(
        functools.partial(_ms_block_kernel, T=T, bt=bt, N=N, C=C, Hd=Hd),
        out_shape=jax.ShapeDtypeStruct((T, B, N, C), jnp.float32),
        grid_spec=pltpu.PrefetchScalarGridSpec(
            num_scalar_prefetch=0,
            grid=(B // bt,),
            in_specs=[x_spec] + [const_spec(w) for w in weights],
            out_specs=x_spec,
        ),
        compiler_params=pltpu.CompilerParams(
            dimension_semantics=("parallel",),       # independent batch tiles
            vmem_limit_bytes=32 * 1024 * 1024),
    )(x, *weights)


# --------------------------- head (plain JAX) --------------------------------

def head_forward(feat, head_w, head_b):
    """head_lif over T + Linear head + mean over T (TET=False). feat: (T,B,C)."""
    def step(mem, xt):
        v = mem + (xt - mem) * INV_TAU
        s = (v >= 1.0).astype(jnp.float32)
        return v * (1.0 - s), s

    mem0 = jnp.zeros(feat.shape[1:], jnp.float32)
    _, spikes = jax.lax.scan(step, mem0, feat)
    # Linear head then mean over T == head(mean over T of spikes) by linearity.
    return jnp.mean(spikes, axis=0) @ head_w + head_b


# --------------------------- model glue --------------------------------------

def spike_driven_transformer(x_btchw, params):
    """x_btchw: (B, T, C, H, W), C == embed_dims. Returns (B, num_classes)."""
    # PyTorch forward: x.permute(1,0,2,3,4) -> (T, B, C, H, W)
    x = jnp.transpose(x_btchw, (1, 0, 2, 3, 4)).astype(jnp.float32)
    T, B, C, H, W = x.shape
    N = H * W
    # (T, B, C, H, W) -> (T, B, N, C)
    x = jnp.transpose(x.reshape(T, B, C, N), (0, 1, 3, 2))
    # >=2 batch tiles when B>=2 so v7x's two TensorCores both get work; each
    # tile still gives the MXU M = T*bt*N >= 256 rows per matmul.
    bt = 1 if B >= 2 else B
    for blk in params["blocks"]:
        x = ms_block(x, blk, bt=bt)
    # x.flatten(3).mean(3): spatial mean -> (T, B, C)
    feat = jnp.mean(x, axis=2)
    # head_lif + Linear head + mean over T (tiny; plain JAX)
    return head_forward(feat, params["head_w"], params["head_b"])


def init_params(key, *, embed_dims, mlp_ratio, depths, num_classes):
    eps = 1e-5
    bn_scale = float(1.0 / jnp.sqrt(1.0 + eps))   # gamma=1, running_var=1
    C = embed_dims
    Hd = int(C * mlp_ratio)

    def conv_w(k, cin, cout):
        # trunc_normal_(std=0.02) on a (cout,cin,1,1) 1x1-conv kernel, stored
        # as (cin, cout) in bf16 (spikes are {0,1} so bf16 matmul is near-
        # lossless); y = x @ W matches the NCHW 1x1 conv.
        w = 0.02 * jax.random.truncated_normal(k, -2.0, 2.0, (cin, cout),
                                               jnp.float32)
        return w.astype(jnp.bfloat16)

    blocks = []
    for _ in range(depths):
        key, k1, k2, k3, k4 = jax.random.split(key, 5)
        blocks.append(dict(
            w_qkv=conv_w(k1, C, 3 * C),
            s_qkv=jnp.full((1, 3 * C), bn_scale, jnp.float32),
            b_qkv=jnp.zeros((1, 3 * C), jnp.float32),
            w_proj=conv_w(k2, C, C),
            s_proj=jnp.full((1, C), bn_scale, jnp.float32),
            b_proj=jnp.zeros((1, C), jnp.float32),
            w_fc1=conv_w(k3, C, Hd),
            s_fc1=jnp.full((1, Hd), bn_scale, jnp.float32),
            b_fc1=jnp.zeros((1, Hd), jnp.float32),
            w_fc2=conv_w(k4, Hd, C),
            s_fc2=jnp.full((1, C), bn_scale, jnp.float32),
            b_fc2=jnp.zeros((1, C), jnp.float32),
        ))
    key, kw, kb = jax.random.split(key, 3)
    bound = 1.0 / (C ** 0.5)                      # torch.nn.Linear default init
    head_w = jax.random.uniform(kw, (C, num_classes), jnp.float32, -bound, bound)
    head_b = jax.random.uniform(kb, (1, num_classes), jnp.float32, -bound, bound)
    return dict(blocks=blocks, head_w=head_w, head_b=head_b)


if __name__ == "__main__":
    # Small shapes consistent with the forward (no patch_embed conv is applied
    # in forward_features, so the input channel count must equal embed_dims).
    B, T, C, H, W = 2, 4, 128, 8, 8
    num_classes = 11
    key = jax.random.PRNGKey(0)
    kx, kp = jax.random.split(key)
    x = jax.random.normal(kx, (B, T, C, H, W), jnp.float32)
    params = init_params(kp, embed_dims=C, mlp_ratio=4, depths=2,
                         num_classes=num_classes)

    logits = spike_driven_transformer(x, params)
    logits = jax.block_until_ready(logits)
    assert logits.shape == (B, num_classes)
    assert bool(jnp.all(jnp.isfinite(logits)))
    print("KERNEL_OK")
</pallas_src>

<mosaic_0001>
module attributes {stable_mosaic.version = 11 : i64} {
  func.func @_ms_block_kernel(%arg0: i32, %arg1: memref<4x1x64x128xf32, #tpu.memory_space<vmem>>, %arg2: memref<128x384xbf16, #tpu.memory_space<vmem>>, %arg3: memref<1x384xf32, #tpu.memory_space<vmem>>, %arg4: memref<1x384xf32, #tpu.memory_space<vmem>>, %arg5: memref<128x128xbf16, #tpu.memory_space<vmem>>, %arg6: memref<1x128xf32, #tpu.memory_space<vmem>>, %arg7: memref<1x128xf32, #tpu.memory_space<vmem>>, %arg8: memref<128x512xbf16, #tpu.memory_space<vmem>>, %arg9: memref<1x512xf32, #tpu.memory_space<vmem>>, %arg10: memref<1x512xf32, #tpu.memory_space<vmem>>, %arg11: memref<512x128xbf16, #tpu.memory_space<vmem>>, %arg12: memref<1x128xf32, #tpu.memory_space<vmem>>, %arg13: memref<1x128xf32, #tpu.memory_space<vmem>>, %arg14: memref<4x1x64x128xf32, #tpu.memory_space<vmem>>) attributes {dimension_semantics = [#tpu.dimension_semantics<parallel>], iteration_bounds = array<i64: 2>, scalar_prefetch = 0 : i64, scratch_operands = 0 : i64, tpu.core_type = #tpu.core_type<tc>, window_params = [{transform_indices = @transform_0, window_bounds = array<i64: 4, 1, 64, 128>}, {pipeline_mode = #tpu.pipeline_mode<synchronous>, transform_indices = @transform_1, window_bounds = array<i64: 128, 384>}, {pipeline_mode = #tpu.pipeline_mode<synchronous>, transform_indices = @transform_2, window_bounds = array<i64: 1, 384>}, {pipeline_mode = #tpu.pipeline_mode<synchronous>, transform_indices = @transform_3, window_bounds = array<i64: 1, 384>}, {pipeline_mode = #tpu.pipeline_mode<synchronous>, transform_indices = @transform_4, window_bounds = array<i64: 128, 128>}, {pipeline_mode = #tpu.pipeline_mode<synchronous>, transform_indices = @transform_5, window_bounds = array<i64: 1, 128>}, {pipeline_mode = #tpu.pipeline_mode<synchronous>, transform_indices = @transform_6, window_bounds = array<i64: 1, 128>}, {pipeline_mode = #tpu.pipeline_mode<synchronous>, transform_indices = @transform_7, window_bounds = array<i64: 128, 512>}, {pipeline_mode = #tpu.pipeline_mode<synchronous>, transform_indices = @transform_8, window_bounds = array<i64: 1, 512>}, {pipeline_mode = #tpu.pipeline_mode<synchronous>, transform_indices = @transform_9, window_bounds = array<i64: 1, 512>}, {pipeline_mode = #tpu.pipeline_mode<synchronous>, transform_indices = @transform_10, window_bounds = array<i64: 512, 128>}, {pipeline_mode = #tpu.pipeline_mode<synchronous>, transform_indices = @transform_11, window_bounds = array<i64: 1, 128>}, {pipeline_mode = #tpu.pipeline_mode<synchronous>, transform_indices = @transform_12, window_bounds = array<i64: 1, 128>}, {transform_indices = @transform_13, window_bounds = array<i64: 4, 1, 64, 128>}]} {
    %c0 = arith.constant 0 : index
    %c0_0 = arith.constant 0 : index
    %c0_1 = arith.constant 0 : index
    %c0_2 = arith.constant 0 : index
    %0 = vector.load %arg1[%c0, %c0_0, %c0_1, %c0_2] : memref<4x1x64x128xf32, #tpu.memory_space<vmem>>, vector<4x1x64x128xf32>
    %1 = vector.shape_cast %0 : vector<4x1x64x128xf32> to vector<4x64x128xf32>
    %cst = arith.constant 0.000000e+00 : f32
    %2 = vector.broadcast %cst : f32 to vector<64x128xf32>
    %3 = vector.extract_strided_slice %1 {offsets = [0, 0, 0], sizes = [1, 64, 128], strides = [1, 1, 1]} : vector<4x64x128xf32> to vector<1x64x128xf32>
    %4 = vector.shape_cast %3 : vector<1x64x128xf32> to vector<64x128xf32>
    %5 = arith.subf %4, %2 : vector<64x128xf32>
    %cst_3 = arith.constant 5.000000e-01 : f32
    %6 = vector.broadcast %cst_3 : f32 to vector<64x128xf32>
    %7 = arith.mulf %5, %6 : vector<64x128xf32>
    %8 = arith.addf %2, %7 : vector<64x128xf32>
    %cst_4 = arith.constant 1.000000e+00 : f32
    %9 = vector.broadcast %cst_4 : f32 to vector<64x128xf32>
    %10 = arith.cmpf oge, %8, %9 : vector<64x128xf32>
    %11 = arith.extui %10 : vector<64x128xi1> to vector<64x128xi32>
    %12 = arith.sitofp %11 : vector<64x128xi32> to vector<64x128xf32>
    %cst_5 = arith.constant 1.000000e+00 : f32
    %13 = vector.broadcast %cst_5 : f32 to vector<64x128xf32>
    %14 = arith.subf %13, %12 : vector<64x128xf32>
    %15 = arith.mulf %8, %14 : vector<64x128xf32>
    %16 = vector.extract_strided_slice %1 {offsets = [1, 0, 0], sizes = [1, 64, 128], strides = [1, 1, 1]} : vector<4x64x128xf32> to vector<1x64x128xf32>
    %17 = vector.shape_cast %16 : vector<1x64x128xf32> to vector<64x128xf32>
    %18 = arith.subf %17, %15 : vector<64x128xf32>
    %cst_6 = arith.constant 5.000000e-01 : f32
    %19 = vector.broadcast %cst_6 : f32 to vector<64x128xf32>
    %20 = arith.mulf %18, %19 : vector<64x128xf32>
    %21 = arith.addf %15, %20 : vector<64x128xf32>
    %cst_7 = arith.constant 1.000000e+00 : f32
    %22 = vector.broadcast %cst_7 : f32 to vector<64x128xf32>
    %23 = arith.cmpf oge, %21, %22 : vector<64x128xf32>
    %24 = arith.extui %23 : vector<64x128xi1> to vector<64x128xi32>
    %25 = arith.sitofp %24 : vector<64x128xi32> to vector<64x128xf32>
    %cst_8 = arith.constant 1.000000e+00 : f32
    %26 = vector.broadcast %cst_8 : f32 to vector<64x128xf32>
    %27 = arith.subf %26, %25 : vector<64x128xf32>
    %28 = arith.mulf %21, %27 : vector<64x128xf32>
    %29 = vector.extract_strided_slice %1 {offsets = [2, 0, 0], sizes = [1, 64, 128], strides = [1, 1, 1]} : vector<4x64x128xf32> to vector<1x64x128xf32>
    %30 = vector.shape_cast %29 : vector<1x64x128xf32> to vector<64x128xf32>
    %31 = arith.subf %30, %28 : vector<64x128xf32>
    %cst_9 = arith.constant 5.000000e-01 : f32
    %32 = vector.broadcast %cst_9 : f32 to vector<64x128xf32>
    %33 = arith.mulf %31, %32 : vector<64x128xf32>
    %34 = arith.addf %28, %33 : vector<64x128xf32>
    %cst_10 = arith.constant 1.000000e+00 : f32
    %35 = vector.broadcast %cst_10 : f32 to vector<64x128xf32>
    %36 = arith.cmpf oge, %34, %35 : vector<64x128xf32>
    %37 = arith.extui %36 : vector<64x128xi1> to vector<64x128xi32>
    %38 = arith.sitofp %37 : vector<64x128xi32> to vector<64x128xf32>
    %cst_11 = arith.constant 1.000000e+00 : f32
    %39 = vector.broadcast %cst_11 : f32 to vector<64x128xf32>
    %40 = arith.subf %39, %38 : vector<64x128xf32>
    %41 = arith.mulf %34, %40 : vector<64x128xf32>
    %42 = vector.extract_strided_slice %1 {offsets = [3, 0, 0], sizes = [1, 64, 128], strides = [1, 1, 1]} : vector<4x64x128xf32> to vector<1x64x128xf32>
    %43 = vector.shape_cast %42 : vector<1x64x128xf32> to vector<64x128xf32>
    %44 = arith.subf %43, %41 : vector<64x128xf32>
    %cst_12 = arith.constant 5.000000e-01 : f32
    %45 = vector.broadcast %cst_12 : f32 to vector<64x128xf32>
    %46 = arith.mulf %44, %45 : vector<64x128xf32>
    %47 = arith.addf %41, %46 : vector<64x128xf32>
    %cst_13 = arith.constant 1.000000e+00 : f32
    %48 = vector.broadcast %cst_13 : f32 to vector<64x128xf32>
    %49 = arith.cmpf oge, %47, %48 : vector<64x128xf32>
    %50 = arith.extui %49 : vector<64x128xi1> to vector<64x128xi32>
    %51 = arith.sitofp %50 : vector<64x128xi32> to vector<64x128xf32>
    %52 = tpu.concatenate %12, %25, %38, %51 in 0 : vector<64x128xf32>, vector<64x128xf32>, vector<64x128xf32>, vector<64x128xf32> -> vector<256x128xf32>
    %53 = arith.truncf %52 : vector<256x128xf32> to vector<256x128xbf16>
    %c0_14 = arith.constant 0 : index
    %c0_15 = arith.constant 0 : index
    %54 = vector.load %arg2[%c0_14, %c0_15] : memref<128x384xbf16, #tpu.memory_space<vmem>>, vector<128x384xbf16>
    %cst_16 = arith.constant dense<0.000000e+00> : vector<256x384xf32>
    %55 = tpu.matmul %53, %54, %cst_16 {dimension_numbers = #tpu.dot_dimension_numbers<[1], [0], [0], [1], [0, 0, 1, 1], [], []>} : vector<256x128xbf16>, vector<128x384xbf16>, vector<256x384xf32> -> vector<256x384xf32>
    %c0_17 = arith.constant 0 : index
    %c0_18 = arith.constant 0 : index
    %56 = vector.load %arg3[%c0_17, %c0_18] : memref<1x384xf32, #tpu.memory_space<vmem>>, vector<1x384xf32>
    %57 = vector.broadcast %56 : vector<1x384xf32> to vector<256x384xf32>
    %58 = arith.mulf %55, %57 : vector<256x384xf32>
    %c0_19 = arith.constant 0 : index
    %c0_20 = arith.constant 0 : index
    %59 = vector.load %arg4[%c0_19, %c0_20] : memref<1x384xf32, #tpu.memory_space<vmem>>, vector<1x384xf32>
    %60 = vector.broadcast %59 : vector<1x384xf32> to vector<256x384xf32>
    %61 = arith.addf %58, %60 : vector<256x384xf32>
    %62 = vector.shape_cast %61 : vector<256x384xf32> to vector<4x64x384xf32>
    %cst_21 = arith.constant 0.000000e+00 : f32
    %63 = vector.broadcast %cst_21 : f32 to vector<64x384xf32>
    %cst_22 = arith.constant 0.000000e+00 : f32
    %64 = vector.broadcast %cst_22 : f32 to vector<1x128xf32>
    %cst_23 = arith.constant 0.000000e+00 : f32
    %65 = vector.broadcast %cst_23 : f32 to vector<64x128xf32>
    %66 = vector.extract_strided_slice %62 {offsets = [0, 0, 0], sizes = [1, 64, 384], strides = [1, 1, 1]} : vector<4x64x384xf32> to vector<1x64x384xf32>
    %67 = vector.shape_cast %66 : vector<1x64x384xf32> to vector<64x384xf32>
    %68 = arith.subf %67, %63 : vector<64x384xf32>
    %cst_24 = arith.constant 5.000000e-01 : f32
    %69 = vector.broadcast %cst_24 : f32 to vector<64x384xf32>
    %70 = arith.mulf %68, %69 : vector<64x384xf32>
    %71 = arith.addf %63, %70 : vector<64x384xf32>
    %cst_25 = arith.constant 1.000000e+00 : f32
    %72 = vector.broadcast %cst_25 : f32 to vector<64x384xf32>
    %73 = arith.cmpf oge, %71, %72 : vector<64x384xf32>
    %74 = arith.extui %73 : vector<64x384xi1> to vector<64x384xi32>
    %75 = arith.sitofp %74 : vector<64x384xi32> to vector<64x384xf32>
    %cst_26 = arith.constant 1.000000e+00 : f32
    %76 = vector.broadcast %cst_26 : f32 to vector<64x384xf32>
    %77 = arith.subf %76, %75 : vector<64x384xf32>
    %78 = arith.mulf %71, %77 : vector<64x384xf32>
    %79 = vector.extract_strided_slice %75 {offsets = [0, 0], sizes = [64, 128], strides = [1, 1]} : vector<64x384xf32> to vector<64x128xf32>
    %80 = vector.extract_strided_slice %75 {offsets = [0, 128], sizes = [64, 128], strides = [1, 1]} : vector<64x384xf32> to vector<64x128xf32>
    %81 = vector.extract_strided_slice %75 {offsets = [0, 256], sizes = [64, 128], strides = [1, 1]} : vector<64x384xf32> to vector<64x128xf32>
    %82 = arith.mulf %80, %81 : vector<64x128xf32>
    %83 = vector.shape_cast %82 : vector<64x128xf32> to vector<1x64x128xf32>
    %cst_27 = arith.constant dense<0.000000e+00> : vector<1x128xf32>
    %84 = vector.multi_reduction <add>, %83, %cst_27 [1] : vector<1x64x128xf32> to vector<1x128xf32>
    %85 = arith.subf %84, %64 : vector<1x128xf32>
    %cst_28 = arith.constant 5.000000e-01 : f32
    %86 = vector.broadcast %cst_28 : f32 to vector<1x128xf32>
    %87 = arith.mulf %85, %86 : vector<1x128xf32>
    %88 = arith.addf %64, %87 : vector<1x128xf32>
    %cst_29 = arith.constant 5.000000e-01 : f32
    %89 = vector.broadcast %cst_29 : f32 to vector<1x128xf32>
    %90 = arith.cmpf oge, %88, %89 : vector<1x128xf32>
    %91 = arith.extui %90 : vector<1x128xi1> to vector<1x128xi32>
    %92 = arith.sitofp %91 : vector<1x128xi32> to vector<1x128xf32>
    %cst_30 = arith.constant 1.000000e+00 : f32
    %93 = vector.broadcast %cst_30 : f32 to vector<1x128xf32>
    %94 = arith.subf %93, %92 : vector<1x128xf32>
    %95 = arith.mulf %88, %94 : vector<1x128xf32>
    %96 = vector.shape_cast %79 : vector<64x128xf32> to vector<1x64x128xf32>
    %97 = vector.shape_cast %92 : vector<1x128xf32> to vector<1x1x128xf32>
    %98 = vector.broadcast %97 : vector<1x1x128xf32> to vector<1x64x128xf32>
    %99 = arith.mulf %96, %98 : vector<1x64x128xf32>
    %100 = vector.shape_cast %99 : vector<1x64x128xf32> to vector<64x128xf32>
    %101 = arith.subf %100, %65 : vector<64x128xf32>
    %cst_31 = arith.constant 5.000000e-01 : f32
    %102 = vector.broadcast %cst_31 : f32 to vector<64x128xf32>
    %103 = arith.mulf %101, %102 : vector<64x128xf32>
    %104 = arith.addf %65, %103 : vector<64x128xf32>
    %cst_32 = arith.constant 5.000000e-01 : f32
    %105 = vector.broadcast %cst_32 : f32 to vector<64x128xf32>
    %106 = arith.cmpf oge, %104, %105 : vector<64x128xf32>
    %107 = arith.extui %106 : vector<64x128xi1> to vector<64x128xi32>
    %108 = arith.sitofp %107 : vector<64x128xi32> to vector<64x128xf32>
    %cst_33 = arith.constant 1.000000e+00 : f32
    %109 = vector.broadcast %cst_33 : f32 to vector<64x128xf32>
    %110 = arith.subf %109, %108 : vector<64x128xf32>
    %111 = arith.mulf %104, %110 : vector<64x128xf32>
    %112 = vector.extract_strided_slice %62 {offsets = [1, 0, 0], sizes = [1, 64, 384], strides = [1, 1, 1]} : vector<4x64x384xf32> to vector<1x64x384xf32>
    %113 = vector.shape_cast %112 : vector<1x64x384xf32> to vector<64x384xf32>
    %114 = arith.subf %113, %78 : vector<64x384xf32>
    %cst_34 = arith.constant 5.000000e-01 : f32
    %115 = vector.broadcast %cst_34 : f32 to vector<64x384xf32>
    %116 = arith.mulf %114, %115 : vector<64x384xf32>
    %117 = arith.addf %78, %116 : vector<64x384xf32>
    %cst_35 = arith.constant 1.000000e+00 : f32
    %118 = vector.broadcast %cst_35 : f32 to vector<64x384xf32>
    %119 = arith.cmpf oge, %117, %118 : vector<64x384xf32>
    %120 = arith.extui %119 : vector<64x384xi1> to vector<64x384xi32>
    %121 = arith.sitofp %120 : vector<64x384xi32> to vector<64x384xf32>
    %cst_36 = arith.constant 1.000000e+00 : f32
    %122 = vector.broadcast %cst_36 : f32 to vector<64x384xf32>
    %123 = arith.subf %122, %121 : vector<64x384xf32>
    %124 = arith.mulf %117, %123 : vector<64x384xf32>
    %125 = vector.extract_strided_slice %121 {offsets = [0, 0], sizes = [64, 128], strides = [1, 1]} : vector<64x384xf32> to vector<64x128xf32>
    %126 = vector.extract_strided_slice %121 {offsets = [0, 128], sizes = [64, 128], strides = [1, 1]} : vector<64x384xf32> to vector<64x128xf32>
    %127 = vector.extract_strided_slice %121 {offsets = [0, 256], sizes = [64, 128], strides = [1, 1]} : vector<64x384xf32> to vector<64x128xf32>
    %128 = arith.mulf %126, %127 : vector<64x128xf32>
    %129 = vector.shape_cast %128 : vector<64x128xf32> to vector<1x64x128xf32>
    %cst_37 = arith.constant dense<0.000000e+00> : vector<1x128xf32>
    %130 = vector.multi_reduction <add>, %129, %cst_37 [1] : vector<1x64x128xf32> to vector<1x128xf32>
    %131 = arith.subf %130, %95 : vector<1x128xf32>
    %cst_38 = arith.constant 5.000000e-01 : f32
    %132 = vector.broadcast %cst_38 : f32 to vector<1x128xf32>
    %133 = arith.mulf %131, %132 : vector<1x128xf32>
    %134 = arith.addf %95, %133 : vector<1x128xf32>
    %cst_39 = arith.constant 5.000000e-01 : f32
    %135 = vector.broadcast %cst_39 : f32 to vector<1x128xf32>
    %136 = arith.cmpf oge, %134, %135 : vector<1x128xf32>
    %137 = arith.extui %136 : vector<1x128xi1> to vector<1x128xi32>
    %138 = arith.sitofp %137 : vector<1x128xi32> to vector<1x128xf32>
    %cst_40 = arith.constant 1.000000e+00 : f32
    %139 = vector.broadcast %cst_40 : f32 to vector<1x128xf32>
    %140 = arith.subf %139, %138 : vector<1x128xf32>
    %141 = arith.mulf %134, %140 : vector<1x128xf32>
    %142 = vector.shape_cast %125 : vector<64x128xf32> to vector<1x64x128xf32>
    %143 = vector.shape_cast %138 : vector<1x128xf32> to vector<1x1x128xf32>
    %144 = vector.broadcast %143 : vector<1x1x128xf32> to vector<1x64x128xf32>
    %145 = arith.mulf %142, %144 : vector<1x64x128xf32>
    %146 = vector.shape_cast %145 : vector<1x64x128xf32> to vector<64x128xf32>
    %147 = arith.subf %146, %111 : vector<64x128xf32>
    %cst_41 = arith.constant 5.000000e-01 : f32
    %148 = vector.broadcast %cst_41 : f32 to vector<64x128xf32>
    %149 = arith.mulf %147, %148 : vector<64x128xf32>
    %150 = arith.addf %111, %149 : vector<64x128xf32>
    %cst_42 = arith.constant 5.000000e-01 : f32
    %151 = vector.broadcast %cst_42 : f32 to vector<64x128xf32>
    %152 = arith.cmpf oge, %150, %151 : vector<64x128xf32>
    %153 = arith.extui %152 : vector<64x128xi1> to vector<64x128xi32>
    %154 = arith.sitofp %153 : vector<64x128xi32> to vector<64x128xf32>
    %cst_43 = arith.constant 1.000000e+00 : f32
    %155 = vector.broadcast %cst_43 : f32 to vector<64x128xf32>
    %156 = arith.subf %155, %154 : vector<64x128xf32>
    %157 = arith.mulf %150, %156 : vector<64x128xf32>
    %158 = vector.extract_strided_slice %62 {offsets = [2, 0, 0], sizes = [1, 64, 384], strides = [1, 1, 1]} : vector<4x64x384xf32> to vector<1x64x384xf32>
    %159 = vector.shape_cast %158 : vector<1x64x384xf32> to vector<64x384xf32>
    %160 = arith.subf %159, %124 : vector<64x384xf32>
    %cst_44 = arith.constant 5.000000e-01 : f32
    %161 = vector.broadcast %cst_44 : f32 to vector<64x384xf32>
    %162 = arith.mulf %160, %161 : vector<64x384xf32>
    %163 = arith.addf %124, %162 : vector<64x384xf32>
    %cst_45 = arith.constant 1.000000e+00 : f32
    %164 = vector.broadcast %cst_45 : f32 to vector<64x384xf32>
    %165 = arith.cmpf oge, %163, %164 : vector<64x384xf32>
    %166 = arith.extui %165 : vector<64x384xi1> to vector<64x384xi32>
    %167 = arith.sitofp %166 : vector<64x384xi32> to vector<64x384xf32>
    %cst_46 = arith.constant 1.000000e+00 : f32
    %168 = vector.broadcast %cst_46 : f32 to vector<64x384xf32>
    %169 = arith.subf %168, %167 : vector<64x384xf32>
    %170 = arith.mulf %163, %169 : vector<64x384xf32>
    %171 = vector.extract_strided_slice %167 {offsets = [0, 0], sizes = [64, 128], strides = [1, 1]} : vector<64x384xf32> to vector<64x128xf32>
    %172 = vector.extract_strided_slice %167 {offsets = [0, 128], sizes = [64, 128], strides = [1, 1]} : vector<64x384xf32> to vector<64x128xf32>
    %173 = vector.extract_strided_slice %167 {offsets = [0, 256], sizes = [64, 128], strides = [1, 1]} : vector<64x384xf32> to vector<64x128xf32>
    %174 = arith.mulf %172, %173 : vector<64x128xf32>
    %175 = vector.shape_cast %174 : vector<64x128xf32> to vector<1x64x128xf32>
    %cst_47 = arith.constant dense<0.000000e+00> : vector<1x128xf32>
    %176 = vector.multi_reduction <add>, %175, %cst_47 [1] : vector<1x64x128xf32> to vector<1x128xf32>
    %177 = arith.subf %176, %141 : vector<1x128xf32>
    %cst_48 = arith.constant 5.000000e-01 : f32
    %178 = vector.broadcast %cst_48 : f32 to vector<1x128xf32>
    %179 = arith.mulf %177, %178 : vector<1x128xf32>
    %180 = arith.addf %141, %179 : vector<1x128xf32>
    %cst_49 = arith.constant 5.000000e-01 : f32
    %181 = vector.broadcast %cst_49 : f32 to vector<1x128xf32>
    %182 = arith.cmpf oge, %180, %181 : vector<1x128xf32>
    %183 = arith.extui %182 : vector<1x128xi1> to vector<1x128xi32>
    %184 = arith.sitofp %183 : vector<1x128xi32> to vector<1x128xf32>
    %cst_50 = arith.constant 1.000000e+00 : f32
    %185 = vector.broadcast %cst_50 : f32 to vector<1x128xf32>
    %186 = arith.subf %185, %184 : vector<1x128xf32>
    %187 = arith.mulf %180, %186 : vector<1x128xf32>
    %188 = vector.shape_cast %171 : vector<64x128xf32> to vector<1x64x128xf32>
    %189 = vector.shape_cast %184 : vector<1x128xf32> to vector<1x1x128xf32>
    %190 = vector.broadcast %189 : vector<1x1x128xf32> to vector<1x64x128xf32>
    %191 = arith.mulf %188, %190 : vector<1x64x128xf32>
    %192 = vector.shape_cast %191 : vector<1x64x128xf32> to vector<64x128xf32>
    %193 = arith.subf %192, %157 : vector<64x128xf32>
    %cst_51 = arith.constant 5.000000e-01 : f32
    %194 = vector.broadcast %cst_51 : f32 to vector<64x128xf32>
    %195 = arith.mulf %193, %194 : vector<64x128xf32>
    %196 = arith.addf %157, %195 : vector<64x128xf32>
    %cst_52 = arith.constant 5.000000e-01 : f32
    %197 = vector.broadcast %cst_52 : f32 to vector<64x128xf32>
    %198 = arith.cmpf oge, %196, %197 : vector<64x128xf32>
    %199 = arith.extui %198 : vector<64x128xi1> to vector<64x128xi32>
    %200 = arith.sitofp %199 : vector<64x128xi32> to vector<64x128xf32>
    %cst_53 = arith.constant 1.000000e+00 : f32
    %201 = vector.broadcast %cst_53 : f32 to vector<64x128xf32>
    %202 = arith.subf %201, %200 : vector<64x128xf32>
    %203 = arith.mulf %196, %202 : vector<64x128xf32>
    %204 = vector.extract_strided_slice %62 {offsets = [3, 0, 0], sizes = [1, 64, 384], strides = [1, 1, 1]} : vector<4x64x384xf32> to vector<1x64x384xf32>
    %205 = vector.shape_cast %204 : vector<1x64x384xf32> to vector<64x384xf32>
    %206 = arith.subf %205, %170 : vector<64x384xf32>
    %cst_54 = arith.constant 5.000000e-01 : f32
    %207 = vector.broadcast %cst_54 : f32 to vector<64x384xf32>
    %208 = arith.mulf %206, %207 : vector<64x384xf32>
    %209 = arith.addf %170, %208 : vector<64x384xf32>
    %cst_55 = arith.constant 1.000000e+00 : f32
    %210 = vector.broadcast %cst_55 : f32 to vector<64x384xf32>
    %211 = arith.cmpf oge, %209, %210 : vector<64x384xf32>
    %212 = arith.extui %211 : vector<64x384xi1> to vector<64x384xi32>
    %213 = arith.sitofp %212 : vector<64x384xi32> to vector<64x384xf32>
    %214 = vector.extract_strided_slice %213 {offsets = [0, 0], sizes = [64, 128], strides = [1, 1]} : vector<64x384xf32> to vector<64x128xf32>
    %215 = vector.extract_strided_slice %213 {offsets = [0, 128], sizes = [64, 128], strides = [1, 1]} : vector<64x384xf32> to vector<64x128xf32>
    %216 = vector.extract_strided_slice %213 {offsets = [0, 256], sizes = [64, 128], strides = [1, 1]} : vector<64x384xf32> to vector<64x128xf32>
    %217 = arith.mulf %215, %216 : vector<64x128xf32>
    %218 = vector.shape_cast %217 : vector<64x128xf32> to vector<1x64x128xf32>
    %cst_56 = arith.constant dense<0.000000e+00> : vector<1x128xf32>
    %219 = vector.multi_reduction <add>, %218, %cst_56 [1] : vector<1x64x128xf32> to vector<1x128xf32>
    %220 = arith.subf %219, %187 : vector<1x128xf32>
    %cst_57 = arith.constant 5.000000e-01 : f32
    %221 = vector.broadcast %cst_57 : f32 to vector<1x128xf32>
    %222 = arith.mulf %220, %221 : vector<1x128xf32>
    %223 = arith.addf %187, %222 : vector<1x128xf32>
    %cst_58 = arith.constant 5.000000e-01 : f32
    %224 = vector.broadcast %cst_58 : f32 to vector<1x128xf32>
    %225 = arith.cmpf oge, %223, %224 : vector<1x128xf32>
    %226 = arith.extui %225 : vector<1x128xi1> to vector<1x128xi32>
    %227 = arith.sitofp %226 : vector<1x128xi32> to vector<1x128xf32>
    %228 = vector.shape_cast %214 : vector<64x128xf32> to vector<1x64x128xf32>
    %229 = vector.shape_cast %227 : vector<1x128xf32> to vector<1x1x128xf32>
    %230 = vector.broadcast %229 : vector<1x1x128xf32> to vector<1x64x128xf32>
    %231 = arith.mulf %228, %230 : vector<1x64x128xf32>
    %232 = vector.shape_cast %231 : vector<1x64x128xf32> to vector<64x128xf32>
    %233 = arith.subf %232, %203 : vector<64x128xf32>
    %cst_59 = arith.constant 5.000000e-01 : f32
    %234 = vector.broadcast %cst_59 : f32 to vector<64x128xf32>
    %235 = arith.mulf %233, %234 : vector<64x128xf32>
    %236 = arith.addf %203, %235 : vector<64x128xf32>
    %cst_60 = arith.constant 5.000000e-01 : f32
    %237 = vector.broadcast %cst_60 : f32 to vector<64x128xf32>
    %238 = arith.cmpf oge, %236, %237 : vector<64x128xf32>
    %239 = arith.extui %238 : vector<64x128xi1> to vector<64x128xi32>
    %240 = arith.sitofp %239 : vector<64x128xi32> to vector<64x128xf32>
    %241 = tpu.concatenate %108, %154, %200, %240 in 0 : vector<64x128xf32>, vector<64x128xf32>, vector<64x128xf32>, vector<64x128xf32> -> vector<256x128xf32>
    %242 = arith.truncf %241 : vector<256x128xf32> to vector<256x128xbf16>
    %c0_61 = arith.constant 0 : index
    %c0_62 = arith.constant 0 : index
    %243 = vector.load %arg5[%c0_61, %c0_62] : memref<128x128xbf16, #tpu.memory_space<vmem>>, vector<128x128xbf16>
    %cst_63 = arith.constant dense<0.000000e+00> : vector<256x128xf32>
    %244 = tpu.matmul %242, %243, %cst_63 {dimension_numbers = #tpu.dot_dimension_numbers<[1], [0], [0], [1], [0, 0, 1, 1], [], []>} : vector<256x128xbf16>, vector<128x128xbf16>, vector<256x128xf32> -> vector<256x128xf32>
    %c0_64 = arith.constant 0 : index
    %c0_65 = arith.constant 0 : index
    %245 = vector.load %arg6[%c0_64, %c0_65] : memref<1x128xf32, #tpu.memory_space<vmem>>, vector<1x128xf32>
    %246 = vector.broadcast %245 : vector<1x128xf32> to vector<256x128xf32>
    %247 = arith.mulf %244, %246 : vector<256x128xf32>
    %c0_66 = arith.constant 0 : index
    %c0_67 = arith.constant 0 : index
    %248 = vector.load %arg7[%c0_66, %c0_67] : memref<1x128xf32, #tpu.memory_space<vmem>>, vector<1x128xf32>
    %249 = vector.broadcast %248 : vector<1x128xf32> to vector<256x128xf32>
    %250 = arith.addf %247, %249 : vector<256x128xf32>
    %251 = vector.shape_cast %1 : vector<4x64x128xf32> to vector<256x128xf32>
    %252 = arith.addf %250, %251 : vector<256x128xf32>
    %253 = vector.shape_cast %252 : vector<256x128xf32> to vector<4x64x128xf32>
    %cst_68 = arith.constant 0.000000e+00 : f32
    %254 = vector.broadcast %cst_68 : f32 to vector<64x128xf32>
    %255 = vector.extract_strided_slice %253 {offsets = [0, 0, 0], sizes = [1, 64, 128], strides = [1, 1, 1]} : vector<4x64x128xf32> to vector<1x64x128xf32>
    %256 = vector.shape_cast %255 : vector<1x64x128xf32> to vector<64x128xf32>
    %257 = arith.subf %256, %254 : vector<64x128xf32>
    %cst_69 = arith.constant 5.000000e-01 : f32
    %258 = vector.broadcast %cst_69 : f32 to vector<64x128xf32>
    %259 = arith.mulf %257, %258 : vector<64x128xf32>
    %260 = arith.addf %254, %259 : vector<64x128xf32>
    %cst_70 = arith.constant 1.000000e+00 : f32
    %261 = vector.broadcast %cst_70 : f32 to vector<64x128xf32>
    %262 = arith.cmpf oge, %260, %261 : vector<64x128xf32>
    %263 = arith.extui %262 : vector<64x128xi1> to vector<64x128xi32>
    %264 = arith.sitofp %263 : vector<64x128xi32> to vector<64x128xf32>
    %cst_71 = arith.constant 1.000000e+00 : f32
    %265 = vector.broadcast %cst_71 : f32 to vector<64x128xf32>
    %266 = arith.subf %265, %264 : vector<64x128xf32>
    %267 = arith.mulf %260, %266 : vector<64x128xf32>
    %268 = vector.extract_strided_slice %253 {offsets = [1, 0, 0], sizes = [1, 64, 128], strides = [1, 1, 1]} : vector<4x64x128xf32> to vector<1x64x128xf32>
    %269 = vector.shape_cast %268 : vector<1x64x128xf32> to vector<64x128xf32>
    %270 = arith.subf %269, %267 : vector<64x128xf32>
    %cst_72 = arith.constant 5.000000e-01 : f32
    %271 = vector.broadcast %cst_72 : f32 to vector<64x128xf32>
    %272 = arith.mulf %270, %271 : vector<64x128xf32>
    %273 = arith.addf %267, %272 : vector<64x128xf32>
    %cst_73 = arith.constant 1.000000e+00 : f32
    %274 = vector.broadcast %cst_73 : f32 to vector<64x128xf32>
    %275 = arith.cmpf oge, %273, %274 : vector<64x128xf32>
    %276 = arith.extui %275 : vector<64x128xi1> to vector<64x128xi32>
    %277 = arith.sitofp %276 : vector<64x128xi32> to vector<64x128xf32>
    %cst_74 = arith.constant 1.000000e+00 : f32
    %278 = vector.broadcast %cst_74 : f32 to vector<64x128xf32>
    %279 = arith.subf %278, %277 : vector<64x128xf32>
    %280 = arith.mulf %273, %279 : vector<64x128xf32>
    %281 = vector.extract_strided_slice %253 {offsets = [2, 0, 0], sizes = [1, 64, 128], strides = [1, 1, 1]} : vector<4x64x128xf32> to vector<1x64x128xf32>
    %282 = vector.shape_cast %281 : vector<1x64x128xf32> to vector<64x128xf32>
    %283 = arith.subf %282, %280 : vector<64x128xf32>
    %cst_75 = arith.constant 5.000000e-01 : f32
    %284 = vector.broadcast %cst_75 : f32 to vector<64x128xf32>
    %285 = arith.mulf %283, %284 : vector<64x128xf32>
    %286 = arith.addf %280, %285 : vector<64x128xf32>
    %cst_76 = arith.constant 1.000000e+00 : f32
    %287 = vector.broadcast %cst_76 : f32 to vector<64x128xf32>
    %288 = arith.cmpf oge, %286, %287 : vector<64x128xf32>
    %289 = arith.extui %288 : vector<64x128xi1> to vector<64x128xi32>
    %290 = arith.sitofp %289 : vector<64x128xi32> to vector<64x128xf32>
    %cst_77 = arith.constant 1.000000e+00 : f32
    %291 = vector.broadcast %cst_77 : f32 to vector<64x128xf32>
    %292 = arith.subf %291, %290 : vector<64x128xf32>
    %293 = arith.mulf %286, %292 : vector<64x128xf32>
    %294 = vector.extract_strided_slice %253 {offsets = [3, 0, 0], sizes = [1, 64, 128], strides = [1, 1, 1]} : vector<4x64x128xf32> to vector<1x64x128xf32>
    %295 = vector.shape_cast %294 : vector<1x64x128xf32> to vector<64x128xf32>
    %296 = arith.subf %295, %293 : vector<64x128xf32>
    %cst_78 = arith.constant 5.000000e-01 : f32
    %297 = vector.broadcast %cst_78 : f32 to vector<64x128xf32>
    %298 = arith.mulf %296, %297 : vector<64x128xf32>
    %299 = arith.addf %293, %298 : vector<64x128xf32>
    %cst_79 = arith.constant 1.000000e+00 : f32
    %300 = vector.broadcast %cst_79 : f32 to vector<64x128xf32>
    %301 = arith.cmpf oge, %299, %300 : vector<64x128xf32>
    %302 = arith.extui %301 : vector<64x128xi1> to vector<64x128xi32>
    %303 = arith.sitofp %302 : vector<64x128xi32> to vector<64x128xf32>
    %304 = tpu.concatenate %264, %277, %290, %303 in 0 : vector<64x128xf32>, vector<64x128xf32>, vector<64x128xf32>, vector<64x128xf32> -> vector<256x128xf32>
    %305 = arith.truncf %304 : vector<256x128xf32> to vector<256x128xbf16>
    %c0_80 = arith.constant 0 : index
    %c0_81 = arith.constant 0 : index
    %306 = vector.load %arg8[%c0_80, %c0_81] : memref<128x512xbf16, #tpu.memory_space<vmem>>, vector<128x512xbf16>
    %cst_82 = arith.constant dense<0.000000e+00> : vector<256x512xf32>
    %307 = tpu.matmul %305, %306, %cst_82 {dimension_numbers = #tpu.dot_dimension_numbers<[1], [0], [0], [1], [0, 0, 1, 1], [], []>} : vector<256x128xbf16>, vector<128x512xbf16>, vector<256x512xf32> -> vector<256x512xf32>
    %c0_83 = arith.constant 0 : index
    %c0_84 = arith.constant 0 : index
    %308 = vector.load %arg9[%c0_83, %c0_84] : memref<1x512xf32, #tpu.memory_space<vmem>>, vector<1x512xf32>
    %309 = vector.broadcast %308 : vector<1x512xf32> to vector<256x512xf32>
    %310 = arith.mulf %307, %309 : vector<256x512xf32>
    %c0_85 = arith.constant 0 : index
    %c0_86 = arith.constant 0 : index
    %311 = vector.load %arg10[%c0_85, %c0_86] : memref<1x512xf32, #tpu.memory_space<vmem>>, vector<1x512xf32>
    %312 = vector.broadcast %311 : vector<1x512xf32> to vector<256x512xf32>
    %313 = arith.addf %310, %312 : vector<256x512xf32>
    %314 = vector.shape_cast %313 : vector<256x512xf32> to vector<4x64x512xf32>
    %cst_87 = arith.constant 0.000000e+00 : f32
    %315 = vector.broadcast %cst_87 : f32 to vector<64x512xf32>
    %316 = vector.extract_strided_slice %314 {offsets = [0, 0, 0], sizes = [1, 64, 512], strides = [1, 1, 1]} : vector<4x64x512xf32> to vector<1x64x512xf32>
    %317 = vector.shape_cast %316 : vector<1x64x512xf32> to vector<64x512xf32>
    %318 = arith.subf %317, %315 : vector<64x512xf32>
    %cst_88 = arith.constant 5.000000e-01 : f32
    %319 = vector.broadcast %cst_88 : f32 to vector<64x512xf32>
    %320 = arith.mulf %318, %319 : vector<64x512xf32>
    %321 = arith.addf %315, %320 : vector<64x512xf32>
    %cst_89 = arith.constant 1.000000e+00 : f32
    %322 = vector.broadcast %cst_89 : f32 to vector<64x512xf32>
    %323 = arith.cmpf oge, %321, %322 : vector<64x512xf32>
    %324 = arith.extui %323 : vector<64x512xi1> to vector<64x512xi32>
    %325 = arith.sitofp %324 : vector<64x512xi32> to vector<64x512xf32>
    %cst_90 = arith.constant 1.000000e+00 : f32
    %326 = vector.broadcast %cst_90 : f32 to vector<64x512xf32>
    %327 = arith.subf %326, %325 : vector<64x512xf32>
    %328 = arith.mulf %321, %327 : vector<64x512xf32>
    %329 = vector.extract_strided_slice %314 {offsets = [1, 0, 0], sizes = [1, 64, 512], strides = [1, 1, 1]} : vector<4x64x512xf32> to vector<1x64x512xf32>
    %330 = vector.shape_cast %329 : vector<1x64x512xf32> to vector<64x512xf32>
    %331 = arith.subf %330, %328 : vector<64x512xf32>
    %cst_91 = arith.constant 5.000000e-01 : f32
    %332 = vector.broadcast %cst_91 : f32 to vector<64x512xf32>
    %333 = arith.mulf %331, %332 : vector<64x512xf32>
    %334 = arith.addf %328, %333 : vector<64x512xf32>
    %cst_92 = arith.constant 1.000000e+00 : f32
    %335 = vector.broadcast %cst_92 : f32 to vector<64x512xf32>
    %336 = arith.cmpf oge, %334, %335 : vector<64x512xf32>
    %337 = arith.extui %336 : vector<64x512xi1> to vector<64x512xi32>
    %338 = arith.sitofp %337 : vector<64x512xi32> to vector<64x512xf32>
    %cst_93 = arith.constant 1.000000e+00 : f32
    %339 = vector.broadcast %cst_93 : f32 to vector<64x512xf32>
    %340 = arith.subf %339, %338 : vector<64x512xf32>
    %341 = arith.mulf %334, %340 : vector<64x512xf32>
    %342 = vector.extract_strided_slice %314 {offsets = [2, 0, 0], sizes = [1, 64, 512], strides = [1, 1, 1]} : vector<4x64x512xf32> to vector<1x64x512xf32>
    %343 = vector.shape_cast %342 : vector<1x64x512xf32> to vector<64x512xf32>
    %344 = arith.subf %343, %341 : vector<64x512xf32>
    %cst_94 = arith.constant 5.000000e-01 : f32
    %345 = vector.broadcast %cst_94 : f32 to vector<64x512xf32>
    %346 = arith.mulf %344, %345 : vector<64x512xf32>
    %347 = arith.addf %341, %346 : vector<64x512xf32>
    %cst_95 = arith.constant 1.000000e+00 : f32
    %348 = vector.broadcast %cst_95 : f32 to vector<64x512xf32>
    %349 = arith.cmpf oge, %347, %348 : vector<64x512xf32>
    %350 = arith.extui %349 : vector<64x512xi1> to vector<64x512xi32>
    %351 = arith.sitofp %350 : vector<64x512xi32> to vector<64x512xf32>
    %cst_96 = arith.constant 1.000000e+00 : f32
    %352 = vector.broadcast %cst_96 : f32 to vector<64x512xf32>
    %353 = arith.subf %352, %351 : vector<64x512xf32>
    %354 = arith.mulf %347, %353 : vector<64x512xf32>
    %355 = vector.extract_strided_slice %314 {offsets = [3, 0, 0], sizes = [1, 64, 512], strides = [1, 1, 1]} : vector<4x64x512xf32> to vector<1x64x512xf32>
    %356 = vector.shape_cast %355 : vector<1x64x512xf32> to vector<64x512xf32>
    %357 = arith.subf %356, %354 : vector<64x512xf32>
    %cst_97 = arith.constant 5.000000e-01 : f32
    %358 = vector.broadcast %cst_97 : f32 to vector<64x512xf32>
    %359 = arith.mulf %357, %358 : vector<64x512xf32>
    %360 = arith.addf %354, %359 : vector<64x512xf32>
    %cst_98 = arith.constant 1.000000e+00 : f32
    %361 = vector.broadcast %cst_98 : f32 to vector<64x512xf32>
    %362 = arith.cmpf oge, %360, %361 : vector<64x512xf32>
    %363 = arith.extui %362 : vector<64x512xi1> to vector<64x512xi32>
    %364 = arith.sitofp %363 : vector<64x512xi32> to vector<64x512xf32>
    %365 = tpu.concatenate %325, %338, %351, %364 in 0 : vector<64x512xf32>, vector<64x512xf32>, vector<64x512xf32>, vector<64x512xf32> -> vector<256x512xf32>
    %366 = arith.truncf %365 : vector<256x512xf32> to vector<256x512xbf16>
    %c0_99 = arith.constant 0 : index
    %c0_100 = arith.constant 0 : index
    %367 = vector.load %arg11[%c0_99, %c0_100] : memref<512x128xbf16, #tpu.memory_space<vmem>>, vector<512x128xbf16>
    %cst_101 = arith.constant dense<0.000000e+00> : vector<256x128xf32>
    %368 = tpu.matmul %366, %367, %cst_101 {dimension_numbers = #tpu.dot_dimension_numbers<[1], [0], [0], [1], [0, 0, 1, 1], [], []>} : vector<256x512xbf16>, vector<512x128xbf16>, vector<256x128xf32> -> vector<256x128xf32>
    %c0_102 = arith.constant 0 : index
    %c0_103 = arith.constant 0 : index
    %369 = vector.load %arg12[%c0_102, %c0_103] : memref<1x128xf32, #tpu.memory_space<vmem>>, vector<1x128xf32>
    %370 = vector.broadcast %369 : vector<1x128xf32> to vector<256x128xf32>
    %371 = arith.mulf %368, %370 : vector<256x128xf32>
    %c0_104 = arith.constant 0 : index
    %c0_105 = arith.constant 0 : index
    %372 = vector.load %arg13[%c0_104, %c0_105] : memref<1x128xf32, #tpu.memory_space<vmem>>, vector<1x128xf32>
    %373 = vector.broadcast %372 : vector<1x128xf32> to vector<256x128xf32>
    %374 = arith.addf %371, %373 : vector<256x128xf32>
    %375 = arith.addf %374, %252 : vector<256x128xf32>
    %376 = vector.shape_cast %375 : vector<256x128xf32> to vector<4x1x64x128xf32>
    %c0_106 = arith.constant 0 : index
    %c0_107 = arith.constant 0 : index
    %c0_108 = arith.constant 0 : index
    %c0_109 = arith.constant 0 : index
    %377 = vector.load %arg14[%c0_106, %c0_107, %c0_108, %c0_109] : memref<4x1x64x128xf32, #tpu.memory_space<vmem>>, vector<4x1x64x128xf32>
    tpu.vector_store %arg14[%c0_106, %c0_107, %c0_108, %c0_109], %376 {strides = array<i32>} : memref<4x1x64x128xf32, #tpu.memory_space<vmem>>, vector<4x1x64x128xf32>,
    return
  }
  func.func @transform_0(%arg0: i32) -> (i32, i32, i32, i32) {
    %c0_i32 = arith.constant 0 : i32
    %c0_i32_0 = arith.constant 0 : i32
    %c0_i32_1 = arith.constant 0 : i32
    %c0_i32_2 = arith.constant 0 : i32
    return %c0_i32, %arg0, %c0_i32_0, %c0_i32_1 : i32, i32, i32, i32
  }
  func.func @transform_1(%arg0: i32) -> (i32, i32) {
    %c0_i32 = arith.constant 0 : i32
    %c0_i32_0 = arith.constant 0 : i32
    %c0_i32_1 = arith.constant 0 : i32
    return %c0_i32, %c0_i32_0 : i32, i32
  }
  func.func @transform_2(%arg0: i32) -> (i32, i32) {
    %c0_i32 = arith.constant 0 : i32
    %c0_i32_0 = arith.constant 0 : i32
    %c0_i32_1 = arith.constant 0 : i32
    return %c0_i32, %c0_i32_0 : i32, i32
  }
  func.func @transform_3(%arg0: i32) -> (i32, i32) {
    %c0_i32 = arith.constant 0 : i32
    %c0_i32_0 = arith.constant 0 : i32
    %c0_i32_1 = arith.constant 0 : i32
    return %c0_i32, %c0_i32_0 : i32, i32
  }
  func.func @transform_4(%arg0: i32) -> (i32, i32) {
    %c0_i32 = arith.constant 0 : i32
    %c0_i32_0 = arith.constant 0 : i32
    %c0_i32_1 = arith.constant 0 : i32
    return %c0_i32, %c0_i32_0 : i32, i32
  }
  func.func @transform_5(%arg0: i32) -> (i32, i32) {
    %c0_i32 = arith.constant 0 : i32
    %c0_i32_0 = arith.constant 0 : i32
    %c0_i32_1 = arith.constant 0 : i32
    return %c0_i32, %c0_i32_0 : i32, i32
  }
  func.func @transform_6(%arg0: i32) -> (i32, i32) {
    %c0_i32 = arith.constant 0 : i32
    %c0_i32_0 = arith.constant 0 : i32
    %c0_i32_1 = arith.constant 0 : i32
    return %c0_i32, %c0_i32_0 : i32, i32
  }
  func.func @transform_7(%arg0: i32) -> (i32, i32) {
    %c0_i32 = arith.constant 0 : i32
    %c0_i32_0 = arith.constant 0 : i32
    %c0_i32_1 = arith.constant 0 : i32
    return %c0_i32, %c0_i32_0 : i32, i32
  }
  func.func @transform_8(%arg0: i32) -> (i32, i32) {
    %c0_i32 = arith.constant 0 : i32
    %c0_i32_0 = arith.constant 0 : i32
    %c0_i32_1 = arith.constant 0 : i32
    return %c0_i32, %c0_i32_0 : i32, i32
  }
  func.func @transform_9(%arg0: i32) -> (i32, i32) {
    %c0_i32 = arith.constant 0 : i32
    %c0_i32_0 = arith.constant 0 : i32
    %c0_i32_1 = arith.constant 0 : i32
    return %c0_i32, %c0_i32_0 : i32, i32
  }
  func.func @transform_10(%arg0: i32) -> (i32, i32) {
    %c0_i32 = arith.constant 0 : i32
    %c0_i32_0 = arith.constant 0 : i32
    %c0_i32_1 = arith.constant 0 : i32
    return %c0_i32, %c0_i32_0 : i32, i32
  }
  func.func @transform_11(%arg0: i32) -> (i32, i32) {
    %c0_i32 = arith.constant 0 : i32
    %c0_i32_0 = arith.constant 0 : i32
    %c0_i32_1 = arith.constant 0 : i32
    return %c0_i32, %c0_i32_0 : i32, i32
  }
  func.func @transform_12(%arg0: i32) -> (i32, i32) {
    %c0_i32 = arith.constant 0 : i32
    %c0_i32_0 = arith.constant 0 : i32
    %c0_i32_1 = arith.constant 0 : i32
    return %c0_i32, %c0_i32_0 : i32, i32
  }
  func.func @transform_13(%arg0: i32) -> (i32, i32, i32, i32) {
    %c0_i32 = arith.constant 0 : i32
    %c0_i32_0 = arith.constant 0 : i32
    %c0_i32_1 = arith.constant 0 : i32
    %c0_i32_2 = arith.constant 0 : i32
    return %c0_i32, %arg0, %c0_i32_0, %c0_i32_1 : i32, i32, i32, i32
  }
}

</mosaic_0001>

<llo_original>
// kernel: tpu_custom_call.1
$region0: #{tpu_custom_call.1}
  #allocation0 [shape = 'u32[]', space=smem, size = 0x4, offset = 0x4, fixed_abs, tag = 'smem constant byte address 0x4 - core index']
  #allocation1 [shape = 'u32[144,128]{1,0:T(1,128)}', space=vmem, size = 0x12000, scoped, tag = 'internal scratch']
  #allocation15 [shape = 's32[]', space=sflag, size = 0x4, offset = 0, fixed_abs, tag = 'sflag constant byte address 0x0 - dummy sync flag']
  #allocation17 [shape = 's32[]', space=sflag, size = 0x4, offset = 0, fixed_abs, tag = 'sflag constant byte address 0x0 - dummy sync flag']
  %s0 = inlined_call_operand.hbm [shape: f32[4,2,64,128], index: 0, kind: input, shape index: {}]
  %s1 = inlined_call_operand.hbm [shape: bf16[128,384], index: 1, kind: input, shape index: {}]
  %s2 = inlined_call_operand.hbm [shape: f32[1,384], index: 2, kind: input, shape index: {}]
  %s3 = inlined_call_operand.hbm [shape: f32[1,384], index: 3, kind: input, shape index: {}]
  %s4 = inlined_call_operand.hbm [shape: bf16[128,128], index: 4, kind: input, shape index: {}]
  %s5 = inlined_call_operand.vmem [shape: f32[1,128], index: 5, kind: input, shape index: {}]
  %s6 = inlined_call_operand.vmem [shape: f32[1,128], index: 6, kind: input, shape index: {}]
  %s7 = inlined_call_operand.hbm [shape: bf16[128,512], index: 7, kind: input, shape index: {}]
  %s8 = inlined_call_operand.vmem [shape: f32[1,512], index: 8, kind: input, shape index: {}]
  %s9 = inlined_call_operand.vmem [shape: f32[1,512], index: 9, kind: input, shape index: {}]
  %s10 = inlined_call_operand.hbm [shape: bf16[512,128], index: 10, kind: input, shape index: {}]
  %s11 = inlined_call_operand.vmem [shape: f32[1,128], index: 11, kind: input, shape index: {}]
  %s12 = inlined_call_operand.vmem [shape: f32[1,128], index: 12, kind: input, shape index: {}]
  %s13 = inlined_call_operand.hbm [shape: f32[4,2,64,128], index: 13, kind: output, shape index: {}]
  %s14 = sld [smem:[#allocation0]]
  $region113: #{tpu_custom_call.1} parent=0
    _
  %s16 = ssub.s32 1, %s14
  %s17 = scalar_select 0, %s16, %s14
  $region1: #{tpu_custom_call.1} parent=0
    #allocation2 [shape = 'u8[262144]{0}', space=vmem, size = 0x40000, scoped, tag = 'input window, operand 0']
    #allocation3 [shape = 's32[2]{0}', space=sflag, size = 0x8, scoped, tag = 'scoped memory for tpu_custom_call.1']
    #allocation4 [shape = 's32[2]{0}', space=sflag, size = 0x8, scoped, tag = 'scoped memory for tpu_custom_call.1']
    #allocation5 [shape = 'u8[98304]{0}', space=vmem, size = 0x18000, scoped, tag = 'input window, operand 1, single buffered']
    #allocation6 [shape = 's32[1]{0}', space=sflag, size = 0x4, scoped, tag = 'scoped memory for tpu_custom_call.1']
    #allocation7 [shape = 'u8[1536]{0}', space=vmem, size = 0x800, scoped, tag = 'input window, operand 2, single buffered']
    #allocation8 [shape = 'u8[1536]{0}', space=vmem, size = 0x800, scoped, tag = 'input window, operand 3, single buffered']
    #allocation9 [shape = 's32[1]{0}', space=sflag, size = 0x4, scoped, tag = 'scoped memory for tpu_custom_call.1']
    #allocation10 [shape = 'u8[32768]{0}', space=vmem, size = 0x8000, scoped, tag = 'input window, operand 4, single buffered']
    #allocation11 [shape = 'u8[131072]{0}', space=vmem, size = 0x20000, scoped, tag = 'input window, operand 7, single buffered']
    #allocation12 [shape = 's32[1]{0}', space=sflag, size = 0x4, scoped, tag = 'scoped memory for tpu_custom_call.1']
    #allocation13 [shape = 'u8[131072]{0}', space=vmem, size = 0x20000, scoped, tag = 'input window, operand 10, single buffered']
    #allocation14 [shape = 'u8[262144]{0}', space=vmem, size = 0x40000, scoped, tag = 'output window, operand 0']
    %18 = vsyncpa [#allocation3], 0
    %s19 = scalar_lea.sflag [#allocation3], 1
    %20 = vsyncpa %s19, 0
    %21 = vsyncpa [#allocation6], 0
    %22 = vsyncpa [#allocation9], 0
    %23 = vsyncpa [#allocation12], 0
    %24 = vsyncpa [#allocation4], 0
    %s25 = scalar_lea.sflag [#allocation4], 1
    %26 = vsyncpa %s25, 0
    loop: start=0, step=1, limit=4
    $region2: #{tpu_custom_call.1} parent=1 // loop_pre_header
      _
    $region3: #{tpu_custom_call.1} parent=1 // loop_header
      %s28 = sphi 0, %s32
      %p29 = scmp.ge.s32.totalorder %s28, 4
      %s38 = sphi 0, %s40
      %s41 = sphi 0, %s38
      %s42 = sphi 0, %s41
      %s58 = sphi 0, %s42
      %s62 = sphi 0, %s62
      %s64 = sphi 0, %s62
      %s65 = sphi 0, %s64
      %s79 = sphi 0, %s65
      %s83 = sphi 0, %s83
      %s85 = sphi 0, %s83
      %s86 = sphi 0, %s85
      %s100 = sphi 0, %s86
      %s104 = sphi 0, %s104
      %s106 = sphi 0, %s104
      %s107 = sphi 0, %s106
      %s121 = sphi 0, %s107
      %s125 = sphi 0, %s125
      %s127 = sphi 0, %s125
      %s128 = sphi 0, %s127
      %s142 = sphi 0, %s128
      %s146 = sphi 0, %s146
      %s148 = sphi 0, %s146
      %s149 = sphi 0, %s148
      %s163 = sphi 0, %s149
      %s167 = sphi 0, %s167
      %s169 = sphi 0, %s167
      %s170 = sphi 0, %s169
      %s184 = sphi 0, %s170
      %s188 = sphi 0, %s188
      %s190 = sphi 0, %s188
      %s191 = sphi 0, %s190
      %s205 = sphi 0, %s191
      %s209 = sphi 0, %s209
      %s211 = sphi 0, %s209
      %s212 = sphi 0, %s211
      %s226 = sphi 0, %s212
      %s230 = sphi 0, %s230
      %s232 = sphi 0, %s230
      %s233 = sphi 0, %s232
      %s247 = sphi 0, %s233
      %s251 = sphi 0, %s251
      %s253 = sphi 0, %s251
      %s254 = sphi 0, %s253
      %s268 = sphi 0, %s254
      %s272 = sphi 0, %s272
      %s274 = sphi 0, %s272
      %s275 = sphi 0, %s274
      %s289 = sphi 0, %s275
      %s293 = sphi 0, %s293
      %s295 = sphi 0, %s293
      %s296 = sphi 0, %s295
      %s310 = sphi 0, %s296
      %s316 = sphi 0, %s318
      %s319 = sphi 0, %s316
      %s320 = sphi 0, %s319
      %s336 = sphi 0, %s320
    $region4: #{tpu_custom_call.1} parent=1 // loop_header_branch
      %31 = sbr.rel (%p29) target = $region8
    $region5: #{tpu_custom_call.1} parent=1 // loop_body
      %s33 = ssub.s32 %s28, 1
      %s34 = ssub.s32 %s28, 2
      %s35 = sadd.s32 %s28, 1
      %s36 = ssub.s32 %s28, %s35
      %p37 = scmp.eq.s32.totalorder %s36, 0
      %s39 = sadd.s32 %s38, 1
      %s40 = scalar_select %p37, %s38, %s39
      %p43 = pneg %p37
      %p44 = scmp.eq.s32.totalorder %s28, 1
      %p45 = por %p43, %p44
      %p46 = scmp.ne.s32.totalorder %s38, %s41
      %p47 = scmp.eq.s32.totalorder %s28, 0
      %p48 = por %p46, %p47
      %p49 = scmp.ne.s32.totalorder %s38, %s41
      %p50 = scmp.eq.s32.totalorder %s33, 1
      %p51 = por %p49, %p50
      %p52 = scmp.ne.s32.totalorder %s41, %s42
      %p53 = scmp.eq.s32.totalorder %s33, 0
      %p54 = por %p52, %p53
      %p55 = scmp.ne.s32.totalorder %s41, %s42
      %p56 = scmp.eq.s32.totalorder %s34, 1
      %p57 = por %p55, %p56
      %p59 = scmp.ne.s32.totalorder %s42, %s58
      %p60 = scmp.eq.s32.totalorder %s34, 0
      %p61 = por %p59, %p60
      %s63 = sadd.s32 %s62, 1
      %p66 = scmp.eq.s32.totalorder %s28, 1
      %p67 = scmp.ne.s32.totalorder %s62, %s64
      %p68 = scmp.eq.s32.totalorder %s28, 0
      %p69 = por %p67, %p68
      %p70 = scmp.ne.s32.totalorder %s62, %s64
      %p71 = scmp.eq.s32.totalorder %s33, 1
      %p72 = por %p70, %p71
      %p73 = scmp.ne.s32.totalorder %s64, %s65
      %p74 = scmp.eq.s32.totalorder %s33, 0
      %p75 = por %p73, %p74
      %p76 = scmp.ne.s32.totalorder %s64, %s65
      %p77 = scmp.eq.s32.totalorder %s34, 1
      %p78 = por %p76, %p77
      %p80 = scmp.ne.s32.totalorder %s65, %s79
      %p81 = scmp.eq.s32.totalorder %s34, 0
      %p82 = por %p80, %p81
      %s84 = sadd.s32 %s83, 1
      %p87 = scmp.eq.s32.totalorder %s28, 1
      %p88 = scmp.ne.s32.totalorder %s83, %s85
      %p89 = scmp.eq.s32.totalorder %s28, 0
      %p90 = por %p88, %p89
      %p91 = scmp.ne.s32.totalorder %s83, %s85
      %p92 = scmp.eq.s32.totalorder %s33, 1
      %p93 = por %p91, %p92
      %p94 = scmp.ne.s32.totalorder %s85, %s86
      %p95 = scmp.eq.s32.totalorder %s33, 0
      %p96 = por %p94, %p95
      %p97 = scmp.ne.s32.totalorder %s85, %s86
      %p98 = scmp.eq.s32.totalorder %s34, 1
      %p99 = por %p97, %p98
      %p101 = scmp.ne.s32.totalorder %s86, %s100
      %p102 = scmp.eq.s32.totalorder %s34, 0
      %p103 = por %p101, %p102
      %s105 = sadd.s32 %s104, 1
      %p108 = scmp.eq.s32.totalorder %s28, 1
      %p109 = scmp.ne.s32.totalorder %s104, %s106
      %p110 = scmp.eq.s32.totalorder %s28, 0
      %p111 = por %p109, %p110
      %p112 = scmp.ne.s32.totalorder %s104, %s106
      %p113 = scmp.eq.s32.totalorder %s33, 1
      %p114 = por %p112, %p113
      %p115 = scmp.ne.s32.totalorder %s106, %s107
      %p116 = scmp.eq.s32.totalorder %s33, 0
      %p117 = por %p115, %p116
      %p118 = scmp.ne.s32.totalorder %s106, %s107
      %p119 = scmp.eq.s32.totalorder %s34, 1
      %p120 = por %p118, %p119
      %p122 = scmp.ne.s32.totalorder %s107, %s121
      %p123 = scmp.eq.s32.totalorder %s34, 0
      %p124 = por %p122, %p123
      %s126 = sadd.s32 %s125, 1
      %p129 = scmp.eq.s32.totalorder %s28, 1
      %p130 = scmp.ne.s32.totalorder %s125, %s127
      %p131 = scmp.eq.s32.totalorder %s28, 0
      %p132 = por %p130, %p131
      %p133 = scmp.ne.s32.totalorder %s125, %s127
      %p134 = scmp.eq.s32.totalorder %s33, 1
      %p135 = por %p133, %p134
      %p136 = scmp.ne.s32.totalorder %s127, %s128
      %p137 = scmp.eq.s32.totalorder %s33, 0
      %p138 = por %p136, %p137
      %p139 = scmp.ne.s32.totalorder %s127, %s128
      %p140 = scmp.eq.s32.totalorder %s34, 1
      %p141 = por %p139, %p140
      %p143 = scmp.ne.s32.totalorder %s128, %s142
      %p144 = scmp.eq.s32.totalorder %s34, 0
      %p145 = por %p143, %p144
      %s147 = sadd.s32 %s146, 1
      %p150 = scmp.eq.s32.totalorder %s28, 1
      %p151 = scmp.ne.s32.totalorder %s146, %s148
      %p152 = scmp.eq.s32.totalorder %s28, 0
      %p153 = por %p151, %p152
      %p154 = scmp.ne.s32.totalorder %s146, %s148
      %p155 = scmp.eq.s32.totalorder %s33, 1
      %p156 = por %p154, %p155
      %p157 = scmp.ne.s32.totalorder %s148, %s149
      %p158 = scmp.eq.s32.totalorder %s33, 0
      %p159 = por %p157, %p158
      %p160 = scmp.ne.s32.totalorder %s148, %s149
      %p161 = scmp.eq.s32.totalorder %s34, 1
      %p162 = por %p160, %p161
      %p164 = scmp.ne.s32.totalorder %s149, %s163
      %p165 = scmp.eq.s32.totalorder %s34, 0
      %p166 = por %p164, %p165
      %s168 = sadd.s32 %s167, 1
      %p171 = scmp.eq.s32.totalorder %s28, 1
      %p172 = scmp.ne.s32.totalorder %s167, %s169
      %p173 = scmp.eq.s32.totalorder %s28, 0
      %p174 = por %p172, %p173
      %p175 = scmp.ne.s32.totalorder %s167, %s169
      %p176 = scmp.eq.s32.totalorder %s33, 1
      %p177 = por %p175, %p176
      %p178 = scmp.ne.s32.totalorder %s169, %s170
      %p179 = scmp.eq.s32.totalorder %s33, 0
      %p180 = por %p178, %p179
      %p181 = scmp.ne.s32.totalorder %s169, %s170
      %p182 = scmp.eq.s32.totalorder %s34, 1
      %p183 = por %p181, %p182
      %p185 = scmp.ne.s32.totalorder %s170, %s184
      %p186 = scmp.eq.s32.totalorder %s34, 0
      %p187 = por %p185, %p186
      %s189 = sadd.s32 %s188, 1
      %p192 = scmp.eq.s32.totalorder %s28, 1
      %p193 = scmp.ne.s32.totalorder %s188, %s190
      %p194 = scmp.eq.s32.totalorder %s28, 0
      %p195 = por %p193, %p194
      %p196 = scmp.ne.s32.totalorder %s188, %s190
      %p197 = scmp.eq.s32.totalorder %s33, 1
      %p198 = por %p196, %p197
      %p199 = scmp.ne.s32.totalorder %s190, %s191
      %p200 = scmp.eq.s32.totalorder %s33, 0
      %p201 = por %p199, %p200
      %p202 = scmp.ne.s32.totalorder %s190, %s191
      %p203 = scmp.eq.s32.totalorder %s34, 1
      %p204 = por %p202, %p203
      %p206 = scmp.ne.s32.totalorder %s191, %s205
      %p207 = scmp.eq.s32.totalorder %s34, 0
      %p208 = por %p206, %p207
      %s210 = sadd.s32 %s209, 1
      %p213 = scmp.eq.s32.totalorder %s28, 1
      %p214 = scmp.ne.s32.totalorder %s209, %s211
      %p215 = scmp.eq.s32.totalorder %s28, 0
      %p216 = por %p214, %p215
      %p217 = scmp.ne.s32.totalorder %s209, %s211
      %p218 = scmp.eq.s32.totalorder %s33, 1
      %p219 = por %p217, %p218
      %p220 = scmp.ne.s32.totalorder %s211, %s212
      %p221 = scmp.eq.s32.totalorder %s33, 0
      %p222 = por %p220, %p221
      %p223 = scmp.ne.s32.totalorder %s211, %s212
      %p224 = scmp.eq.s32.totalorder %s34, 1
      %p225 = por %p223, %p224
      %p227 = scmp.ne.s32.totalorder %s212, %s226
      %p228 = scmp.eq.s32.totalorder %s34, 0
      %p229 = por %p227, %p228
      %s231 = sadd.s32 %s230, 1
      %p234 = scmp.eq.s32.totalorder %s28, 1
      %p235 = scmp.ne.s32.totalorder %s230, %s232
      %p236 = scmp.eq.s32.totalorder %s28, 0
      %p237 = por %p235, %p236
      %p238 = scmp.ne.s32.totalorder %s230, %s232
      %p239 = scmp.eq.s32.totalorder %s33, 1
      %p240 = por %p238, %p239
      %p241 = scmp.ne.s32.totalorder %s232, %s233
      %p242 = scmp.eq.s32.totalorder %s33, 0
      %p243 = por %p241, %p242
      %p244 = scmp.ne.s32.totalorder %s232, %s233
      %p245 = scmp.eq.s32.totalorder %s34, 1
      %p246 = por %p244, %p245
      %p248 = scmp.ne.s32.totalorder %s233, %s247
      %p249 = scmp.eq.s32.totalorder %s34, 0
      %p250 = por %p248, %p249
      %s252 = sadd.s32 %s251, 1
      %p255 = scmp.eq.s32.totalorder %s28, 1
      %p256 = scmp.ne.s32.totalorder %s251, %s253
      %p257 = scmp.eq.s32.totalorder %s28, 0
      %p258 = por %p256, %p257
      %p259 = scmp.ne.s32.totalorder %s251, %s253
      %p260 = scmp.eq.s32.totalorder %s33, 1
      %p261 = por %p259, %p260
      %p262 = scmp.ne.s32.totalorder %s253, %s254
      %p263 = scmp.eq.s32.totalorder %s33, 0
      %p264 = por %p262, %p263
      %p265 = scmp.ne.s32.totalorder %s253, %s254
      %p266 = scmp.eq.s32.totalorder %s34, 1
      %p267 = por %p265, %p266
      %p269 = scmp.ne.s32.totalorder %s254, %s268
      %p270 = scmp.eq.s32.totalorder %s34, 0
      %p271 = por %p269, %p270
      %s273 = sadd.s32 %s272, 1
      %p276 = scmp.eq.s32.totalorder %s28, 1
      %p277 = scmp.ne.s32.totalorder %s272, %s274
      %p278 = scmp.eq.s32.totalorder %s28, 0
      %p279 = por %p277, %p278
      %p280 = scmp.ne.s32.totalorder %s272, %s274
      %p281 = scmp.eq.s32.totalorder %s33, 1
      %p282 = por %p280, %p281
      %p283 = scmp.ne.s32.totalorder %s274, %s275
      %p284 = scmp.eq.s32.totalorder %s33, 0
      %p285 = por %p283, %p284
      %p286 = scmp.ne.s32.totalorder %s274, %s275
      %p287 = scmp.eq.s32.totalorder %s34, 1
      %p288 = por %p286, %p287
      %p290 = scmp.ne.s32.totalorder %s275, %s289
      %p291 = scmp.eq.s32.totalorder %s34, 0
      %p292 = por %p290, %p291
      %s294 = sadd.s32 %s293, 1
      %p297 = scmp.eq.s32.totalorder %s28, 1
      %p298 = scmp.ne.s32.totalorder %s293, %s295
      %p299 = scmp.eq.s32.totalorder %s28, 0
      %p300 = por %p298, %p299
      %p301 = scmp.ne.s32.totalorder %s293, %s295
      %p302 = scmp.eq.s32.totalorder %s33, 1
      %p303 = por %p301, %p302
      %p304 = scmp.ne.s32.totalorder %s295, %s296
      %p305 = scmp.eq.s32.totalorder %s33, 0
      %p306 = por %p304, %p305
      %p307 = scmp.ne.s32.totalorder %s295, %s296
      %p308 = scmp.eq.s32.totalorder %s34, 1
      %p309 = por %p307, %p308
      %p311 = scmp.ne.s32.totalorder %s296, %s310
      %p312 = scmp.eq.s32.totalorder %s34, 0
      %p313 = por %p311, %p312
      %s314 = ssub.s32 %s28, %s35
      %p315 = scmp.eq.s32.totalorder %s314, 0
      %s317 = sadd.s32 %s316, 1
      %s318 = scalar_select %p315, %s316, %s317
      %p321 = pneg %p315
      %p322 = scmp.eq.s32.totalorder %s28, 1
      %p323 = por %p321, %p322
      %p324 = scmp.ne.s32.totalorder %s316, %s319
      %p325 = scmp.eq.s32.totalorder %s28, 0
      %p326 = por %p324, %p325
      %p327 = scmp.ne.s32.totalorder %s316, %s319
      %p328 = scmp.eq.s32.totalorder %s33, 1
      %p329 = por %p327, %p328
      %p330 = scmp.ne.s32.totalorder %s319, %s320
      %p331 = scmp.eq.s32.totalorder %s33, 0
      %p332 = por %p330, %p331
      %p333 = scmp.ne.s32.totalorder %s319, %s320
      %p334 = scmp.eq.s32.totalorder %s34, 1
      %p335 = por %p333, %p334
      %p337 = scmp.ne.s32.totalorder %s320, %s336
      %p338 = scmp.eq.s32.totalorder %s34, 0
      %p339 = por %p337, %p338
      %p340 = scmp.le.s32.totalorder 1, %s28
      %p341 = scmp.lt.s32.totalorder %s28, 3
      %p342 = pnand %p340, %p341
      %p343 = pneg %p342
      // Predicated region
      $region9: #{tpu_custom_call.1} parent=5 // pred_check
        _
      $region10: #{tpu_custom_call.1} parent=5 // pred_check_branch
        %345 = sbr.rel (%p342) target = $region12
      $region11: #{tpu_custom_call.1} parent=5 // pred_region
        %s346 = ssub.s32 %s28, 1
        // Predicated region
        $region13: #{tpu_custom_call.1} parent=11 // pred_check
          %p347 = pneg %p75
        $region14: #{tpu_custom_call.1} parent=11 // pred_check_branch
          %349 = sbr.rel (%p347) target = $region16
        $region15: #{tpu_custom_call.1} parent=11 // pred_region
          %s351 = ssub.s32 3072, 3072
          %352 = vsyncadd [#allocation6], %s351
          %s353 = sshll.u32 [#allocation5], 4
          %s354 = int_to_ptr.vmem [resolvable:$true] %s353
          %359 = dma.hbm_to_vmem [thread:$0]  %s1, 3072, %s354, [#allocation6], 192, 192, 12
        $region16: #{tpu_custom_call.1} parent=11 // pred_fallthru
          _
        // Predicated region
        $region17: #{tpu_custom_call.1} parent=11 // pred_check
          %p360 = pneg %p96
        $region18: #{tpu_custom_call.1} parent=11 // pred_check_branch
          %362 = sbr.rel (%p360) target = $region20
        $region19: #{tpu_custom_call.1} parent=11 // pred_region
          %s364 = ssub.s32 48, 48
          %365 = vsyncadd [#allocation6], %s364
          %s367 = sshll.u32 [#allocation7], 4
          %s368 = int_to_ptr.vmem [resolvable:$true] %s367
          %370 = dma.hbm_to_vmem [thread:$0]  %s2, 48, %s368, [#allocation6]
        $region20: #{tpu_custom_call.1} parent=11 // pred_fallthru
          _
        // Predicated region
        $region21: #{tpu_custom_call.1} parent=11 // pred_check
          %p371 = pneg %p117
        $region22: #{tpu_custom_call.1} parent=11 // pred_check_branch
          %373 = sbr.rel (%p371) target = $region24
        $region23: #{tpu_custom_call.1} parent=11 // pred_region
          %s375 = ssub.s32 48, 48
          %376 = vsyncadd [#allocation9], %s375
          %s378 = sshll.u32 [#allocation8], 4
          %s379 = int_to_ptr.vmem [resolvable:$true] %s378
          %381 = dma.hbm_to_vmem [thread:$0]  %s3, 48, %s379, [#allocation9]
        $region24: #{tpu_custom_call.1} parent=11 // pred_fallthru
          _
        // Predicated region
        $region25: #{tpu_custom_call.1} parent=11 // pred_check
          %p382 = pneg %p138
        $region26: #{tpu_custom_call.1} parent=11 // pred_check_branch
          %384 = sbr.rel (%p382) target = $region28
        $region27: #{tpu_custom_call.1} parent=11 // pred_region
          %s386 = ssub.s32 1024, 1024
          %387 = vsyncadd [#allocation9], %s386
          %s388 = sshll.u32 [#allocation10], 4
          %s389 = int_to_ptr.vmem [resolvable:$true] %s388
          %394 = dma.hbm_to_vmem [thread:$0]  %s4, 1024, %s389, [#allocation9], 64, 64, 4
        $region28: #{tpu_custom_call.1} parent=11 // pred_fallthru
          _
        // Predicated region
        $region29: #{tpu_custom_call.1} parent=11 // pred_check
          %p395 = pneg %p159
        $region30: #{tpu_custom_call.1} parent=11 // pred_check_branch
          %397 = sbr.rel (%p395) target = $region32
        $region31: #{tpu_custom_call.1} parent=11 // pred_region
          _
        $region32: #{tpu_custom_call.1} parent=11 // pred_fallthru
          _
        // Predicated region
        $region33: #{tpu_custom_call.1} parent=11 // pred_check
          %p398 = pneg %p180
        $region34: #{tpu_custom_call.1} parent=11 // pred_check_branch
          %400 = sbr.rel (%p398) target = $region36
        $region35: #{tpu_custom_call.1} parent=11 // pred_region
          _
        $region36: #{tpu_custom_call.1} parent=11 // pred_fallthru
          _
        // Predicated region
        $region37: #{tpu_custom_call.1} parent=11 // pred_check
          %p401 = pneg %p201
        $region38: #{tpu_custom_call.1} parent=11 // pred_check_branch
          %403 = sbr.rel (%p401) target = $region40
        $region39: #{tpu_custom_call.1} parent=11 // pred_region
          %s405 = ssub.s32 4096, 4096
          %406 = vsyncadd [#allocation12], %s405
          %s407 = sshll.u32 [#allocation11], 4
          %s408 = int_to_ptr.vmem [resolvable:$true] %s407
          %413 = dma.hbm_to_vmem [thread:$0]  %s7, 4096, %s408, [#allocation12], 256, 256, 16
        $region40: #{tpu_custom_call.1} parent=11 // pred_fallthru
          _
        // Predicated region
        $region41: #{tpu_custom_call.1} parent=11 // pred_check
          %p414 = pneg %p222
        $region42: #{tpu_custom_call.1} parent=11 // pred_check_branch
          %416 = sbr.rel (%p414) target = $region44
        $region43: #{tpu_custom_call.1} parent=11 // pred_region
          _
        $region44: #{tpu_custom_call.1} parent=11 // pred_fallthru
          _
        // Predicated region
        $region45: #{tpu_custom_call.1} parent=11 // pred_check
          %p417 = pneg %p243
        $region46: #{tpu_custom_call.1} parent=11 // pred_check_branch
          %419 = sbr.rel (%p417) target = $region48
        $region47: #{tpu_custom_call.1} parent=11 // pred_region
          _
        $region48: #{tpu_custom_call.1} parent=11 // pred_fallthru
          _
        // Predicated region
        $region49: #{tpu_custom_call.1} parent=11 // pred_check
          %p420 = pneg %p264
        $region50: #{tpu_custom_call.1} parent=11 // pred_check_branch
          %422 = sbr.rel (%p420) target = $region52
        $region51: #{tpu_custom_call.1} parent=11 // pred_region
          %s424 = ssub.s32 4096, 4096
          %425 = vsyncadd [#allocation12], %s424
          %s426 = sshll.u32 [#allocation13], 4
          %s427 = int_to_ptr.vmem [resolvable:$true] %s426
          %432 = dma.hbm_to_vmem [thread:$0]  %s10, 4096, %s427, [#allocation12], 64, 64, 4
        $region52: #{tpu_custom_call.1} parent=11 // pred_fallthru
          _
        // Predicated region
        $region53: #{tpu_custom_call.1} parent=11 // pred_check
          %p433 = pneg %p285
        $region54: #{tpu_custom_call.1} parent=11 // pred_check_branch
          %435 = sbr.rel (%p433) target = $region56
        $region55: #{tpu_custom_call.1} parent=11 // pred_region
          _
        $region56: #{tpu_custom_call.1} parent=11 // pred_fallthru
          _
        // Predicated region
        $region57: #{tpu_custom_call.1} parent=11 // pred_check
          %p436 = pneg %p306
        $region58: #{tpu_custom_call.1} parent=11 // pred_check_branch
          %438 = sbr.rel (%p436) target = $region60
        $region59: #{tpu_custom_call.1} parent=11 // pred_region
          _
        $region60: #{tpu_custom_call.1} parent=11 // pred_fallthru
          _
      $region12: #{tpu_custom_call.1} parent=5 // pred_fallthru
        _
      %p439 = scmp.lt.s32.totalorder %s28, 2
      // Predicated region
      $region61: #{tpu_custom_call.1} parent=5 // pred_check
        %p440 = pneg %p439
      $region62: #{tpu_custom_call.1} parent=5 // pred_check_branch
        %442 = sbr.rel (%p440) target = $region64
      $region63: #{tpu_custom_call.1} parent=5 // pred_region
        // Predicated region
        $region65: #{tpu_custom_call.1} parent=63 // pred_check
          %p443 = pneg %p48
        $region66: #{tpu_custom_call.1} parent=63 // pred_check_branch
          %445 = sbr.rel (%p443) target = $region68
        $region67: #{tpu_custom_call.1} parent=63 // pred_region
          #allocation16 [shape = 'u32[6]{0}', space=smem, size = 0x18, scoped, tag = 'DMA stride descriptor']
          %s446 = sand.u32 %s38, 1
          %s447 = scalar_lea.sflag [#allocation3], %s446
          %s448 = sand.u32 %s38, 1
          %s449 = smul.addr %s448, 256
          %s450 = scalar_lea.vmem [#allocation2], %s449
          %s452 = ssub.s32 4096, 4096
          %453 = vsyncadd %s447, %s452
          %s454 = smul.addr %s28, 8
          %s455 = smul.addr %s454, 128
          %s456 = scalar_lea.hbm %s0, %s455
          %s458 = sshll.u32 1, 14
          %s459 = sxor.u32 4294967295, %s458
          %s461 = sld [smem:[#allocation0]]
          %s462 = sadd.s32 2, %s461
          %s464 = sshll.u32 7, 26
          %s465 = sxor.u32 4294967295, %s464
          %s466 = sand.u32 0, %s465
          %s467 = sshll.u32 %s462, 26
          %s468 = sor.u32 %s466, %s467
          %s469 = sshll.u32 %s450, 4
          %s470 = int_to_ptr.vmem [resolvable:$true] %s469
          %476 = sst [smem:[#allocation16]] 2048
          %s477 = scalar_lea.smem [#allocation16], 1
          %478 = sst [smem:[%s477]] 1024
          %s479 = scalar_lea.smem [#allocation16], 2
          %480 = sst [smem:[%s479]] 8
          %s481 = scalar_lea.smem [#allocation16], 3
          %482 = sst [smem:[%s481]] 128
          %s483 = scalar_lea.smem [#allocation16], 4
          %484 = sst [smem:[%s483]] 128
          %s485 = scalar_lea.smem [#allocation16], 5
          %486 = sst [smem:[%s485]] 8
          %488 = dma.general %s456, 4096, %s470, %s447, 131072, [#allocation16], %s468, 0
        $region68: #{tpu_custom_call.1} parent=63 // pred_fallthru
          _
      $region64: #{tpu_custom_call.1} parent=5 // pred_fallthru
        _
      %p489 = scmp.le.s32.totalorder 1, %s28
      %p490 = scmp.lt.s32.totalorder %s28, 3
      %p491 = pnand %p489, %p490
      %p492 = pneg %p491
      // Predicated region
      $region69: #{tpu_custom_call.1} parent=5 // pred_check
        _
      $region70: #{tpu_custom_call.1} parent=5 // pred_check_branch
        %494 = sbr.rel (%p491) target = $region72
      $region71: #{tpu_custom_call.1} parent=5 // pred_region
        %s495 = ssub.s32 %s28, 1
        %s496 = sand.u32 %s41, 1
        %s497 = scalar_lea.sflag [#allocation3], %s496
        %s498 = sand.u32 %s41, 1
        %s499 = smul.addr %s498, 256
        %s500 = scalar_lea.vmem [#allocation2], %s499
        // Predicated region
        $region73: #{tpu_custom_call.1} parent=71 // pred_check
          %p501 = pneg %p54
        $region74: #{tpu_custom_call.1} parent=71 // pred_check_branch
          %503 = sbr.rel (%p501) target = $region76
        $region75: #{tpu_custom_call.1} parent=71 // pred_region
          %504 = dma.done %s497, 4096
        $region76: #{tpu_custom_call.1} parent=71 // pred_fallthru
          _
        // Predicated region
        $region77: #{tpu_custom_call.1} parent=71 // pred_check
          %p505 = pneg %p75
        $region78: #{tpu_custom_call.1} parent=71 // pred_check_branch
          %507 = sbr.rel (%p505) target = $region80
        $region79: #{tpu_custom_call.1} parent=71 // pred_region
          %508 = dma.done [#allocation6], 3072
        $region80: #{tpu_custom_call.1} parent=71 // pred_fallthru
          _
        // Predicated region
        $region81: #{tpu_custom_call.1} parent=71 // pred_check
          %p509 = pneg %p96
        $region82: #{tpu_custom_call.1} parent=71 // pred_check_branch
          %511 = sbr.rel (%p509) target = $region84
        $region83: #{tpu_custom_call.1} parent=71 // pred_region
          %512 = dma.done [#allocation6], 48
        $region84: #{tpu_custom_call.1} parent=71 // pred_fallthru
          _
        // Predicated region
        $region85: #{tpu_custom_call.1} parent=71 // pred_check
          %p513 = pneg %p117
        $region86: #{tpu_custom_call.1} parent=71 // pred_check_branch
          %515 = sbr.rel (%p513) target = $region88
        $region87: #{tpu_custom_call.1} parent=71 // pred_region
          %516 = dma.done [#allocation9], 48
        $region88: #{tpu_custom_call.1} parent=71 // pred_fallthru
          _
        // Predicated region
        $region89: #{tpu_custom_call.1} parent=71 // pred_check
          %p517 = pneg %p138
        $region90: #{tpu_custom_call.1} parent=71 // pred_check_branch
          %519 = sbr.rel (%p517) target = $region92
        $region91: #{tpu_custom_call.1} parent=71 // pred_region
          %520 = dma.done [#allocation9], 1024
        $region92: #{tpu_custom_call.1} parent=71 // pred_fallthru
          _
        // Predicated region
        $region93: #{tpu_custom_call.1} parent=71 // pred_check
          %p521 = pneg %p201
        $region94: #{tpu_custom_call.1} parent=71 // pred_check_branch
          %523 = sbr.rel (%p521) target = $region96
        $region95: #{tpu_custom_call.1} parent=71 // pred_region
          %524 = dma.done [#allocation12], 4096
        $region96: #{tpu_custom_call.1} parent=71 // pred_fallthru
          _
        // Predicated region
        $region97: #{tpu_custom_call.1} parent=71 // pred_check
          %p525 = pneg %p264
        $region98: #{tpu_custom_call.1} parent=71 // pred_check_branch
          %527 = sbr.rel (%p525) target = $region100
        $region99: #{tpu_custom_call.1} parent=71 // pred_region
          %528 = dma.done [#allocation12], 4096
        $region100: #{tpu_custom_call.1} parent=71 // pred_fallthru
          _
        %s529 = sand.u32 %s41, 1
        %s530 = scalar_lea.sflag [#allocation3], %s529
        %s531 = sand.u32 %s41, 1
        %s532 = smul.addr %s531, 256
        %s533 = scalar_lea.vmem [#allocation2], %s532
        %p534 = pneg %p54
        %p535 = pneg %p51
        %p536 = pneg %p75
        %p537 = pneg %p72
        %p538 = pneg %p96
        %p539 = pneg %p93
        %p540 = pneg %p117
        %p541 = pneg %p114
        %p542 = pneg %p138
        %p543 = pneg %p135
        %p544 = pneg %p159
        %p545 = pneg %p156
        %p546 = pneg %p180
        %p547 = pneg %p177
        %p548 = pneg %p201
        %p549 = pneg %p198
        %p550 = pneg %p222
        %p551 = pneg %p219
        %p552 = pneg %p243
        %p553 = pneg %p240
        %p554 = pneg %p264
        %p555 = pneg %p261
        %p556 = pneg %p285
        %p557 = pneg %p282
        %p558 = pneg %p306
        %p559 = pneg %p303
        %p560 = pneg %p332
        %p561 = pneg %p329
        %s562 = sand.u32 %s319, 1
        %s563 = scalar_lea.sflag [#allocation4], %s562
        %s564 = sand.u32 %s319, 1
        %s565 = smul.addr %s564, 256
        %s566 = scalar_lea.vmem [#allocation14], %s565
        %v568 = vld [vmem:[%s500] sm:$0xff]
        %v569 = vld [vmem:[%s500 + $0x8] sm:$0xff]
        %v570 = vld [vmem:[%s500 + $0x10] sm:$0xff]
        %v571 = vld [vmem:[%s500 + $0x18] sm:$0xff]
        %v572 = vld [vmem:[%s500 + $0x20] sm:$0xff]
        %v573 = vld [vmem:[%s500 + $0x28] sm:$0xff]
        %v574 = vld [vmem:[%s500 + $0x30] sm:$0xff]
        %v575 = vld [vmem:[%s500 + $0x38] sm:$0xff]
        %v576 = vld [vmem:[%s500 + $0x40] sm:$0xff]
        %v577 = vld [vmem:[%s500 + $0x48] sm:$0xff]
        %v578 = vld [vmem:[%s500 + $0x50] sm:$0xff]
        %v579 = vld [vmem:[%s500 + $0x58] sm:$0xff]
        %v580 = vld [vmem:[%s500 + $0x60] sm:$0xff]
        %v581 = vld [vmem:[%s500 + $0x68] sm:$0xff]
        %v582 = vld [vmem:[%s500 + $0x70] sm:$0xff]
        %v583 = vld [vmem:[%s500 + $0x78] sm:$0xff]
        %v584 = vld [vmem:[%s500 + $0x80] sm:$0xff]
        %v585 = vld [vmem:[%s500 + $0x88] sm:$0xff]
        %v586 = vld [vmem:[%s500 + $0x90] sm:$0xff]
        %v587 = vld [vmem:[%s500 + $0x98] sm:$0xff]
        %v588 = vld [vmem:[%s500 + $0xa0] sm:$0xff]
        %v589 = vld [vmem:[%s500 + $0xa8] sm:$0xff]
        %v590 = vld [vmem:[%s500 + $0xb0] sm:$0xff]
        %v591 = vld [vmem:[%s500 + $0xb8] sm:$0xff]
        %v592 = vld [vmem:[%s500 + $0xc0] sm:$0xff]
        %v593 = vld [vmem:[%s500 + $0xc8] sm:$0xff]
        %v594 = vld [vmem:[%s500 + $0xd0] sm:$0xff]
        %v595 = vld [vmem:[%s500 + $0xd8] sm:$0xff]
        %v596 = vld [vmem:[%s500 + $0xe0] sm:$0xff]
        %v597 = vld [vmem:[%s500 + $0xe8] sm:$0xff]
        %v598 = vld [vmem:[%s500 + $0xf0] sm:$0xff]
        %v599 = vld [vmem:[%s500 + $0xf8] sm:$0xff]
        %v600 = vmul.f32 %v568, 0.5
        %v601 = vmul.f32 %v569, 0.5
        %v602 = vmul.f32 %v570, 0.5
        %v603 = vmul.f32 %v571, 0.5
        %v604 = vmul.f32 %v572, 0.5
        %v605 = vmul.f32 %v573, 0.5
        %v606 = vmul.f32 %v574, 0.5
        %v607 = vmul.f32 %v575, 0.5
        %v608 = vadd.f32 %v600, 0.0
        %v609 = vadd.f32 %v601, 0.0
        %v610 = vadd.f32 %v602, 0.0
        %v611 = vadd.f32 %v603, 0.0
        %v612 = vadd.f32 %v604, 0.0
        %v613 = vadd.f32 %v605, 0.0
        %v614 = vadd.f32 %v606, 0.0
        %v615 = vadd.f32 %v607, 0.0
        %vm616 = vcmp.ge.f32.partialorder %v608, 1.0
        %vm617 = vcmp.ge.f32.partialorder %v609, 1.0
        %vm618 = vcmp.ge.f32.partialorder %v610, 1.0
        %vm619 = vcmp.ge.f32.partialorder %v611, 1.0
        %vm620 = vcmp.ge.f32.partialorder %v612, 1.0
        %vm621 = vcmp.ge.f32.partialorder %v613, 1.0
        %vm622 = vcmp.ge.f32.partialorder %v614, 1.0
        %vm623 = vcmp.ge.f32.partialorder %v615, 1.0
        %v624 = vsel %vm616, 1, 0
        %v625 = vsel %vm617, 1, 0
        %v626 = vsel %vm618, 1, 0
        %v627 = vsel %vm619, 1, 0
        %v628 = vsel %vm620, 1, 0
        %v629 = vsel %vm621, 1, 0
        %v630 = vsel %vm622, 1, 0
        %v631 = vsel %vm623, 1, 0
        %v632 = vcvt.s32.f32 %v624
        %v633 = vcvt.s32.f32 %v625
        %v634 = vcvt.s32.f32 %v626
        %v635 = vcvt.s32.f32 %v627
        %v636 = vcvt.s32.f32 %v628
        %v637 = vcvt.s32.f32 %v629
        %v638 = vcvt.s32.f32 %v630
        %v639 = vcvt.s32.f32 %v631
        %v640 = vsub.f32 1.0, %v632
        %v641 = vsub.f32 1.0, %v633
        %v642 = vsub.f32 1.0, %v634
        %v643 = vsub.f32 1.0, %v635
        %v644 = vsub.f32 1.0, %v636
        %v645 = vsub.f32 1.0, %v637
        %v646 = vsub.f32 1.0, %v638
        %v647 = vsub.f32 1.0, %v639
        %v648 = vmul.f32 %v608, %v640
        %v649 = vmul.f32 %v609, %v641
        %v650 = vmul.f32 %v610, %v642
        %v651 = vmul.f32 %v611, %v643
        %v652 = vmul.f32 %v612, %v644
        %v653 = vmul.f32 %v613, %v645
        %v654 = vmul.f32 %v614, %v646
        %v655 = vmul.f32 %v615, %v647
        %v656 = vsub.f32 %v576, %v648
        %v657 = vsub.f32 %v577, %v649
        %v658 = vsub.f32 %v578, %v650
        %v659 = vsub.f32 %v579, %v651
        %v660 = vsub.f32 %v580, %v652
        %v661 = vsub.f32 %v581, %v653
        %v662 = vsub.f32 %v582, %v654
        %v663 = vsub.f32 %v583, %v655
        %v664 = vmul.f32 %v656, 0.5
        %v665 = vmul.f32 %v657, 0.5
        %v666 = vmul.f32 %v658, 0.5
        %v667 = vmul.f32 %v659, 0.5
        %v668 = vmul.f32 %v660, 0.5
        %v669 = vmul.f32 %v661, 0.5
        %v670 = vmul.f32 %v662, 0.5
        %v671 = vmul.f32 %v663, 0.5
        %v672 = vadd.f32 %v648, %v664
        %v673 = vadd.f32 %v649, %v665
        %v674 = vadd.f32 %v650, %v666
        %v675 = vadd.f32 %v651, %v667
        %v676 = vadd.f32 %v652, %v668
        %v677 = vadd.f32 %v653, %v669
        %v678 = vadd.f32 %v654, %v670
        %v679 = vadd.f32 %v655, %v671
        %vm680 = vcmp.ge.f32.partialorder %v672, 1.0
        %vm681 = vcmp.ge.f32.partialorder %v673, 1.0
        %vm682 = vcmp.ge.f32.partialorder %v674, 1.0
        %vm683 = vcmp.ge.f32.partialorder %v675, 1.0
        %vm684 = vcmp.ge.f32.partialorder %v676, 1.0
        %vm685 = vcmp.ge.f32.partialorder %v677, 1.0
        %vm686 = vcmp.ge.f32.partialorder %v678, 1.0
        %vm687 = vcmp.ge.f32.partialorder %v679, 1.0
        %v688 = vsel %vm680, 1, 0
        %v689 = vsel %vm681, 1, 0
        %v690 = vsel %vm682, 1, 0
        %v691 = vsel %vm683, 1, 0
        %v692 = vsel %vm684, 1, 0
        %v693 = vsel %vm685, 1, 0
        %v694 = vsel %vm686, 1, 0
        %v695 = vsel %vm687, 1, 0
        %v696 = vcvt.s32.f32 %v688
        %v697 = vcvt.s32.f32 %v689
        %v698 = vcvt.s32.f32 %v690
        %v699 = vcvt.s32.f32 %v691
        %v700 = vcvt.s32.f32 %v692
        %v701 = vcvt.s32.f32 %v693
        %v702 = vcvt.s32.f32 %v694
        %v703 = vcvt.s32.f32 %v695
        %v704 = vsub.f32 1.0, %v696
        %v705 = vsub.f32 1.0, %v697
        %v706 = vsub.f32 1.0, %v698
        %v707 = vsub.f32 1.0, %v699
        %v708 = vsub.f32 1.0, %v700
        %v709 = vsub.f32 1.0, %v701
        %v710 = vsub.f32 1.0, %v702
        %v711 = vsub.f32 1.0, %v703
        %v712 = vmul.f32 %v672, %v704
        %v713 = vmul.f32 %v673, %v705
        %v714 = vmul.f32 %v674, %v706
        %v715 = vmul.f32 %v675, %v707
        %v716 = vmul.f32 %v676, %v708
        %v717 = vmul.f32 %v677, %v709
        %v718 = vmul.f32 %v678, %v710
        %v719 = vmul.f32 %v679, %v711
        %v720 = vsub.f32 %v584, %v712
        %v721 = vsub.f32 %v585, %v713
        %v722 = vsub.f32 %v586, %v714
        %v723 = vsub.f32 %v587, %v715
        %v724 = vsub.f32 %v588, %v716
        %v725 = vsub.f32 %v589, %v717
        %v726 = vsub.f32 %v590, %v718
        %v727 = vsub.f32 %v591, %v719
        %v728 = vmul.f32 %v720, 0.5
        %v729 = vmul.f32 %v721, 0.5
        %v730 = vmul.f32 %v722, 0.5
        %v731 = vmul.f32 %v723, 0.5
        %v732 = vmul.f32 %v724, 0.5
        %v733 = vmul.f32 %v725, 0.5
        %v734 = vmul.f32 %v726, 0.5
        %v735 = vmul.f32 %v727, 0.5
        %v736 = vadd.f32 %v712, %v728
        %v737 = vadd.f32 %v713, %v729
        %v738 = vadd.f32 %v714, %v730
        %v739 = vadd.f32 %v715, %v731
        %v740 = vadd.f32 %v716, %v732
        %v741 = vadd.f32 %v717, %v733
        %v742 = vadd.f32 %v718, %v734
        %v743 = vadd.f32 %v719, %v735
        %vm744 = vcmp.ge.f32.partialorder %v736, 1.0
        %vm745 = vcmp.ge.f32.partialorder %v737, 1.0
        %vm746 = vcmp.ge.f32.partialorder %v738, 1.0
        %vm747 = vcmp.ge.f32.partialorder %v739, 1.0
        %vm748 = vcmp.ge.f32.partialorder %v740, 1.0
        %vm749 = vcmp.ge.f32.partialorder %v741, 1.0
        %vm750 = vcmp.ge.f32.partialorder %v742, 1.0
        %vm751 = vcmp.ge.f32.partialorder %v743, 1.0
        %v752 = vsel %vm744, 1, 0
        %v753 = vsel %vm745, 1, 0
        %v754 = vsel %vm746, 1, 0
        %v755 = vsel %vm747, 1, 0
        %v756 = vsel %vm748, 1, 0
        %v757 = vsel %vm749, 1, 0
        %v758 = vsel %vm750, 1, 0
        %v759 = vsel %vm751, 1, 0
        %v760 = vcvt.s32.f32 %v752
        %v761 = vcvt.s32.f32 %v753
        %v762 = vcvt.s32.f32 %v754
        %v763 = vcvt.s32.f32 %v755
        %v764 = vcvt.s32.f32 %v756
        %v765 = vcvt.s32.f32 %v757
        %v766 = vcvt.s32.f32 %v758
        %v767 = vcvt.s32.f32 %v759
        %v768 = vsub.f32 1.0, %v760
        %v769 = vsub.f32 1.0, %v761
        %v770 = vsub.f32 1.0, %v762
        %v771 = vsub.f32 1.0, %v763
        %v772 = vsub.f32 1.0, %v764
        %v773 = vsub.f32 1.0, %v765
        %v774 = vsub.f32 1.0, %v766
        %v775 = vsub.f32 1.0, %v767
        %v776 = vmul.f32 %v736, %v768
        %v777 = vmul.f32 %v737, %v769
        %v778 = vmul.f32 %v738, %v770
        %v779 = vmul.f32 %v739, %v771
        %v780 = vmul.f32 %v740, %v772
        %v781 = vmul.f32 %v741, %v773
        %v782 = vmul.f32 %v742, %v774
        %v783 = vmul.f32 %v743, %v775
        %v784 = vsub.f32 %v592, %v776
        %v785 = vsub.f32 %v593, %v777
        %v786 = vsub.f32 %v594, %v778
        %v787 = vsub.f32 %v595, %v779
        %v788 = vsub.f32 %v596, %v780
        %v789 = vsub.f32 %v597, %v781
        %v790 = vsub.f32 %v598, %v782
        %v791 = vsub.f32 %v599, %v783
        %v792 = vmul.f32 %v784, 0.5
        %v793 = vmul.f32 %v785, 0.5
        %v794 = vmul.f32 %v786, 0.5
        %v795 = vmul.f32 %v787, 0.5
        %v796 = vmul.f32 %v788, 0.5
        %v797 = vmul.f32 %v789, 0.5
        %v798 = vmul.f32 %v790, 0.5
        %v799 = vmul.f32 %v791, 0.5
        %v800 = vadd.f32 %v776, %v792
        %v801 = vadd.f32 %v777, %v793
        %v802 = vadd.f32 %v778, %v794
        %v803 = vadd.f32 %v779, %v795
        %v804 = vadd.f32 %v780, %v796
        %v805 = vadd.f32 %v781, %v797
        %v806 = vadd.f32 %v782, %v798
        %v807 = vadd.f32 %v783, %v799
        %vm808 = vcmp.ge.f32.partialorder %v800, 1.0
        %vm809 = vcmp.ge.f32.partialorder %v801, 1.0
        %vm810 = vcmp.ge.f32.partialorder %v802, 1.0
        %vm811 = vcmp.ge.f32.partialorder %v803, 1.0
        %vm812 = vcmp.ge.f32.partialorder %v804, 1.0
        %vm813 = vcmp.ge.f32.partialorder %v805, 1.0
        %vm814 = vcmp.ge.f32.partialorder %v806, 1.0
        %vm815 = vcmp.ge.f32.partialorder %v807, 1.0
        %v816 = vsel %vm808, 1, 0
        %v817 = vsel %vm809, 1, 0
        %v818 = vsel %vm810, 1, 0
        %v819 = vsel %vm811, 1, 0
        %v820 = vsel %vm812, 1, 0
        %v821 = vsel %vm813, 1, 0
        %v822 = vsel %vm814, 1, 0
        %v823 = vsel %vm815, 1, 0
        %v824 = vcvt.s32.f32 %v816
        %v825 = vcvt.s32.f32 %v817
        %v826 = vcvt.s32.f32 %v818
        %v827 = vcvt.s32.f32 %v819
        %v828 = vcvt.s32.f32 %v820
        %v829 = vcvt.s32.f32 %v821
        %v830 = vcvt.s32.f32 %v822
        %v831 = vcvt.s32.f32 %v823
        %v832 = vpack.c.bf16 %v633, %v632
        %v833 = vpack.c.bf16 %v635, %v634
        %v834 = vpack.c.bf16 %v637, %v636
        %v835 = vpack.c.bf16 %v639, %v638
        %v836 = vpack.c.bf16 %v697, %v696
        %v837 = vpack.c.bf16 %v699, %v698
        %v838 = vpack.c.bf16 %v701, %v700
        %v839 = vpack.c.bf16 %v703, %v702
        %v840 = vpack.c.bf16 %v761, %v760
        %v841 = vpack.c.bf16 %v763, %v762
        %v842 = vpack.c.bf16 %v765, %v764
        %v843 = vpack.c.bf16 %v767, %v766
        %v844 = vpack.c.bf16 %v825, %v824
        %v845 = vpack.c.bf16 %v827, %v826
        %v846 = vpack.c.bf16 %v829, %v828
        %v847 = vpack.c.bf16 %v831, %v830
        %v848 = vld [vmem:[#allocation5] sm:$0xff]
        %v849 = vld [vmem:[#allocation5 + $0x8] sm:$0xf]
        %v850 = vld [vmem:[#allocation5 + $0xc] sm:$0xff]
        %v851 = vld [vmem:[#allocation5 + $0x14] sm:$0xf]
        %v852 = vld [vmem:[#allocation5 + $0x18] sm:$0xff]
        %v853 = vld [vmem:[#allocation5 + $0x20] sm:$0xf]
        %v854 = vld [vmem:[#allocation5 + $0x24] sm:$0xff]
        %v855 = vld [vmem:[#allocation5 + $0x2c] sm:$0xf]
        %v856 = vld [vmem:[#allocation5 + $0x30] sm:$0xff]
        %v857 = vld [vmem:[#allocation5 + $0x38] sm:$0xf]
        %v858 = vld [vmem:[#allocation5 + $0x3c] sm:$0xff]
        %v859 = vld [vmem:[#allocation5 + $0x44] sm:$0xf]
        %v860 = vld [vmem:[#allocation5 + $0x48] sm:$0xff]
        %v861 = vld [vmem:[#allocation5 + $0x50] sm:$0xf]
        %v862 = vld [vmem:[#allocation5 + $0x54] sm:$0xff]
        %v863 = vld [vmem:[#allocation5 + $0x5c] sm:$0xf]
        %v864 = vld [vmem:[#allocation5 + $0x60] sm:$0xff]
        %v865 = vld [vmem:[#allocation5 + $0x68] sm:$0xf]
        %v866 = vld [vmem:[#allocation5 + $0x6c] sm:$0xff]
        %v867 = vld [vmem:[#allocation5 + $0x74] sm:$0xf]
        %v868 = vld [vmem:[#allocation5 + $0x78] sm:$0xff]
        %v869 = vld [vmem:[#allocation5 + $0x80] sm:$0xf]
        %v870 = vld [vmem:[#allocation5 + $0x84] sm:$0xff]
        %v871 = vld [vmem:[#allocation5 + $0x8c] sm:$0xf]
        %v872 = vld [vmem:[#allocation5 + $0x90] sm:$0xff]
        %v873 = vld [vmem:[#allocation5 + $0x98] sm:$0xf]
        %v874 = vld [vmem:[#allocation5 + $0x9c] sm:$0xff]
        %v875 = vld [vmem:[#allocation5 + $0xa4] sm:$0xf]
        %v876 = vld [vmem:[#allocation5 + $0xa8] sm:$0xff]
        %v877 = vld [vmem:[#allocation5 + $0xb0] sm:$0xf]
        %v878 = vld [vmem:[#allocation5 + $0xb4] sm:$0xff]
        %v879 = vld [vmem:[#allocation5 + $0xbc] sm:$0xf]
        %v912 = vunpack.c.l.b16 %v848
        %v913 = vunpack.c.h.b16 %v848
        %v914 = vunpack.c.l.b16 %v849
        %v915 = vunpack.c.l.b16 %v850
        %v916 = vunpack.c.h.b16 %v850
        %v917 = vunpack.c.l.b16 %v851
        %v918 = vunpack.c.l.b16 %v852
        %v919 = vunpack.c.h.b16 %v852
        %v920 = vunpack.c.l.b16 %v853
        %v921 = vunpack.c.l.b16 %v854
        %v922 = vunpack.c.h.b16 %v854
        %v923 = vunpack.c.l.b16 %v855
        %v924 = vunpack.c.l.b16 %v856
        %v925 = vunpack.c.h.b16 %v856
        %v926 = vunpack.c.l.b16 %v857
        %v927 = vunpack.c.l.b16 %v858
        %v928 = vunpack.c.h.b16 %v858
        %v929 = vunpack.c.l.b16 %v859
        %v930 = vunpack.c.l.b16 %v860
        %v931 = vunpack.c.h.b16 %v860
        %v932 = vunpack.c.l.b16 %v861
        %v933 = vunpack.c.l.b16 %v862
        %v934 = vunpack.c.h.b16 %v862
        %v935 = vunpack.c.l.b16 %v863
        %v936 = vunpack.c.l.b16 %v864
        %v937 = vunpack.c.h.b16 %v864
        %v938 = vunpack.c.l.b16 %v865
        %v939 = vunpack.c.l.b16 %v866
        %v940 = vunpack.c.h.b16 %v866
        %v941 = vunpack.c.l.b16 %v867
        %v942 = vunpack.c.l.b16 %v868
        %v943 = vunpack.c.h.b16 %v868
        %v944 = vunpack.c.l.b16 %v869
        %v945 = vunpack.c.l.b16 %v870
        %v946 = vunpack.c.h.b16 %v870
        %v947 = vunpack.c.l.b16 %v871
        %v948 = vunpack.c.l.b16 %v872
        %v949 = vunpack.c.h.b16 %v872
        %v950 = vunpack.c.l.b16 %v873
        %v951 = vunpack.c.l.b16 %v874
        %v952 = vunpack.c.h.b16 %v874
        %v953 = vunpack.c.l.b16 %v875
        %v954 = vunpack.c.l.b16 %v876
        %v955 = vunpack.c.h.b16 %v876
        %v956 = vunpack.c.l.b16 %v877
        %v957 = vunpack.c.l.b16 %v878
        %v958 = vunpack.c.h.b16 %v878
        %v959 = vunpack.c.l.b16 %v879
        %v960 = vpack.c.b16 %v915, %v912
        %v961 = vpack.c.b16 %v916, %v913
        %v962 = vpack.c.b16 %v917, %v914
        %v963 = vpack.c.b16 %v921, %v918
        %v964 = vpack.c.b16 %v922, %v919
        %v965 = vpack.c.b16 %v923, %v920
        %v966 = vpack.c.b16 %v927, %v924
        %v967 = vpack.c.b16 %v928, %v925
        %v968 = vpack.c.b16 %v929, %v926
        %v969 = vpack.c.b16 %v933, %v930
        %v970 = vpack.c.b16 %v934, %v931
        %v971 = vpack.c.b16 %v935, %v932
        %v972 = vpack.c.b16 %v939, %v936
        %v973 = vpack.c.b16 %v940, %v937
        %v974 = vpack.c.b16 %v941, %v938
        %v975 = vpack.c.b16 %v945, %v942
        %v976 = vpack.c.b16 %v946, %v943
        %v977 = vpack.c.b16 %v947, %v944
        %v978 = vpack.c.b16 %v951, %v948
        %v979 = vpack.c.b16 %v952, %v949
        %v980 = vpack.c.b16 %v953, %v950
        %v981 = vpack.c.b16 %v957, %v954
        %v982 = vpack.c.b16 %v958, %v955
        %v983 = vpack.c.b16 %v959, %v956
        %1008 = vmatprep.subr.bf16.mxu0 %v982
        %1009 = vmatpush1.bf16.msra.mxu0 %v981
        %1010 = vmatprep.subr.bf16.mxu0 %v979
        %1011 = vmatpush1.bf16.msra.mxu0 %v978
        %1012 = vmatprep.subr.bf16.mxu0 %v976
        %1013 = vmatpush1.bf16.msra.mxu0 %v975
        %1014 = vmatprep.subr.bf16.mxu0 %v973
        %1015 = vmatpush1.bf16.msra.mxu0 %v972
        %1016 = vmatprep.subr.bf16.mxu0 %v970
        %1017 = vmatpush1.bf16.msra.mxu0 %v969
        %1018 = vmatprep.subr.bf16.mxu0 %v967
        %1019 = vmatpush1.bf16.msra.mxu0 %v966
        %1020 = vmatprep.subr.bf16.mxu0 %v964
        %1021 = vmatpush1.bf16.msra.mxu0 %v963
        %1022 = vmatprep.subr.bf16.mxu0 %v961
        %1023 = vmatpush1.bf16.msra.mxu0 %v960
        %1024 = vmatprep.subr.bf16.mxu0 0
        %1025 = vmatpush2.bf16.msra.mxu0 0
        %1026 = vmatprep.subr.bf16.mxu0 0
        %1027 = vmatpush2.bf16.msra.mxu0 0
        %1028 = vmatprep.subr.bf16.mxu0 0
        %1029 = vmatpush2.bf16.msra.mxu0 0
        %1030 = vmatprep.subr.bf16.mxu0 0
        %1031 = vmatpush2.bf16.msra.mxu0 0
        %1032 = vmatprep.subr.bf16.mxu0 0
        %1033 = vmatpush2.bf16.msra.mxu0 0
        %1034 = vmatprep.subr.bf16.mxu0 0
        %1035 = vmatpush2.bf16.msra.mxu0 0
        %1036 = vmatprep.subr.bf16.mxu0 0
        %1037 = vmatpush2.bf16.msra.mxu0 0
        %1038 = vmatprep.subr.bf16.mxu0 0
        %1039 = vmatpush2.bf16.msra.mxu0 0
        %1040 = vmatprep.mubr.bf16.mxu0 0
        %1041 = vmatmul.mubr.bf16.gmra.mxu0 %v832
        %v1042 = vpop.f32.mrf.mxu0
        %v1043 = vadd.f32 0.0, %v1042
        %v1044 = vpop.f32.mrf.mxu0
        %v1045 = vadd.f32 0.0, %v1044
        %v1046 = vpop.f32.mrf.mxu0
        %v1047 = vadd.f32 0.0, %v1046
        %v1048 = vpop.f32.mrf.mxu0
        %v1049 = vadd.f32 0.0, %v1048
        %1050 = vmatprep.mubr.bf16.mxu0 0
        %1051 = vmatmul.mubr.bf16.gmra.mxu0 %v833
        %v1052 = vpop.f32.mrf.mxu0
        %v1053 = vadd.f32 0.0, %v1052
        %v1054 = vpop.f32.mrf.mxu0
        %v1055 = vadd.f32 0.0, %v1054
        %v1056 = vpop.f32.mrf.mxu0
        %v1057 = vadd.f32 0.0, %v1056
        %v1058 = vpop.f32.mrf.mxu0
        %v1059 = vadd.f32 0.0, %v1058
        %1060 = vmatprep.mubr.bf16.mxu0 0
        %1061 = vmatmul.mubr.bf16.gmra.mxu0 %v834
        %v1062 = vpop.f32.mrf.mxu0
        %v1063 = vadd.f32 0.0, %v1062
        %v1064 = vpop.f32.mrf.mxu0
        %v1065 = vadd.f32 0.0, %v1064
        %v1066 = vpop.f32.mrf.mxu0
        %v1067 = vadd.f32 0.0, %v1066
        %v1068 = vpop.f32.mrf.mxu0
        %v1069 = vadd.f32 0.0, %v1068
        %1070 = vmatprep.mubr.bf16.mxu0 0
        %1071 = vmatmul.mubr.bf16.gmra.mxu0 %v835
        %v1072 = vpop.f32.mrf.mxu0
        %v1073 = vadd.f32 0.0, %v1072
        %v1074 = vpop.f32.mrf.mxu0
        %v1075 = vadd.f32 0.0, %v1074
        %v1076 = vpop.f32.mrf.mxu0
        %v1077 = vadd.f32 0.0, %v1076
        %v1078 = vpop.f32.mrf.mxu0
        %v1079 = vadd.f32 0.0, %v1078
        %1080 = vmatprep.mubr.bf16.mxu0 0
        %1081 = vmatmul.mubr.bf16.gmra.mxu0 %v836
        %v1082 = vpop.f32.mrf.mxu0
        %v1083 = vadd.f32 0.0, %v1082
        %v1084 = vpop.f32.mrf.mxu0
        %v1085 = vadd.f32 0.0, %v1084
        %v1086 = vpop.f32.mrf.mxu0
        %v1087 = vadd.f32 0.0, %v1086
        %v1088 = vpop.f32.mrf.mxu0
        %v1089 = vadd.f32 0.0, %v1088
        %1090 = vmatprep.mubr.bf16.mxu0 0
        %1091 = vmatmul.mubr.bf16.gmra.mxu0 %v837
        %v1092 = vpop.f32.mrf.mxu0
        %v1093 = vadd.f32 0.0, %v1092
        %v1094 = vpop.f32.mrf.mxu0
        %v1095 = vadd.f32 0.0, %v1094
        %v1096 = vpop.f32.mrf.mxu0
        %v1097 = vadd.f32 0.0, %v1096
        %v1098 = vpop.f32.mrf.mxu0
        %v1099 = vadd.f32 0.0, %v1098
        %1100 = vmatprep.mubr.bf16.mxu0 0
        %1101 = vmatmul.mubr.bf16.gmra.mxu0 %v838
        %v1102 = vpop.f32.mrf.mxu0
        %v1103 = vadd.f32 0.0, %v1102
        %v1104 = vpop.f32.mrf.mxu0
        %v1105 = vadd.f32 0.0, %v1104
        %v1106 = vpop.f32.mrf.mxu0
        %v1107 = vadd.f32 0.0, %v1106
        %v1108 = vpop.f32.mrf.mxu0
        %v1109 = vadd.f32 0.0, %v1108
        %1110 = vmatprep.mubr.bf16.mxu0 0
        %1111 = vmatmul.mubr.bf16.gmra.mxu0 %v839
        %v1112 = vpop.f32.mrf.mxu0
        %v1113 = vadd.f32 0.0, %v1112
        %v1114 = vpop.f32.mrf.mxu0
        %v1115 = vadd.f32 0.0, %v1114
        %v1116 = vpop.f32.mrf.mxu0
        %v1117 = vadd.f32 0.0, %v1116
        %v1118 = vpop.f32.mrf.mxu0
        %v1119 = vadd.f32 0.0, %v1118
        %1120 = vmatprep.mubr.bf16.mxu0 0
        %1121 = vmatmul.mubr.bf16.gmra.mxu0 %v840
        %v1122 = vpop.f32.mrf.mxu0
        %v1123 = vadd.f32 0.0, %v1122
        %v1124 = vpop.f32.mrf.mxu0
        %v1125 = vadd.f32 0.0, %v1124
        %v1126 = vpop.f32.mrf.mxu0
        %v1127 = vadd.f32 0.0, %v1126
        %v1128 = vpop.f32.mrf.mxu0
        %v1129 = vadd.f32 0.0, %v1128
        %1130 = vmatprep.mubr.bf16.mxu0 0
        %1131 = vmatmul.mubr.bf16.gmra.mxu0 %v841
        %v1132 = vpop.f32.mrf.mxu0
        %v1133 = vadd.f32 0.0, %v1132
        %v1134 = vpop.f32.mrf.mxu0
        %v1135 = vadd.f32 0.0, %v1134
        %v1136 = vpop.f32.mrf.mxu0
        %v1137 = vadd.f32 0.0, %v1136
        %v1138 = vpop.f32.mrf.mxu0
        %v1139 = vadd.f32 0.0, %v1138
        %1140 = vmatprep.mubr.bf16.mxu0 0
        %1141 = vmatmul.mubr.bf16.gmra.mxu0 %v842
        %v1142 = vpop.f32.mrf.mxu0
        %v1143 = vadd.f32 0.0, %v1142
        %v1144 = vpop.f32.mrf.mxu0
        %v1145 = vadd.f32 0.0, %v1144
        %v1146 = vpop.f32.mrf.mxu0
        %v1147 = vadd.f32 0.0, %v1146
        %v1148 = vpop.f32.mrf.mxu0
        %v1149 = vadd.f32 0.0, %v1148
        %1150 = vmatprep.mubr.bf16.mxu0 0
        %1151 = vmatmul.mubr.bf16.gmra.mxu0 %v843
        %v1152 = vpop.f32.mrf.mxu0
        %v1153 = vadd.f32 0.0, %v1152
        %v1154 = vpop.f32.mrf.mxu0
        %v1155 = vadd.f32 0.0, %v1154
        %v1156 = vpop.f32.mrf.mxu0
        %v1157 = vadd.f32 0.0, %v1156
        %v1158 = vpop.f32.mrf.mxu0
        %v1159 = vadd.f32 0.0, %v1158
        %1160 = vmatprep.mubr.bf16.mxu0 0
        %1161 = vmatmul.mubr.bf16.gmra.mxu0 %v844
        %v1162 = vpop.f32.mrf.mxu0
        %v1163 = vadd.f32 0.0, %v1162
        %v1164 = vpop.f32.mrf.mxu0
        %v1165 = vadd.f32 0.0, %v1164
        %v1166 = vpop.f32.mrf.mxu0
        %v1167 = vadd.f32 0.0, %v1166
        %v1168 = vpop.f32.mrf.mxu0
        %v1169 = vadd.f32 0.0, %v1168
        %1170 = vmatprep.mubr.bf16.mxu0 0
        %1171 = vmatmul.mubr.bf16.gmra.mxu0 %v845
        %v1172 = vpop.f32.mrf.mxu0
        %v1173 = vadd.f32 0.0, %v1172
        %v1174 = vpop.f32.mrf.mxu0
        %v1175 = vadd.f32 0.0, %v1174
        %v1176 = vpop.f32.mrf.mxu0
        %v1177 = vadd.f32 0.0, %v1176
        %v1178 = vpop.f32.mrf.mxu0
        %v1179 = vadd.f32 0.0, %v1178
        %1180 = vmatprep.mubr.bf16.mxu0 0
        %1181 = vmatmul.mubr.bf16.gmra.mxu0 %v846
        %v1182 = vpop.f32.mrf.mxu0
        %v1183 = vadd.f32 0.0, %v1182
        %v1184 = vpop.f32.mrf.mxu0
        %v1185 = vadd.f32 0.0, %v1184
        %v1186 = vpop.f32.mrf.mxu0
        %v1187 = vadd.f32 0.0, %v1186
        %v1188 = vpop.f32.mrf.mxu0
        %v1189 = vadd.f32 0.0, %v1188
        %1190 = vmatprep.mubr.bf16.mxu0 0
        %1191 = vmatmul.mubr.bf16.gmra.mxu0 %v847
        %v1192 = vpop.f32.mrf.mxu0
        %v1193 = vadd.f32 0.0, %v1192
        %v1194 = vpop.f32.mrf.mxu0
        %v1195 = vadd.f32 0.0, %v1194
        %v1196 = vpop.f32.mrf.mxu0
        %v1197 = vadd.f32 0.0, %v1196
        %v1198 = vpop.f32.mrf.mxu0
        %v1199 = vadd.f32 0.0, %v1198
        %1200 = vdwg.mxu0
        %1201 = vmatprep.subr.bf16.mxu0 0
        %1202 = vmatpush1.bf16.msra.mxu0 %v983
        %1203 = vmatprep.subr.bf16.mxu0 0
        %1204 = vmatpush1.bf16.msra.mxu0 %v980
        %1205 = vmatprep.subr.bf16.mxu0 0
        %1206 = vmatpush1.bf16.msra.mxu0 %v977
        %1207 = vmatprep.subr.bf16.mxu0 0
        %1208 = vmatpush1.bf16.msra.mxu0 %v974
        %1209 = vmatprep.subr.bf16.mxu0 0
        %1210 = vmatpush1.bf16.msra.mxu0 %v971
        %1211 = vmatprep.subr.bf16.mxu0 0
        %1212 = vmatpush1.bf16.msra.mxu0 %v968
        %1213 = vmatprep.subr.bf16.mxu0 0
        %1214 = vmatpush1.bf16.msra.mxu0 %v965
        %1215 = vmatprep.subr.bf16.mxu0 0
        %1216 = vmatpush1.bf16.msra.mxu0 %v962
        %1217 = vmatprep.subr.bf16.mxu0 0
        %1218 = vmatpush2.bf16.msra.mxu0 0
        %1219 = vmatprep.subr.bf16.mxu0 0
        %1220 = vmatpush2.bf16.msra.mxu0 0
        %1221 = vmatprep.subr.bf16.mxu0 0
        %1222 = vmatpush2.bf16.msra.mxu0 0
        %1223 = vmatprep.subr.bf16.mxu0 0
        %1224 = vmatpush2.bf16.msra.mxu0 0
        %1225 = vmatprep.subr.bf16.mxu0 0
        %1226 = vmatpush2.bf16.msra.mxu0 0
        %1227 = vmatprep.subr.bf16.mxu0 0
        %1228 = vmatpush2.bf16.msra.mxu0 0
        %1229 = vmatprep.subr.bf16.mxu0 0
        %1230 = vmatpush2.bf16.msra.mxu0 0
        %1231 = vmatprep.subr.bf16.mxu0 0
        %1232 = vmatpush2.bf16.msra.mxu0 0
        %1233 = vmatprep.mubr.bf16.mxu0 0
        %1234 = vmatmul.mubr.bf16.gmra.mxu0 %v832
        %v1235 = vpop.f32.mrf.mxu0
        %v1236 = vadd.f32 0.0, %v1235
        %v1237 = vpop.f32.mrf.mxu0
        %v1238 = vpop.f32.mrf.mxu0
        %v1239 = vadd.f32 0.0, %v1238
        %v1240 = vpop.f32.mrf.mxu0
        %1241 = vmatprep.mubr.bf16.mxu0 0
        %1242 = vmatmul.mubr.bf16.gmra.mxu0 %v833
        %v1243 = vpop.f32.mrf.mxu0
        %v1244 = vadd.f32 0.0, %v1243
        %v1245 = vpop.f32.mrf.mxu0
        %v1246 = vpop.f32.mrf.mxu0
        %v1247 = vadd.f32 0.0, %v1246
        %v1248 = vpop.f32.mrf.mxu0
        %1249 = vmatprep.mubr.bf16.mxu0 0
        %1250 = vmatmul.mubr.bf16.gmra.mxu0 %v834
        %v1251 = vpop.f32.mrf.mxu0
        %v1252 = vadd.f32 0.0, %v1251
        %v1253 = vpop.f32.mrf.mxu0
        %v1254 = vpop.f32.mrf.mxu0
        %v1255 = vadd.f32 0.0, %v1254
        %v1256 = vpop.f32.mrf.mxu0
        %1257 = vmatprep.mubr.bf16.mxu0 0
        %1258 = vmatmul.mubr.bf16.gmra.mxu0 %v835
        %v1259 = vpop.f32.mrf.mxu0
        %v1260 = vadd.f32 0.0, %v1259
        %v1261 = vpop.f32.mrf.mxu0
        %v1262 = vpop.f32.mrf.mxu0
        %v1263 = vadd.f32 0.0, %v1262
        %v1264 = vpop.f32.mrf.mxu0
        %1265 = vmatprep.mubr.bf16.mxu0 0
        %1266 = vmatmul.mubr.bf16.gmra.mxu0 %v836
        %v1267 = vpop.f32.mrf.mxu0
        %v1268 = vadd.f32 0.0, %v1267
        %v1269 = vpop.f32.mrf.mxu0
        %v1270 = vpop.f32.mrf.mxu0
        %v1271 = vadd.f32 0.0, %v1270
        %v1272 = vpop.f32.mrf.mxu0
        %1273 = vmatprep.mubr.bf16.mxu0 0
        %1274 = vmatmul.mubr.bf16.gmra.mxu0 %v837
        %v1275 = vpop.f32.mrf.mxu0
        %v1276 = vadd.f32 0.0, %v1275
        %v1277 = vpop.f32.mrf.mxu0
        %v1278 = vpop.f32.mrf.mxu0
        %v1279 = vadd.f32 0.0, %v1278
        %v1280 = vpop.f32.mrf.mxu0
        %1281 = vmatprep.mubr.bf16.mxu0 0
        %1282 = vmatmul.mubr.bf16.gmra.mxu0 %v838
        %v1283 = vpop.f32.mrf.mxu0
        %v1284 = vadd.f32 0.0, %v1283
        %v1285 = vpop.f32.mrf.mxu0
        %v1286 = vpop.f32.mrf.mxu0
        %v1287 = vadd.f32 0.0, %v1286
        %v1288 = vpop.f32.mrf.mxu0
        %1289 = vmatprep.mubr.bf16.mxu0 0
        %1290 = vmatmul.mubr.bf16.gmra.mxu0 %v839
        %v1291 = vpop.f32.mrf.mxu0
        %v1292 = vadd.f32 0.0, %v1291
        %v1293 = vpop.f32.mrf.mxu0
        %v1294 = vpop.f32.mrf.mxu0
        %v1295 = vadd.f32 0.0, %v1294
        %v1296 = vpop.f32.mrf.mxu0
        %1297 = vmatprep.mubr.bf16.mxu0 0
        %1298 = vmatmul.mubr.bf16.gmra.mxu0 %v840
        %v1299 = vpop.f32.mrf.mxu0
        %v1300 = vadd.f32 0.0, %v1299
        %v1301 = vpop.f32.mrf.mxu0
        %v1302 = vpop.f32.mrf.mxu0
        %v1303 = vadd.f32 0.0, %v1302
        %v1304 = vpop.f32.mrf.mxu0
        %1305 = vmatprep.mubr.bf16.mxu0 0
        %1306 = vmatmul.mubr.bf16.gmra.mxu0 %v841
        %v1307 = vpop.f32.mrf.mxu0
        %v1308 = vadd.f32 0.0, %v1307
        %v1309 = vpop.f32.mrf.mxu0
        %v1310 = vpop.f32.mrf.mxu0
        %v1311 = vadd.f32 0.0, %v1310
        %v1312 = vpop.f32.mrf.mxu0
        %1313 = vmatprep.mubr.bf16.mxu0 0
        %1314 = vmatmul.mubr.bf16.gmra.mxu0 %v842
        %v1315 = vpop.f32.mrf.mxu0
        %v1316 = vadd.f32 0.0, %v1315
        %v1317 = vpop.f32.mrf.mxu0
        %v1318 = vpop.f32.mrf.mxu0
        %v1319 = vadd.f32 0.0, %v1318
        %v1320 = vpop.f32.mrf.mxu0
        %1321 = vmatprep.mubr.bf16.mxu0 0
        %1322 = vmatmul.mubr.bf16.gmra.mxu0 %v843
        %v1323 = vpop.f32.mrf.mxu0
        %v1324 = vadd.f32 0.0, %v1323
        %v1325 = vpop.f32.mrf.mxu0
        %v1326 = vpop.f32.mrf.mxu0
        %v1327 = vadd.f32 0.0, %v1326
        %v1328 = vpop.f32.mrf.mxu0
        %1329 = vmatprep.mubr.bf16.mxu0 0
        %1330 = vmatmul.mubr.bf16.gmra.mxu0 %v844
        %v1331 = vpop.f32.mrf.mxu0
        %v1332 = vadd.f32 0.0, %v1331
        %v1333 = vpop.f32.mrf.mxu0
        %v1334 = vpop.f32.mrf.mxu0
        %v1335 = vadd.f32 0.0, %v1334
        %v1336 = vpop.f32.mrf.mxu0
        %1337 = vmatprep.mubr.bf16.mxu0 0
        %1338 = vmatmul.mubr.bf16.gmra.mxu0 %v845
        %v1339 = vpop.f32.mrf.mxu0
        %v1340 = vadd.f32 0.0, %v1339
        %v1341 = vpop.f32.mrf.mxu0
        %v1342 = vpop.f32.mrf.mxu0
        %v1343 = vadd.f32 0.0, %v1342
        %v1344 = vpop.f32.mrf.mxu0
        %1345 = vmatprep.mubr.bf16.mxu0 0
        %1346 = vmatmul.mubr.bf16.gmra.mxu0 %v846
        %v1347 = vpop.f32.mrf.mxu0
        %v1348 = vadd.f32 0.0, %v1347
        %v1349 = vpop.f32.mrf.mxu0
        %v1350 = vpop.f32.mrf.mxu0
        %v1351 = vadd.f32 0.0, %v1350
        %v1352 = vpop.f32.mrf.mxu0
        %1353 = vmatprep.mubr.bf16.mxu0 0
        %1354 = vmatmul.mubr.bf16.gmra.mxu0 %v847
        %v1355 = vpop.f32.mrf.mxu0
        %v1356 = vadd.f32 0.0, %v1355
        %v1357 = vpop.f32.mrf.mxu0
        %v1358 = vpop.f32.mrf.mxu0
        %v1359 = vadd.f32 0.0, %v1358
        %v1360 = vpop.f32.mrf.mxu0
        %1361 = vdwg.mxu0
        %v1362 = vld [vmem:[#allocation7] sm:$0x7]
        %v1364 = vlaneseq
        %v1365 = vshrl.u32 %v1364, 7
        %v1366 = vsub.s32 0, %v1365
        %v1367 = vrot.slane %v1362, %v1366
        %v1368 = vlaneseq
        %v1369 = vshrl.u32 %v1368, 7
        %v1370 = vsub.s32 1, %v1369
        %v1371 = vrot.slane %v1362, %v1370
        %v1372 = vlaneseq
        %v1373 = vshrl.u32 %v1372, 7
        %v1374 = vsub.s32 2, %v1373
        %v1375 = vrot.slane %v1362, %v1374
        %v1379 = vmul.f32 %v1043, %v1367
        %v1380 = vmul.f32 %v1045, %v1371
        %v1381 = vmul.f32 %v1236, %v1375
        %v1382 = vmul.f32 %v1047, %v1367
        %v1383 = vmul.f32 %v1049, %v1371
        %v1384 = vmul.f32 %v1239, %v1375
        %v1385 = vmul.f32 %v1053, %v1367
        %v1386 = vmul.f32 %v1055, %v1371
        %v1387 = vmul.f32 %v1244, %v1375
        %v1388 = vmul.f32 %v1057, %v1367
        %v1389 = vmul.f32 %v1059, %v1371
        %v1390 = vmul.f32 %v1247, %v1375
        %v1391 = vmul.f32 %v1063, %v1367
        %v1392 = vmul.f32 %v1065, %v1371
        %v1393 = vmul.f32 %v1252, %v1375
        %v1394 = vmul.f32 %v1067, %v1367
        %v1395 = vmul.f32 %v1069, %v1371
        %v1396 = vmul.f32 %v1255, %v1375
        %v1397 = vmul.f32 %v1073, %v1367
        %v1398 = vmul.f32 %v1075, %v1371
        %v1399 = vmul.f32 %v1260, %v1375
        %v1400 = vmul.f32 %v1077, %v1367
        %v1401 = vmul.f32 %v1079, %v1371
        %v1402 = vmul.f32 %v1263, %v1375
        %v1403 = vmul.f32 %v1083, %v1367
        %v1404 = vmul.f32 %v1085, %v1371
        %v1405 = vmul.f32 %v1268, %v1375
        %v1406 = vmul.f32 %v1087, %v1367
        %v1407 = vmul.f32 %v1089, %v1371
        %v1408 = vmul.f32 %v1271, %v1375
        %v1409 = vmul.f32 %v1093, %v1367
        %v1410 = vmul.f32 %v1095, %v1371
        %v1411 = vmul.f32 %v1276, %v1375
        %v1412 = vmul.f32 %v1097, %v1367
        %v1413 = vmul.f32 %v1099, %v1371
        %v1414 = vmul.f32 %v1279, %v1375
        %v1415 = vmul.f32 %v1103, %v1367
        %v1416 = vmul.f32 %v1105, %v1371
        %v1417 = vmul.f32 %v1284, %v1375
        %v1418 = vmul.f32 %v1107, %v1367
        %v1419 = vmul.f32 %v1109, %v1371
        %v1420 = vmul.f32 %v1287, %v1375
        %v1421 = vmul.f32 %v1113, %v1367
        %v1422 = vmul.f32 %v1115, %v1371
        %v1423 = vmul.f32 %v1292, %v1375
        %v1424 = vmul.f32 %v1117, %v1367
        %v1425 = vmul.f32 %v1119, %v1371
        %v1426 = vmul.f32 %v1295, %v1375
        %v1427 = vmul.f32 %v1123, %v1367
        %v1428 = vmul.f32 %v1125, %v1371
        %v1429 = vmul.f32 %v1300, %v1375
        %v1430 = vmul.f32 %v1127, %v1367
        %v1431 = vmul.f32 %v1129, %v1371
        %v1432 = vmul.f32 %v1303, %v1375
        %v1433 = vmul.f32 %v1133, %v1367
        %v1434 = vmul.f32 %v1135, %v1371
        %v1435 = vmul.f32 %v1308, %v1375
        %v1436 = vmul.f32 %v1137, %v1367
        %v1437 = vmul.f32 %v1139, %v1371
        %v1438 = vmul.f32 %v1311, %v1375
        %v1439 = vmul.f32 %v1143, %v1367
        %v1440 = vmul.f32 %v1145, %v1371
        %v1441 = vmul.f32 %v1316, %v1375
        %v1442 = vmul.f32 %v1147, %v1367
        %v1443 = vmul.f32 %v1149, %v1371
        %v1444 = vmul.f32 %v1319, %v1375
        %v1445 = vmul.f32 %v1153, %v1367
        %v1446 = vmul.f32 %v1155, %v1371
        %v1447 = vmul.f32 %v1324, %v1375
        %v1448 = vmul.f32 %v1157, %v1367
        %v1449 = vmul.f32 %v1159, %v1371
        %v1450 = vmul.f32 %v1327, %v1375
        %v1451 = vmul.f32 %v1163, %v1367
        %v1452 = vmul.f32 %v1165, %v1371
        %v1453 = vmul.f32 %v1332, %v1375
        %v1454 = vmul.f32 %v1167, %v1367
        %v1455 = vmul.f32 %v1169, %v1371
        %v1456 = vmul.f32 %v1335, %v1375
        %v1457 = vmul.f32 %v1173, %v1367
        %v1458 = vmul.f32 %v1175, %v1371
        %v1459 = vmul.f32 %v1340, %v1375
        %v1460 = vmul.f32 %v1177, %v1367
        %v1461 = vmul.f32 %v1179, %v1371
        %v1462 = vmul.f32 %v1343, %v1375
        %v1463 = vmul.f32 %v1183, %v1367
        %v1464 = vmul.f32 %v1185, %v1371
        %v1465 = vmul.f32 %v1348, %v1375
        %v1466 = vmul.f32 %v1187, %v1367
        %v1467 = vmul.f32 %v1189, %v1371
        %v1468 = vmul.f32 %v1351, %v1375
        %v1469 = vmul.f32 %v1193, %v1367
        %v1470 = vmul.f32 %v1195, %v1371
        %v1471 = vmul.f32 %v1356, %v1375
        %v1472 = vmul.f32 %v1197, %v1367
        %v1473 = vmul.f32 %v1199, %v1371
        %v1474 = vmul.f32 %v1359, %v1375
        %v1475 = vld [vmem:[#allocation8] sm:$0x7]
        %v1477 = vlaneseq
        %v1478 = vshrl.u32 %v1477, 7
        %v1479 = vsub.s32 0, %v1478
        %v1480 = vrot.slane %v1475, %v1479
        %v1481 = vlaneseq
        %v1482 = vshrl.u32 %v1481, 7
        %v1483 = vsub.s32 1, %v1482
        %v1484 = vrot.slane %v1475, %v1483
        %v1485 = vlaneseq
        %v1486 = vshrl.u32 %v1485, 7
        %v1487 = vsub.s32 2, %v1486
        %v1488 = vrot.slane %v1475, %v1487
        %v1492 = vadd.f32 %v1379, %v1480
        %v1493 = vadd.f32 %v1380, %v1484
        %v1494 = vadd.f32 %v1381, %v1488
        %v1495 = vadd.f32 %v1382, %v1480
        %v1496 = vadd.f32 %v1383, %v1484
        %v1497 = vadd.f32 %v1384, %v1488
        %v1498 = vadd.f32 %v1385, %v1480
        %v1499 = vadd.f32 %v1386, %v1484
        %v1500 = vadd.f32 %v1387, %v1488
        %v1501 = vadd.f32 %v1388, %v1480
        %v1502 = vadd.f32 %v1389, %v1484
        %v1503 = vadd.f32 %v1390, %v1488
        %v1504 = vadd.f32 %v1391, %v1480
        %v1505 = vadd.f32 %v1392, %v1484
        %v1506 = vadd.f32 %v1393, %v1488
        %v1507 = vadd.f32 %v1394, %v1480
        %v1508 = vadd.f32 %v1395, %v1484
        %v1509 = vadd.f32 %v1396, %v1488
        %v1510 = vadd.f32 %v1397, %v1480
        %v1511 = vadd.f32 %v1398, %v1484
        %v1512 = vadd.f32 %v1399, %v1488
        %v1513 = vadd.f32 %v1400, %v1480
        %v1514 = vadd.f32 %v1401, %v1484
        %v1515 = vadd.f32 %v1402, %v1488
        %v1516 = vadd.f32 %v1403, %v1480
        %v1517 = vadd.f32 %v1404, %v1484
        %v1518 = vadd.f32 %v1405, %v1488
        %v1519 = vadd.f32 %v1406, %v1480
        %v1520 = vadd.f32 %v1407, %v1484
        %v1521 = vadd.f32 %v1408, %v1488
        %v1522 = vadd.f32 %v1409, %v1480
        %v1523 = vadd.f32 %v1410, %v1484
        %v1524 = vadd.f32 %v1411, %v1488
        %v1525 = vadd.f32 %v1412, %v1480
        %v1526 = vadd.f32 %v1413, %v1484
        %v1527 = vadd.f32 %v1414, %v1488
        %v1528 = vadd.f32 %v1415, %v1480
        %v1529 = vadd.f32 %v1416, %v1484
        %v1530 = vadd.f32 %v1417, %v1488
        %v1531 = vadd.f32 %v1418, %v1480
        %v1532 = vadd.f32 %v1419, %v1484
        %v1533 = vadd.f32 %v1420, %v1488
        %v1534 = vadd.f32 %v1421, %v1480
        %v1535 = vadd.f32 %v1422, %v1484
        %v1536 = vadd.f32 %v1423, %v1488
        %v1537 = vadd.f32 %v1424, %v1480
        %v1538 = vadd.f32 %v1425, %v1484
        %v1539 = vadd.f32 %v1426, %v1488
        %v1540 = vadd.f32 %v1427, %v1480
        %v1541 = vadd.f32 %v1428, %v1484
        %v1542 = vadd.f32 %v1429, %v1488
        %v1543 = vadd.f32 %v1430, %v1480
        %v1544 = vadd.f32 %v1431, %v1484
        %v1545 = vadd.f32 %v1432, %v1488
        %v1546 = vadd.f32 %v1433, %v1480
        %v1547 = vadd.f32 %v1434, %v1484
        %v1548 = vadd.f32 %v1435, %v1488
        %v1549 = vadd.f32 %v1436, %v1480
        %v1550 = vadd.f32 %v1437, %v1484
        %v1551 = vadd.f32 %v1438, %v1488
        %v1552 = vadd.f32 %v1439, %v1480
        %v1553 = vadd.f32 %v1440, %v1484
        %v1554 = vadd.f32 %v1441, %v1488
        %v1555 = vadd.f32 %v1442, %v1480
        %v1556 = vadd.f32 %v1443, %v1484
        %v1557 = vadd.f32 %v1444, %v1488
        %v1558 = vadd.f32 %v1445, %v1480
        %v1559 = vadd.f32 %v1446, %v1484
        %v1560 = vadd.f32 %v1447, %v1488
        %v1561 = vadd.f32 %v1448, %v1480
        %v1562 = vadd.f32 %v1449, %v1484
        %v1563 = vadd.f32 %v1450, %v1488
        %v1564 = vadd.f32 %v1451, %v1480
        %v1565 = vadd.f32 %v1452, %v1484
        %v1566 = vadd.f32 %v1453, %v1488
        %v1567 = vadd.f32 %v1454, %v1480
        %v1568 = vadd.f32 %v1455, %v1484
        %v1569 = vadd.f32 %v1456, %v1488
        %v1570 = vadd.f32 %v1457, %v1480
        %v1571 = vadd.f32 %v1458, %v1484
        %v1572 = vadd.f32 %v1459, %v1488
        %v1573 = vadd.f32 %v1460, %v1480
        %v1574 = vadd.f32 %v1461, %v1484
        %v1575 = vadd.f32 %v1462, %v1488
        %v1576 = vadd.f32 %v1463, %v1480
        %v1577 = vadd.f32 %v1464, %v1484
        %v1578 = vadd.f32 %v1465, %v1488
        %v1579 = vadd.f32 %v1466, %v1480
        %v1580 = vadd.f32 %v1467, %v1484
        %v1581 = vadd.f32 %v1468, %v1488
        %v1582 = vadd.f32 %v1469, %v1480
        %v1583 = vadd.f32 %v1470, %v1484
        %v1584 = vadd.f32 %v1471, %v1488
        %v1585 = vadd.f32 %v1472, %v1480
        %v1586 = vadd.f32 %v1473, %v1484
        %v1587 = vadd.f32 %v1474, %v1488
        %v1588 = vmul.f32 %v1492, 0.5
        %v1589 = vmul.f32 %v1493, 0.5
        %v1590 = vmul.f32 %v1494, 0.5
        %v1591 = vmul.f32 %v1495, 0.5
        %v1592 = vmul.f32 %v1496, 0.5
        %v1593 = vmul.f32 %v1497, 0.5
        %v1594 = vmul.f32 %v1498, 0.5
        %v1595 = vmul.f32 %v1499, 0.5
        %v1596 = vmul.f32 %v1500, 0.5
        %v1597 = vmul.f32 %v1501, 0.5
        %v1598 = vmul.f32 %v1502, 0.5
        %v1599 = vmul.f32 %v1503, 0.5
        %v1600 = vmul.f32 %v1504, 0.5
        %v1601 = vmul.f32 %v1505, 0.5
        %v1602 = vmul.f32 %v1506, 0.5
        %v1603 = vmul.f32 %v1507, 0.5
        %v1604 = vmul.f32 %v1508, 0.5
        %v1605 = vmul.f32 %v1509, 0.5
        %v1606 = vmul.f32 %v1510, 0.5
        %v1607 = vmul.f32 %v1511, 0.5
        %v1608 = vmul.f32 %v1512, 0.5
        %v1609 = vmul.f32 %v1513, 0.5
        %v1610 = vmul.f32 %v1514, 0.5
        %v1611 = vmul.f32 %v1515, 0.5
        %v1612 = vadd.f32 %v1588, 0.0
        %v1613 = vadd.f32 %v1589, 0.0
        %v1614 = vadd.f32 %v1590, 0.0
        %v1615 = vadd.f32 %v1591, 0.0
        %v1616 = vadd.f32 %v1592, 0.0
        %v1617 = vadd.f32 %v1593, 0.0
        %v1618 = vadd.f32 %v1594, 0.0
        %v1619 = vadd.f32 %v1595, 0.0
        %v1620 = vadd.f32 %v1596, 0.0
        %v1621 = vadd.f32 %v1597, 0.0
        %v1622 = vadd.f32 %v1598, 0.0
        %v1623 = vadd.f32 %v1599, 0.0
        %v1624 = vadd.f32 %v1600, 0.0
        %v1625 = vadd.f32 %v1601, 0.0
        %v1626 = vadd.f32 %v1602, 0.0
        %v1627 = vadd.f32 %v1603, 0.0
        %v1628 = vadd.f32 %v1604, 0.0
        %v1629 = vadd.f32 %v1605, 0.0
        %v1630 = vadd.f32 %v1606, 0.0
        %v1631 = vadd.f32 %v1607, 0.0
        %v1632 = vadd.f32 %v1608, 0.0
        %v1633 = vadd.f32 %v1609, 0.0
        %v1634 = vadd.f32 %v1610, 0.0
        %v1635 = vadd.f32 %v1611, 0.0
        %vm1636 = vcmp.ge.f32.partialorder %v1612, 1.0
        %vm1637 = vcmp.ge.f32.partialorder %v1613, 1.0
        %vm1638 = vcmp.ge.f32.partialorder %v1614, 1.0
        %vm1639 = vcmp.ge.f32.partialorder %v1615, 1.0
        %vm1640 = vcmp.ge.f32.partialorder %v1616, 1.0
        %vm1641 = vcmp.ge.f32.partialorder %v1617, 1.0
        %vm1642 = vcmp.ge.f32.partialorder %v1618, 1.0
        %vm1643 = vcmp.ge.f32.partialorder %v1619, 1.0
        %vm1644 = vcmp.ge.f32.partialorder %v1620, 1.0
        %vm1645 = vcmp.ge.f32.partialorder %v1621, 1.0
        %vm1646 = vcmp.ge.f32.partialorder %v1622, 1.0
        %vm1647 = vcmp.ge.f32.partialorder %v1623, 1.0
        %vm1648 = vcmp.ge.f32.partialorder %v1624, 1.0
        %vm1649 = vcmp.ge.f32.partialorder %v1625, 1.0
        %vm1650 = vcmp.ge.f32.partialorder %v1626, 1.0
        %vm1651 = vcmp.ge.f32.partialorder %v1627, 1.0
        %vm1652 = vcmp.ge.f32.partialorder %v1628, 1.0
        %vm1653 = vcmp.ge.f32.partialorder %v1629, 1.0
        %vm1654 = vcmp.ge.f32.partialorder %v1630, 1.0
        %vm1655 = vcmp.ge.f32.partialorder %v1631, 1.0
        %vm1656 = vcmp.ge.f32.partialorder %v1632, 1.0
        %vm1657 = vcmp.ge.f32.partialorder %v1633, 1.0
        %vm1658 = vcmp.ge.f32.partialorder %v1634, 1.0
        %vm1659 = vcmp.ge.f32.partialorder %v1635, 1.0
        %v1660 = vsel %vm1636, 1, 0
        %v1661 = vsel %vm1637, 1, 0
        %v1662 = vsel %vm1638, 1, 0
        %v1663 = vsel %vm1639, 1, 0
        %v1664 = vsel %vm1640, 1, 0
        %v1665 = vsel %vm1641, 1, 0
        %v1666 = vsel %vm1642, 1, 0
        %v1667 = vsel %vm1643, 1, 0
        %v1668 = vsel %vm1644, 1, 0
        %v1669 = vsel %vm1645, 1, 0
        %v1670 = vsel %vm1646, 1, 0
        %v1671 = vsel %vm1647, 1, 0
        %v1672 = vsel %vm1648, 1, 0
        %v1673 = vsel %vm1649, 1, 0
        %v1674 = vsel %vm1650, 1, 0
        %v1675 = vsel %vm1651, 1, 0
        %v1676 = vsel %vm1652, 1, 0
        %v1677 = vsel %vm1653, 1, 0
        %v1678 = vsel %vm1654, 1, 0
        %v1679 = vsel %vm1655, 1, 0
        %v1680 = vsel %vm1656, 1, 0
        %v1681 = vsel %vm1657, 1, 0
        %v1682 = vsel %vm1658, 1, 0
        %v1683 = vsel %vm1659, 1, 0
        %v1684 = vcvt.s32.f32 %v1660
        %v1685 = vcvt.s32.f32 %v1661
        %v1686 = vcvt.s32.f32 %v1662
        %v1687 = vcvt.s32.f32 %v1663
        %v1688 = vcvt.s32.f32 %v1664
        %v1689 = vcvt.s32.f32 %v1665
        %v1690 = vcvt.s32.f32 %v1666
        %v1691 = vcvt.s32.f32 %v1667
        %v1692 = vcvt.s32.f32 %v1668
        %v1693 = vcvt.s32.f32 %v1669
        %v1694 = vcvt.s32.f32 %v1670
        %v1695 = vcvt.s32.f32 %v1671
        %v1696 = vcvt.s32.f32 %v1672
        %v1697 = vcvt.s32.f32 %v1673
        %v1698 = vcvt.s32.f32 %v1674
        %v1699 = vcvt.s32.f32 %v1675
        %v1700 = vcvt.s32.f32 %v1676
        %v1701 = vcvt.s32.f32 %v1677
        %v1702 = vcvt.s32.f32 %v1678
        %v1703 = vcvt.s32.f32 %v1679
        %v1704 = vcvt.s32.f32 %v1680
        %v1705 = vcvt.s32.f32 %v1681
        %v1706 = vcvt.s32.f32 %v1682
        %v1707 = vcvt.s32.f32 %v1683
        %v1708 = vsub.f32 1.0, %v1684
        %v1709 = vsub.f32 1.0, %v1685
        %v1710 = vsub.f32 1.0, %v1686
        %v1711 = vsub.f32 1.0, %v1687
        %v1712 = vsub.f32 1.0, %v1688
        %v1713 = vsub.f32 1.0, %v1689
        %v1714 = vsub.f32 1.0, %v1690
        %v1715 = vsub.f32 1.0, %v1691
        %v1716 = vsub.f32 1.0, %v1692
        %v1717 = vsub.f32 1.0, %v1693
        %v1718 = vsub.f32 1.0, %v1694
        %v1719 = vsub.f32 1.0, %v1695
        %v1720 = vsub.f32 1.0, %v1696
        %v1721 = vsub.f32 1.0, %v1697
        %v1722 = vsub.f32 1.0, %v1698
        %v1723 = vsub.f32 1.0, %v1699
        %v1724 = vsub.f32 1.0, %v1700
        %v1725 = vsub.f32 1.0, %v1701
        %v1726 = vsub.f32 1.0, %v1702
        %v1727 = vsub.f32 1.0, %v1703
        %v1728 = vsub.f32 1.0, %v1704
        %v1729 = vsub.f32 1.0, %v1705
        %v1730 = vsub.f32 1.0, %v1706
        %v1731 = vsub.f32 1.0, %v1707
        %v1732 = vmul.f32 %v1612, %v1708
        %v1733 = vmul.f32 %v1613, %v1709
        %v1734 = vmul.f32 %v1614, %v1710
        %v1735 = vmul.f32 %v1615, %v1711
        %v1736 = vmul.f32 %v1616, %v1712
        %v1737 = vmul.f32 %v1617, %v1713
        %v1738 = vmul.f32 %v1618, %v1714
        %v1739 = vmul.f32 %v1619, %v1715
        %v1740 = vmul.f32 %v1620, %v1716
        %v1741 = vmul.f32 %v1621, %v1717
        %v1742 = vmul.f32 %v1622, %v1718
        %v1743 = vmul.f32 %v1623, %v1719
        %v1744 = vmul.f32 %v1624, %v1720
        %v1745 = vmul.f32 %v1625, %v1721
        %v1746 = vmul.f32 %v1626, %v1722
        %v1747 = vmul.f32 %v1627, %v1723
        %v1748 = vmul.f32 %v1628, %v1724
        %v1749 = vmul.f32 %v1629, %v1725
        %v1750 = vmul.f32 %v1630, %v1726
        %v1751 = vmul.f32 %v1631, %v1727
        %v1752 = vmul.f32 %v1632, %v1728
        %v1753 = vmul.f32 %v1633, %v1729
        %v1754 = vmul.f32 %v1634, %v1730
        %v1755 = vmul.f32 %v1635, %v1731
        %v1756 = vmul.f32 %v1685, %v1686
        %v1757 = vmul.f32 %v1688, %v1689
        %v1758 = vmul.f32 %v1691, %v1692
        %v1759 = vmul.f32 %v1694, %v1695
        %v1760 = vmul.f32 %v1697, %v1698
        %v1761 = vmul.f32 %v1700, %v1701
        %v1762 = vmul.f32 %v1703, %v1704
        %v1763 = vmul.f32 %v1706, %v1707
        %v1764 = vadd.f32 %v1756, %v1757
        %v1765 = vadd.f32 %v1764, %v1758
        %v1766 = vadd.f32 %v1765, %v1759
        %v1767 = vadd.f32 %v1766, %v1760
        %v1768 = vadd.f32 %v1767, %v1761
        %v1769 = vadd.f32 %v1768, %v1762
        %v1770 = vadd.f32 %v1769, %v1763
        %v1771 = vrot.slane %v1770, 4
        %v1772 = vadd.f32 %v1770, %v1771
        %v1773 = vrot.slane %v1772, 2
        %v1774 = vadd.f32 %v1772, %v1773
        %v1775 = vrot.slane %v1774, 1
        %v1776 = vadd.f32 %v1774, %v1775
        %v1777 = vmul.f32 %v1776, 0.5
        %v1778 = vadd.f32 %v1777, 0.0
        %vm1779 = vcmp.ge.f32.partialorder %v1778, 0.5
        %v1780 = vsel %vm1779, 1, 0
        %v1781 = vcvt.s32.f32 %v1780
        %v1782 = vsub.f32 1.0, %v1781
        %v1783 = vmul.f32 %v1778, %v1782
        %v1784 = vmul.f32 %v1684, %v1781
        %v1785 = vmul.f32 %v1687, %v1781
        %v1786 = vmul.f32 %v1690, %v1781
        %v1787 = vmul.f32 %v1693, %v1781
        %v1788 = vmul.f32 %v1696, %v1781
        %v1789 = vmul.f32 %v1699, %v1781
        %v1790 = vmul.f32 %v1702, %v1781
        %v1791 = vmul.f32 %v1705, %v1781
        %v1792 = vmul.f32 %v1784, 0.5
        %v1793 = vmul.f32 %v1785, 0.5
        %v1794 = vmul.f32 %v1786, 0.5
        %v1795 = vmul.f32 %v1787, 0.5
        %v1796 = vmul.f32 %v1788, 0.5
        %v1797 = vmul.f32 %v1789, 0.5
        %v1798 = vmul.f32 %v1790, 0.5
        %v1799 = vmul.f32 %v1791, 0.5
        %v1800 = vadd.f32 %v1792, 0.0
        %v1801 = vadd.f32 %v1793, 0.0
        %v1802 = vadd.f32 %v1794, 0.0
        %v1803 = vadd.f32 %v1795, 0.0
        %v1804 = vadd.f32 %v1796, 0.0
        %v1805 = vadd.f32 %v1797, 0.0
        %v1806 = vadd.f32 %v1798, 0.0
        %v1807 = vadd.f32 %v1799, 0.0
        %vm1808 = vcmp.ge.f32.partialorder %v1800, 0.5
        %vm1809 = vcmp.ge.f32.partialorder %v1801, 0.5
        %vm1810 = vcmp.ge.f32.partialorder %v1802, 0.5
        %vm1811 = vcmp.ge.f32.partialorder %v1803, 0.5
        %vm1812 = vcmp.ge.f32.partialorder %v1804, 0.5
        %vm1813 = vcmp.ge.f32.partialorder %v1805, 0.5
        %vm1814 = vcmp.ge.f32.partialorder %v1806, 0.5
        %vm1815 = vcmp.ge.f32.partialorder %v1807, 0.5
        %v1816 = vsel %vm1808, 1, 0
        %v1817 = vsel %vm1809, 1, 0
        %v1818 = vsel %vm1810, 1, 0
        %v1819 = vsel %vm1811, 1, 0
        %v1820 = vsel %vm1812, 1, 0
        %v1821 = vsel %vm1813, 1, 0
        %v1822 = vsel %vm1814, 1, 0
        %v1823 = vsel %vm1815, 1, 0
        %v1824 = vcvt.s32.f32 %v1816
        %v1825 = vcvt.s32.f32 %v1817
        %v1826 = vcvt.s32.f32 %v1818
        %v1827 = vcvt.s32.f32 %v1819
        %v1828 = vcvt.s32.f32 %v1820
        %v1829 = vcvt.s32.f32 %v1821
        %v1830 = vcvt.s32.f32 %v1822
        %v1831 = vcvt.s32.f32 %v1823
        %v1832 = vsub.f32 1.0, %v1824
        %v1833 = vsub.f32 1.0, %v1825
        %v1834 = vsub.f32 1.0, %v1826
        %v1835 = vsub.f32 1.0, %v1827
        %v1836 = vsub.f32 1.0, %v1828
        %v1837 = vsub.f32 1.0, %v1829
        %v1838 = vsub.f32 1.0, %v1830
        %v1839 = vsub.f32 1.0, %v1831
        %v1840 = vmul.f32 %v1800, %v1832
        %v1841 = vmul.f32 %v1801, %v1833
        %v1842 = vmul.f32 %v1802, %v1834
        %v1843 = vmul.f32 %v1803, %v1835
        %v1844 = vmul.f32 %v1804, %v1836
        %v1845 = vmul.f32 %v1805, %v1837
        %v1846 = vmul.f32 %v1806, %v1838
        %v1847 = vmul.f32 %v1807, %v1839
        %v1848 = vsub.f32 %v1516, %v1732
        %v1849 = vsub.f32 %v1517, %v1733
        %v1850 = vsub.f32 %v1518, %v1734
        %v1851 = vsub.f32 %v1519, %v1735
        %v1852 = vsub.f32 %v1520, %v1736
        %v1853 = vsub.f32 %v1521, %v1737
        %v1854 = vsub.f32 %v1522, %v1738
        %v1855 = vsub.f32 %v1523, %v1739
        %v1856 = vsub.f32 %v1524, %v1740
        %v1857 = vsub.f32 %v1525, %v1741
        %v1858 = vsub.f32 %v1526, %v1742
        %v1859 = vsub.f32 %v1527, %v1743
        %v1860 = vsub.f32 %v1528, %v1744
        %v1861 = vsub.f32 %v1529, %v1745
        %v1862 = vsub.f32 %v1530, %v1746
        %v1863 = vsub.f32 %v1531, %v1747
        %v1864 = vsub.f32 %v1532, %v1748
        %v1865 = vsub.f32 %v1533, %v1749
        %v1866 = vsub.f32 %v1534, %v1750
        %v1867 = vsub.f32 %v1535, %v1751
        %v1868 = vsub.f32 %v1536, %v1752
        %v1869 = vsub.f32 %v1537, %v1753
        %v1870 = vsub.f32 %v1538, %v1754
        %v1871 = vsub.f32 %v1539, %v1755
        %v1872 = vmul.f32 %v1848, 0.5
        %v1873 = vmul.f32 %v1849, 0.5
        %v1874 = vmul.f32 %v1850, 0.5
        %v1875 = vmul.f32 %v1851, 0.5
        %v1876 = vmul.f32 %v1852, 0.5
        %v1877 = vmul.f32 %v1853, 0.5
        %v1878 = vmul.f32 %v1854, 0.5
        %v1879 = vmul.f32 %v1855, 0.5
        %v1880 = vmul.f32 %v1856, 0.5
        %v1881 = vmul.f32 %v1857, 0.5
        %v1882 = vmul.f32 %v1858, 0.5
        %v1883 = vmul.f32 %v1859, 0.5
        %v1884 = vmul.f32 %v1860, 0.5
        %v1885 = vmul.f32 %v1861, 0.5
        %v1886 = vmul.f32 %v1862, 0.5
        %v1887 = vmul.f32 %v1863, 0.5
        %v1888 = vmul.f32 %v1864, 0.5
        %v1889 = vmul.f32 %v1865, 0.5
        %v1890 = vmul.f32 %v1866, 0.5
        %v1891 = vmul.f32 %v1867, 0.5
        %v1892 = vmul.f32 %v1868, 0.5
        %v1893 = vmul.f32 %v1869, 0.5
        %v1894 = vmul.f32 %v1870, 0.5
        %v1895 = vmul.f32 %v1871, 0.5
        %v1896 = vadd.f32 %v1732, %v1872
        %v1897 = vadd.f32 %v1733, %v1873
        %v1898 = vadd.f32 %v1734, %v1874
        %v1899 = vadd.f32 %v1735, %v1875
        %v1900 = vadd.f32 %v1736, %v1876
        %v1901 = vadd.f32 %v1737, %v1877
        %v1902 = vadd.f32 %v1738, %v1878
        %v1903 = vadd.f32 %v1739, %v1879
        %v1904 = vadd.f32 %v1740, %v1880
        %v1905 = vadd.f32 %v1741, %v1881
        %v1906 = vadd.f32 %v1742, %v1882
        %v1907 = vadd.f32 %v1743, %v1883
        %v1908 = vadd.f32 %v1744, %v1884
        %v1909 = vadd.f32 %v1745, %v1885
        %v1910 = vadd.f32 %v1746, %v1886
        %v1911 = vadd.f32 %v1747, %v1887
        %v1912 = vadd.f32 %v1748, %v1888
        %v1913 = vadd.f32 %v1749, %v1889
        %v1914 = vadd.f32 %v1750, %v1890
        %v1915 = vadd.f32 %v1751, %v1891
        %v1916 = vadd.f32 %v1752, %v1892
        %v1917 = vadd.f32 %v1753, %v1893
        %v1918 = vadd.f32 %v1754, %v1894
        %v1919 = vadd.f32 %v1755, %v1895
        %vm1920 = vcmp.ge.f32.partialorder %v1896, 1.0
        %vm1921 = vcmp.ge.f32.partialorder %v1897, 1.0
        %vm1922 = vcmp.ge.f32.partialorder %v1898, 1.0
        %vm1923 = vcmp.ge.f32.partialorder %v1899, 1.0
        %vm1924 = vcmp.ge.f32.partialorder %v1900, 1.0
        %vm1925 = vcmp.ge.f32.partialorder %v1901, 1.0
        %vm1926 = vcmp.ge.f32.partialorder %v1902, 1.0
        %vm1927 = vcmp.ge.f32.partialorder %v1903, 1.0
        %vm1928 = vcmp.ge.f32.partialorder %v1904, 1.0
        %vm1929 = vcmp.ge.f32.partialorder %v1905, 1.0
        %vm1930 = vcmp.ge.f32.partialorder %v1906, 1.0
        %vm1931 = vcmp.ge.f32.partialorder %v1907, 1.0
        %vm1932 = vcmp.ge.f32.partialorder %v1908, 1.0
        %vm1933 = vcmp.ge.f32.partialorder %v1909, 1.0
        %vm1934 = vcmp.ge.f32.partialorder %v1910, 1.0
        %vm1935 = vcmp.ge.f32.partialorder %v1911, 1.0
        %vm1936 = vcmp.ge.f32.partialorder %v1912, 1.0
        %vm1937 = vcmp.ge.f32.partialorder %v1913, 1.0
        %vm1938 = vcmp.ge.f32.partialorder %v1914, 1.0
        %vm1939 = vcmp.ge.f32.partialorder %v1915, 1.0
        %vm1940 = vcmp.ge.f32.partialorder %v1916, 1.0
        %vm1941 = vcmp.ge.f32.partialorder %v1917, 1.0
        %vm1942 = vcmp.ge.f32.partialorder %v1918, 1.0
        %vm1943 = vcmp.ge.f32.partialorder %v1919, 1.0
        %v1944 = vsel %vm1920, 1, 0
        %v1945 = vsel %vm1921, 1, 0
        %v1946 = vsel %vm1922, 1, 0
        %v1947 = vsel %vm1923, 1, 0
        %v1948 = vsel %vm1924, 1, 0
        %v1949 = vsel %vm1925, 1, 0
        %v1950 = vsel %vm1926, 1, 0
        %v1951 = vsel %vm1927, 1, 0
        %v1952 = vsel %vm1928, 1, 0
        %v1953 = vsel %vm1929, 1, 0
        %v1954 = vsel %vm1930, 1, 0
        %v1955 = vsel %vm1931, 1, 0
        %v1956 = vsel %vm1932, 1, 0
        %v1957 = vsel %vm1933, 1, 0
        %v1958 = vsel %vm1934, 1, 0
        %v1959 = vsel %vm1935, 1, 0
        %v1960 = vsel %vm1936, 1, 0
        %v1961 = vsel %vm1937, 1, 0
        %v1962 = vsel %vm1938, 1, 0
        %v1963 = vsel %vm1939, 1, 0
        %v1964 = vsel %vm1940, 1, 0
        %v1965 = vsel %vm1941, 1, 0
        %v1966 = vsel %vm1942, 1, 0
        %v1967 = vsel %vm1943, 1, 0
        %v1968 = vcvt.s32.f32 %v1944
        %v1969 = vcvt.s32.f32 %v1945
        %v1970 = vcvt.s32.f32 %v1946
        %v1971 = vcvt.s32.f32 %v1947
        %v1972 = vcvt.s32.f32 %v1948
        %v1973 = vcvt.s32.f32 %v1949
        %v1974 = vcvt.s32.f32 %v1950
        %v1975 = vcvt.s32.f32 %v1951
        %v1976 = vcvt.s32.f32 %v1952
        %v1977 = vcvt.s32.f32 %v1953
        %v1978 = vcvt.s32.f32 %v1954
        %v1979 = vcvt.s32.f32 %v1955
        %v1980 = vcvt.s32.f32 %v1956
        %v1981 = vcvt.s32.f32 %v1957
        %v1982 = vcvt.s32.f32 %v1958
        %v1983 = vcvt.s32.f32 %v1959
        %v1984 = vcvt.s32.f32 %v1960
        %v1985 = vcvt.s32.f32 %v1961
        %v1986 = vcvt.s32.f32 %v1962
        %v1987 = vcvt.s32.f32 %v1963
        %v1988 = vcvt.s32.f32 %v1964
        %v1989 = vcvt.s32.f32 %v1965
        %v1990 = vcvt.s32.f32 %v1966
        %v1991 = vcvt.s32.f32 %v1967
        %v1992 = vsub.f32 1.0, %v1968
        %v1993 = vsub.f32 1.0, %v1969
        %v1994 = vsub.f32 1.0, %v1970
        %v1995 = vsub.f32 1.0, %v1971
        %v1996 = vsub.f32 1.0, %v1972
        %v1997 = vsub.f32 1.0, %v1973
        %v1998 = vsub.f32 1.0, %v1974
        %v1999 = vsub.f32 1.0, %v1975
        %v2000 = vsub.f32 1.0, %v1976
        %v2001 = vsub.f32 1.0, %v1977
        %v2002 = vsub.f32 1.0, %v1978
        %v2003 = vsub.f32 1.0, %v1979
        %v2004 = vsub.f32 1.0, %v1980
        %v2005 = vsub.f32 1.0, %v1981
        %v2006 = vsub.f32 1.0, %v1982
        %v2007 = vsub.f32 1.0, %v1983
        %v2008 = vsub.f32 1.0, %v1984
        %v2009 = vsub.f32 1.0, %v1985
        %v2010 = vsub.f32 1.0, %v1986
        %v2011 = vsub.f32 1.0, %v1987
        %v2012 = vsub.f32 1.0, %v1988
        %v2013 = vsub.f32 1.0, %v1989
        %v2014 = vsub.f32 1.0, %v1990
        %v2015 = vsub.f32 1.0, %v1991
        %v2016 = vmul.f32 %v1896, %v1992
        %v2017 = vmul.f32 %v1897, %v1993
        %v2018 = vmul.f32 %v1898, %v1994
        %v2019 = vmul.f32 %v1899, %v1995
        %v2020 = vmul.f32 %v1900, %v1996
        %v2021 = vmul.f32 %v1901, %v1997
        %v2022 = vmul.f32 %v1902, %v1998
        %v2023 = vmul.f32 %v1903, %v1999
        %v2024 = vmul.f32 %v1904, %v2000
        %v2025 = vmul.f32 %v1905, %v2001
        %v2026 = vmul.f32 %v1906, %v2002
        %v2027 = vmul.f32 %v1907, %v2003
        %v2028 = vmul.f32 %v1908, %v2004
        %v2029 = vmul.f32 %v1909, %v2005
        %v2030 = vmul.f32 %v1910, %v2006
        %v2031 = vmul.f32 %v1911, %v2007
        %v2032 = vmul.f32 %v1912, %v2008
        %v2033 = vmul.f32 %v1913, %v2009
        %v2034 = vmul.f32 %v1914, %v2010
        %v2035 = vmul.f32 %v1915, %v2011
        %v2036 = vmul.f32 %v1916, %v2012
        %v2037 = vmul.f32 %v1917, %v2013
        %v2038 = vmul.f32 %v1918, %v2014
        %v2039 = vmul.f32 %v1919, %v2015
        %v2040 = vmul.f32 %v1969, %v1970
        %v2041 = vmul.f32 %v1972, %v1973
        %v2042 = vmul.f32 %v1975, %v1976
        %v2043 = vmul.f32 %v1978, %v1979
        %v2044 = vmul.f32 %v1981, %v1982
        %v2045 = vmul.f32 %v1984, %v1985
        %v2046 = vmul.f32 %v1987, %v1988
        %v2047 = vmul.f32 %v1990, %v1991
        %v2048 = vadd.f32 %v2040, %v2041
        %v2049 = vadd.f32 %v2048, %v2042
        %v2050 = vadd.f32 %v2049, %v2043
        %v2051 = vadd.f32 %v2050, %v2044
        %v2052 = vadd.f32 %v2051, %v2045
        %v2053 = vadd.f32 %v2052, %v2046
        %v2054 = vadd.f32 %v2053, %v2047
        %v2055 = vrot.slane %v2054, 4
        %v2056 = vadd.f32 %v2054, %v2055
        %v2057 = vrot.slane %v2056, 2
        %v2058 = vadd.f32 %v2056, %v2057
        %v2059 = vrot.slane %v2058, 1
        %v2060 = vadd.f32 %v2058, %v2059
        %v2061 = vsub.f32 %v2060, %v1783
        %v2062 = vmul.f32 %v2061, 0.5
        %v2063 = vadd.f32 %v1783, %v2062
        %vm2064 = vcmp.ge.f32.partialorder %v2063, 0.5
        %v2065 = vsel %vm2064, 1, 0
        %v2066 = vcvt.s32.f32 %v2065
        %v2067 = vsub.f32 1.0, %v2066
        %v2068 = vmul.f32 %v2063, %v2067
        %v2069 = vmul.f32 %v1968, %v2066
        %v2070 = vmul.f32 %v1971, %v2066
        %v2071 = vmul.f32 %v1974, %v2066
        %v2072 = vmul.f32 %v1977, %v2066
        %v2073 = vmul.f32 %v1980, %v2066
        %v2074 = vmul.f32 %v1983, %v2066
        %v2075 = vmul.f32 %v1986, %v2066
        %v2076 = vmul.f32 %v1989, %v2066
        %v2077 = vsub.f32 %v2069, %v1840
        %v2078 = vsub.f32 %v2070, %v1841
        %v2079 = vsub.f32 %v2071, %v1842
        %v2080 = vsub.f32 %v2072, %v1843
        %v2081 = vsub.f32 %v2073, %v1844
        %v2082 = vsub.f32 %v2074, %v1845
        %v2083 = vsub.f32 %v2075, %v1846
        %v2084 = vsub.f32 %v2076, %v1847
        %v2085 = vmul.f32 %v2077, 0.5
        %v2086 = vmul.f32 %v2078, 0.5
        %v2087 = vmul.f32 %v2079, 0.5
        %v2088 = vmul.f32 %v2080, 0.5
        %v2089 = vmul.f32 %v2081, 0.5
        %v2090 = vmul.f32 %v2082, 0.5
        %v2091 = vmul.f32 %v2083, 0.5
        %v2092 = vmul.f32 %v2084, 0.5
        %v2093 = vadd.f32 %v1840, %v2085
        %v2094 = vadd.f32 %v1841, %v2086
        %v2095 = vadd.f32 %v1842, %v2087
        %v2096 = vadd.f32 %v1843, %v2088
        %v2097 = vadd.f32 %v1844, %v2089
        %v2098 = vadd.f32 %v1845, %v2090
        %v2099 = vadd.f32 %v1846, %v2091
        %v2100 = vadd.f32 %v1847, %v2092
        %vm2101 = vcmp.ge.f32.partialorder %v2093, 0.5
        %vm2102 = vcmp.ge.f32.partialorder %v2094, 0.5
        %vm2103 = vcmp.ge.f32.partialorder %v2095, 0.5
        %vm2104 = vcmp.ge.f32.partialorder %v2096, 0.5
        %vm2105 = vcmp.ge.f32.partialorder %v2097, 0.5
        %vm2106 = vcmp.ge.f32.partialorder %v2098, 0.5
        %vm2107 = vcmp.ge.f32.partialorder %v2099, 0.5
        %vm2108 = vcmp.ge.f32.partialorder %v2100, 0.5
        %v2109 = vsel %vm2101, 1, 0
        %v2110 = vsel %vm2102, 1, 0
        %v2111 = vsel %vm2103, 1, 0
        %v2112 = vsel %vm2104, 1, 0
        %v2113 = vsel %vm2105, 1, 0
        %v2114 = vsel %vm2106, 1, 0
        %v2115 = vsel %vm2107, 1, 0
        %v2116 = vsel %vm2108, 1, 0
        %v2117 = vcvt.s32.f32 %v2109
        %v2118 = vcvt.s32.f32 %v2110
        %v2119 = vcvt.s32.f32 %v2111
        %v2120 = vcvt.s32.f32 %v2112
        %v2121 = vcvt.s32.f32 %v2113
        %v2122 = vcvt.s32.f32 %v2114
        %v2123 = vcvt.s32.f32 %v2115
        %v2124 = vcvt.s32.f32 %v2116
        %v2125 = vsub.f32 1.0, %v2117
        %v2126 = vsub.f32 1.0, %v2118
        %v2127 = vsub.f32 1.0, %v2119
        %v2128 = vsub.f32 1.0, %v2120
        %v2129 = vsub.f32 1.0, %v2121
        %v2130 = vsub.f32 1.0, %v2122
        %v2131 = vsub.f32 1.0, %v2123
        %v2132 = vsub.f32 1.0, %v2124
        %v2133 = vmul.f32 %v2093, %v2125
        %v2134 = vmul.f32 %v2094, %v2126
        %v2135 = vmul.f32 %v2095, %v2127
        %v2136 = vmul.f32 %v2096, %v2128
        %v2137 = vmul.f32 %v2097, %v2129
        %v2138 = vmul.f32 %v2098, %v2130
        %v2139 = vmul.f32 %v2099, %v2131
        %v2140 = vmul.f32 %v2100, %v2132
        %v2141 = vsub.f32 %v1540, %v2016
        %v2142 = vsub.f32 %v1541, %v2017
        %v2143 = vsub.f32 %v1542, %v2018
        %v2144 = vsub.f32 %v1543, %v2019
        %v2145 = vsub.f32 %v1544, %v2020
        %v2146 = vsub.f32 %v1545, %v2021
        %v2147 = vsub.f32 %v1546, %v2022
        %v2148 = vsub.f32 %v1547, %v2023
        %v2149 = vsub.f32 %v1548, %v2024
        %v2150 = vsub.f32 %v1549, %v2025
        %v2151 = vsub.f32 %v1550, %v2026
        %v2152 = vsub.f32 %v1551, %v2027
        %v2153 = vsub.f32 %v1552, %v2028
        %v2154 = vsub.f32 %v1553, %v2029
        %v2155 = vsub.f32 %v1554, %v2030
        %v2156 = vsub.f32 %v1555, %v2031
        %v2157 = vsub.f32 %v1556, %v2032
        %v2158 = vsub.f32 %v1557, %v2033
        %v2159 = vsub.f32 %v1558, %v2034
        %v2160 = vsub.f32 %v1559, %v2035
        %v2161 = vsub.f32 %v1560, %v2036
        %v2162 = vsub.f32 %v1561, %v2037
        %v2163 = vsub.f32 %v1562, %v2038
        %v2164 = vsub.f32 %v1563, %v2039
        %v2165 = vmul.f32 %v2141, 0.5
        %v2166 = vmul.f32 %v2142, 0.5
        %v2167 = vmul.f32 %v2143, 0.5
        %v2168 = vmul.f32 %v2144, 0.5
        %v2169 = vmul.f32 %v2145, 0.5
        %v2170 = vmul.f32 %v2146, 0.5
        %v2171 = vmul.f32 %v2147, 0.5
        %v2172 = vmul.f32 %v2148, 0.5
        %v2173 = vmul.f32 %v2149, 0.5
        %v2174 = vmul.f32 %v2150, 0.5
        %v2175 = vmul.f32 %v2151, 0.5
        %v2176 = vmul.f32 %v2152, 0.5
        %v2177 = vmul.f32 %v2153, 0.5
        %v2178 = vmul.f32 %v2154, 0.5
        %v2179 = vmul.f32 %v2155, 0.5
        %v2180 = vmul.f32 %v2156, 0.5
        %v2181 = vmul.f32 %v2157, 0.5
        %v2182 = vmul.f32 %v2158, 0.5
        %v2183 = vmul.f32 %v2159, 0.5
        %v2184 = vmul.f32 %v2160, 0.5
        %v2185 = vmul.f32 %v2161, 0.5
        %v2186 = vmul.f32 %v2162, 0.5
        %v2187 = vmul.f32 %v2163, 0.5
        %v2188 = vmul.f32 %v2164, 0.5
        %v2189 = vadd.f32 %v2016, %v2165
        %v2190 = vadd.f32 %v2017, %v2166
        %v2191 = vadd.f32 %v2018, %v2167
        %v2192 = vadd.f32 %v2019, %v2168
        %v2193 = vadd.f32 %v2020, %v2169
        %v2194 = vadd.f32 %v2021, %v2170
        %v2195 = vadd.f32 %v2022, %v2171
        %v2196 = vadd.f32 %v2023, %v2172
        %v2197 = vadd.f32 %v2024, %v2173
        %v2198 = vadd.f32 %v2025, %v2174
        %v2199 = vadd.f32 %v2026, %v2175
        %v2200 = vadd.f32 %v2027, %v2176
        %v2201 = vadd.f32 %v2028, %v2177
        %v2202 = vadd.f32 %v2029, %v2178
        %v2203 = vadd.f32 %v2030, %v2179
        %v2204 = vadd.f32 %v2031, %v2180
        %v2205 = vadd.f32 %v2032, %v2181
        %v2206 = vadd.f32 %v2033, %v2182
        %v2207 = vadd.f32 %v2034, %v2183
        %v2208 = vadd.f32 %v2035, %v2184
        %v2209 = vadd.f32 %v2036, %v2185
        %v2210 = vadd.f32 %v2037, %v2186
        %v2211 = vadd.f32 %v2038, %v2187
        %v2212 = vadd.f32 %v2039, %v2188
        %vm2213 = vcmp.ge.f32.partialorder %v2189, 1.0
        %vm2214 = vcmp.ge.f32.partialorder %v2190, 1.0
        %vm2215 = vcmp.ge.f32.partialorder %v2191, 1.0
        %vm2216 = vcmp.ge.f32.partialorder %v2192, 1.0
        %vm2217 = vcmp.ge.f32.partialorder %v2193, 1.0
        %vm2218 = vcmp.ge.f32.partialorder %v2194, 1.0
        %vm2219 = vcmp.ge.f32.partialorder %v2195, 1.0
        %vm2220 = vcmp.ge.f32.partialorder %v2196, 1.0
        %vm2221 = vcmp.ge.f32.partialorder %v2197, 1.0
        %vm2222 = vcmp.ge.f32.partialorder %v2198, 1.0
        %vm2223 = vcmp.ge.f32.partialorder %v2199, 1.0
        %vm2224 = vcmp.ge.f32.partialorder %v2200, 1.0
        %vm2225 = vcmp.ge.f32.partialorder %v2201, 1.0
        %vm2226 = vcmp.ge.f32.partialorder %v2202, 1.0
        %vm2227 = vcmp.ge.f32.partialorder %v2203, 1.0
        %vm2228 = vcmp.ge.f32.partialorder %v2204, 1.0
        %vm2229 = vcmp.ge.f32.partialorder %v2205, 1.0
        %vm2230 = vcmp.ge.f32.partialorder %v2206, 1.0
        %vm2231 = vcmp.ge.f32.partialorder %v2207, 1.0
        %vm2232 = vcmp.ge.f32.partialorder %v2208, 1.0
        %vm2233 = vcmp.ge.f32.partialorder %v2209, 1.0
        %vm2234 = vcmp.ge.f32.partialorder %v2210, 1.0
        %vm2235 = vcmp.ge.f32.partialorder %v2211, 1.0
        %vm2236 = vcmp.ge.f32.partialorder %v2212, 1.0
        %v2237 = vsel %vm2213, 1, 0
        %v2238 = vsel %vm2214, 1, 0
        %v2239 = vsel %vm2215, 1, 0
        %v2240 = vsel %vm2216, 1, 0
        %v2241 = vsel %vm2217, 1, 0
        %v2242 = vsel %vm2218, 1, 0
        %v2243 = vsel %vm2219, 1, 0
        %v2244 = vsel %vm2220, 1, 0
        %v2245 = vsel %vm2221, 1, 0
        %v2246 = vsel %vm2222, 1, 0
        %v2247 = vsel %vm2223, 1, 0
        %v2248 = vsel %vm2224, 1, 0
        %v2249 = vsel %vm2225, 1, 0
        %v2250 = vsel %vm2226, 1, 0
        %v2251 = vsel %vm2227, 1, 0
        %v2252 = vsel %vm2228, 1, 0
        %v2253 = vsel %vm2229, 1, 0
        %v2254 = vsel %vm2230, 1, 0
        %v2255 = vsel %vm2231, 1, 0
        %v2256 = vsel %vm2232, 1, 0
        %v2257 = vsel %vm2233, 1, 0
        %v2258 = vsel %vm2234, 1, 0
        %v2259 = vsel %vm2235, 1, 0
        %v2260 = vsel %vm2236, 1, 0
        %v2261 = vcvt.s32.f32 %v2237
        %v2262 = vcvt.s32.f32 %v2238
        %v2263 = vcvt.s32.f32 %v2239
        %v2264 = vcvt.s32.f32 %v2240
        %v2265 = vcvt.s32.f32 %v2241
        %v2266 = vcvt.s32.f32 %v2242
        %v2267 = vcvt.s32.f32 %v2243
        %v2268 = vcvt.s32.f32 %v2244
        %v2269 = vcvt.s32.f32 %v2245
        %v2270 = vcvt.s32.f32 %v2246
        %v2271 = vcvt.s32.f32 %v2247
        %v2272 = vcvt.s32.f32 %v2248
        %v2273 = vcvt.s32.f32 %v2249
        %v2274 = vcvt.s32.f32 %v2250
        %v2275 = vcvt.s32.f32 %v2251
        %v2276 = vcvt.s32.f32 %v2252
        %v2277 = vcvt.s32.f32 %v2253
        %v2278 = vcvt.s32.f32 %v2254
        %v2279 = vcvt.s32.f32 %v2255
        %v2280 = vcvt.s32.f32 %v2256
        %v2281 = vcvt.s32.f32 %v2257
        %v2282 = vcvt.s32.f32 %v2258
        %v2283 = vcvt.s32.f32 %v2259
        %v2284 = vcvt.s32.f32 %v2260
        %v2285 = vsub.f32 1.0, %v2261
        %v2286 = vsub.f32 1.0, %v2262
        %v2287 = vsub.f32 1.0, %v2263
        %v2288 = vsub.f32 1.0, %v2264
        %v2289 = vsub.f32 1.0, %v2265
        %v2290 = vsub.f32 1.0, %v2266
        %v2291 = vsub.f32 1.0, %v2267
        %v2292 = vsub.f32 1.0, %v2268
        %v2293 = vsub.f32 1.0, %v2269
        %v2294 = vsub.f32 1.0, %v2270
        %v2295 = vsub.f32 1.0, %v2271
        %v2296 = vsub.f32 1.0, %v2272
        %v2297 = vsub.f32 1.0, %v2273
        %v2298 = vsub.f32 1.0, %v2274
        %v2299 = vsub.f32 1.0, %v2275
        %v2300 = vsub.f32 1.0, %v2276
        %v2301 = vsub.f32 1.0, %v2277
        %v2302 = vsub.f32 1.0, %v2278
        %v2303 = vsub.f32 1.0, %v2279
        %v2304 = vsub.f32 1.0, %v2280
        %v2305 = vsub.f32 1.0, %v2281
        %v2306 = vsub.f32 1.0, %v2282
        %v2307 = vsub.f32 1.0, %v2283
        %v2308 = vsub.f32 1.0, %v2284
        %v2309 = vmul.f32 %v2189, %v2285
        %v2310 = vmul.f32 %v2190, %v2286
        %v2311 = vmul.f32 %v2191, %v2287
        %v2312 = vmul.f32 %v2192, %v2288
        %v2313 = vmul.f32 %v2193, %v2289
        %v2314 = vmul.f32 %v2194, %v2290
        %v2315 = vmul.f32 %v2195, %v2291
        %v2316 = vmul.f32 %v2196, %v2292
        %v2317 = vmul.f32 %v2197, %v2293
        %v2318 = vmul.f32 %v2198, %v2294
        %v2319 = vmul.f32 %v2199, %v2295
        %v2320 = vmul.f32 %v2200, %v2296
        %v2321 = vmul.f32 %v2201, %v2297
        %v2322 = vmul.f32 %v2202, %v2298
        %v2323 = vmul.f32 %v2203, %v2299
        %v2324 = vmul.f32 %v2204, %v2300
        %v2325 = vmul.f32 %v2205, %v2301
        %v2326 = vmul.f32 %v2206, %v2302
        %v2327 = vmul.f32 %v2207, %v2303
        %v2328 = vmul.f32 %v2208, %v2304
        %v2329 = vmul.f32 %v2209, %v2305
        %v2330 = vmul.f32 %v2210, %v2306
        %v2331 = vmul.f32 %v2211, %v2307
        %v2332 = vmul.f32 %v2212, %v2308
        %v2333 = vmul.f32 %v2262, %v2263
        %v2334 = vmul.f32 %v2265, %v2266
        %v2335 = vmul.f32 %v2268, %v2269
        %v2336 = vmul.f32 %v2271, %v2272
        %v2337 = vmul.f32 %v2274, %v2275
        %v2338 = vmul.f32 %v2277, %v2278
        %v2339 = vmul.f32 %v2280, %v2281
        %v2340 = vmul.f32 %v2283, %v2284
        %v2341 = vadd.f32 %v2333, %v2334
        %v2342 = vadd.f32 %v2341, %v2335
        %v2343 = vadd.f32 %v2342, %v2336
        %v2344 = vadd.f32 %v2343, %v2337
        %v2345 = vadd.f32 %v2344, %v2338
        %v2346 = vadd.f32 %v2345, %v2339
        %v2347 = vadd.f32 %v2346, %v2340
        %v2348 = vrot.slane %v2347, 4
        %v2349 = vadd.f32 %v2347, %v2348
        %v2350 = vrot.slane %v2349, 2
        %v2351 = vadd.f32 %v2349, %v2350
        %v2352 = vrot.slane %v2351, 1
        %v2353 = vadd.f32 %v2351, %v2352
        %v2354 = vsub.f32 %v2353, %v2068
        %v2355 = vmul.f32 %v2354, 0.5
        %v2356 = vadd.f32 %v2068, %v2355
        %vm2357 = vcmp.ge.f32.partialorder %v2356, 0.5
        %v2358 = vsel %vm2357, 1, 0
        %v2359 = vcvt.s32.f32 %v2358
        %v2360 = vsub.f32 1.0, %v2359
        %v2361 = vmul.f32 %v2356, %v2360
        %v2362 = vmul.f32 %v2261, %v2359
        %v2363 = vmul.f32 %v2264, %v2359
        %v2364 = vmul.f32 %v2267, %v2359
        %v2365 = vmul.f32 %v2270, %v2359
        %v2366 = vmul.f32 %v2273, %v2359
        %v2367 = vmul.f32 %v2276, %v2359
        %v2368 = vmul.f32 %v2279, %v2359
        %v2369 = vmul.f32 %v2282, %v2359
        %v2370 = vsub.f32 %v2362, %v2133
        %v2371 = vsub.f32 %v2363, %v2134
        %v2372 = vsub.f32 %v2364, %v2135
        %v2373 = vsub.f32 %v2365, %v2136
        %v2374 = vsub.f32 %v2366, %v2137
        %v2375 = vsub.f32 %v2367, %v2138
        %v2376 = vsub.f32 %v2368, %v2139
        %v2377 = vsub.f32 %v2369, %v2140
        %v2378 = vmul.f32 %v2370, 0.5
        %v2379 = vmul.f32 %v2371, 0.5
        %v2380 = vmul.f32 %v2372, 0.5
        %v2381 = vmul.f32 %v2373, 0.5
        %v2382 = vmul.f32 %v2374, 0.5
        %v2383 = vmul.f32 %v2375, 0.5
        %v2384 = vmul.f32 %v2376, 0.5
        %v2385 = vmul.f32 %v2377, 0.5
        %v2386 = vadd.f32 %v2133, %v2378
        %v2387 = vadd.f32 %v2134, %v2379
        %v2388 = vadd.f32 %v2135, %v2380
        %v2389 = vadd.f32 %v2136, %v2381
        %v2390 = vadd.f32 %v2137, %v2382
        %v2391 = vadd.f32 %v2138, %v2383
        %v2392 = vadd.f32 %v2139, %v2384
        %v2393 = vadd.f32 %v2140, %v2385
        %vm2394 = vcmp.ge.f32.partialorder %v2386, 0.5
        %vm2395 = vcmp.ge.f32.partialorder %v2387, 0.5
        %vm2396 = vcmp.ge.f32.partialorder %v2388, 0.5
        %vm2397 = vcmp.ge.f32.partialorder %v2389, 0.5
        %vm2398 = vcmp.ge.f32.partialorder %v2390, 0.5
        %vm2399 = vcmp.ge.f32.partialorder %v2391, 0.5
        %vm2400 = vcmp.ge.f32.partialorder %v2392, 0.5
        %vm2401 = vcmp.ge.f32.partialorder %v2393, 0.5
        %v2402 = vsel %vm2394, 1, 0
        %v2403 = vsel %vm2395, 1, 0
        %v2404 = vsel %vm2396, 1, 0
        %v2405 = vsel %vm2397, 1, 0
        %v2406 = vsel %vm2398, 1, 0
        %v2407 = vsel %vm2399, 1, 0
        %v2408 = vsel %vm2400, 1, 0
        %v2409 = vsel %vm2401, 1, 0
        %v2410 = vcvt.s32.f32 %v2402
        %v2411 = vcvt.s32.f32 %v2403
        %v2412 = vcvt.s32.f32 %v2404
        %v2413 = vcvt.s32.f32 %v2405
        %v2414 = vcvt.s32.f32 %v2406
        %v2415 = vcvt.s32.f32 %v2407
        %v2416 = vcvt.s32.f32 %v2408
        %v2417 = vcvt.s32.f32 %v2409
        %v2418 = vsub.f32 1.0, %v2410
        %v2419 = vsub.f32 1.0, %v2411
        %v2420 = vsub.f32 1.0, %v2412
        %v2421 = vsub.f32 1.0, %v2413
        %v2422 = vsub.f32 1.0, %v2414
        %v2423 = vsub.f32 1.0, %v2415
        %v2424 = vsub.f32 1.0, %v2416
        %v2425 = vsub.f32 1.0, %v2417
        %v2426 = vmul.f32 %v2386, %v2418
        %v2427 = vmul.f32 %v2387, %v2419
        %v2428 = vmul.f32 %v2388, %v2420
        %v2429 = vmul.f32 %v2389, %v2421
        %v2430 = vmul.f32 %v2390, %v2422
        %v2431 = vmul.f32 %v2391, %v2423
        %v2432 = vmul.f32 %v2392, %v2424
        %v2433 = vmul.f32 %v2393, %v2425
        %v2434 = vsub.f32 %v1564, %v2309
        %v2435 = vsub.f32 %v1565, %v2310
        %v2436 = vsub.f32 %v1566, %v2311
        %v2437 = vsub.f32 %v1567, %v2312
        %v2438 = vsub.f32 %v1568, %v2313
        %v2439 = vsub.f32 %v1569, %v2314
        %v2440 = vsub.f32 %v1570, %v2315
        %v2441 = vsub.f32 %v1571, %v2316
        %v2442 = vsub.f32 %v1572, %v2317
        %v2443 = vsub.f32 %v1573, %v2318
        %v2444 = vsub.f32 %v1574, %v2319
        %v2445 = vsub.f32 %v1575, %v2320
        %v2446 = vsub.f32 %v1576, %v2321
        %v2447 = vsub.f32 %v1577, %v2322
        %v2448 = vsub.f32 %v1578, %v2323
        %v2449 = vsub.f32 %v1579, %v2324
        %v2450 = vsub.f32 %v1580, %v2325
        %v2451 = vsub.f32 %v1581, %v2326
        %v2452 = vsub.f32 %v1582, %v2327
        %v2453 = vsub.f32 %v1583, %v2328
        %v2454 = vsub.f32 %v1584, %v2329
        %v2455 = vsub.f32 %v1585, %v2330
        %v2456 = vsub.f32 %v1586, %v2331
        %v2457 = vsub.f32 %v1587, %v2332
        %v2458 = vmul.f32 %v2434, 0.5
        %v2459 = vmul.f32 %v2435, 0.5
        %v2460 = vmul.f32 %v2436, 0.5
        %v2461 = vmul.f32 %v2437, 0.5
        %v2462 = vmul.f32 %v2438, 0.5
        %v2463 = vmul.f32 %v2439, 0.5
        %v2464 = vmul.f32 %v2440, 0.5
        %v2465 = vmul.f32 %v2441, 0.5
        %v2466 = vmul.f32 %v2442, 0.5
        %v2467 = vmul.f32 %v2443, 0.5
        %v2468 = vmul.f32 %v2444, 0.5
        %v2469 = vmul.f32 %v2445, 0.5
        %v2470 = vmul.f32 %v2446, 0.5
        %v2471 = vmul.f32 %v2447, 0.5
        %v2472 = vmul.f32 %v2448, 0.5
        %v2473 = vmul.f32 %v2449, 0.5
        %v2474 = vmul.f32 %v2450, 0.5
        %v2475 = vmul.f32 %v2451, 0.5
        %v2476 = vmul.f32 %v2452, 0.5
        %v2477 = vmul.f32 %v2453, 0.5
        %v2478 = vmul.f32 %v2454, 0.5
        %v2479 = vmul.f32 %v2455, 0.5
        %v2480 = vmul.f32 %v2456, 0.5
        %v2481 = vmul.f32 %v2457, 0.5
        %v2482 = vadd.f32 %v2309, %v2458
        %v2483 = vadd.f32 %v2310, %v2459
        %v2484 = vadd.f32 %v2311, %v2460
        %v2485 = vadd.f32 %v2312, %v2461
        %v2486 = vadd.f32 %v2313, %v2462
        %v2487 = vadd.f32 %v2314, %v2463
        %v2488 = vadd.f32 %v2315, %v2464
        %v2489 = vadd.f32 %v2316, %v2465
        %v2490 = vadd.f32 %v2317, %v2466
        %v2491 = vadd.f32 %v2318, %v2467
        %v2492 = vadd.f32 %v2319, %v2468
        %v2493 = vadd.f32 %v2320, %v2469
        %v2494 = vadd.f32 %v2321, %v2470
        %v2495 = vadd.f32 %v2322, %v2471
        %v2496 = vadd.f32 %v2323, %v2472
        %v2497 = vadd.f32 %v2324, %v2473
        %v2498 = vadd.f32 %v2325, %v2474
        %v2499 = vadd.f32 %v2326, %v2475
        %v2500 = vadd.f32 %v2327, %v2476
        %v2501 = vadd.f32 %v2328, %v2477
        %v2502 = vadd.f32 %v2329, %v2478
        %v2503 = vadd.f32 %v2330, %v2479
        %v2504 = vadd.f32 %v2331, %v2480
        %v2505 = vadd.f32 %v2332, %v2481
        %vm2506 = vcmp.ge.f32.partialorder %v2482, 1.0
        %vm2507 = vcmp.ge.f32.partialorder %v2483, 1.0
        %vm2508 = vcmp.ge.f32.partialorder %v2484, 1.0
        %vm2509 = vcmp.ge.f32.partialorder %v2485, 1.0
        %vm2510 = vcmp.ge.f32.partialorder %v2486, 1.0
        %vm2511 = vcmp.ge.f32.partialorder %v2487, 1.0
        %vm2512 = vcmp.ge.f32.partialorder %v2488, 1.0
        %vm2513 = vcmp.ge.f32.partialorder %v2489, 1.0
        %vm2514 = vcmp.ge.f32.partialorder %v2490, 1.0
        %vm2515 = vcmp.ge.f32.partialorder %v2491, 1.0
        %vm2516 = vcmp.ge.f32.partialorder %v2492, 1.0
        %vm2517 = vcmp.ge.f32.partialorder %v2493, 1.0
        %vm2518 = vcmp.ge.f32.partialorder %v2494, 1.0
        %vm2519 = vcmp.ge.f32.partialorder %v2495, 1.0
        %vm2520 = vcmp.ge.f32.partialorder %v2496, 1.0
        %vm2521 = vcmp.ge.f32.partialorder %v2497, 1.0
        %vm2522 = vcmp.ge.f32.partialorder %v2498, 1.0
        %vm2523 = vcmp.ge.f32.partialorder %v2499, 1.0
        %vm2524 = vcmp.ge.f32.partialorder %v2500, 1.0
        %vm2525 = vcmp.ge.f32.partialorder %v2501, 1.0
        %vm2526 = vcmp.ge.f32.partialorder %v2502, 1.0
        %vm2527 = vcmp.ge.f32.partialorder %v2503, 1.0
        %vm2528 = vcmp.ge.f32.partialorder %v2504, 1.0
        %vm2529 = vcmp.ge.f32.partialorder %v2505, 1.0
        %v2530 = vsel %vm2506, 1, 0
        %v2531 = vsel %vm2507, 1, 0
        %v2532 = vsel %vm2508, 1, 0
        %v2533 = vsel %vm2509, 1, 0
        %v2534 = vsel %vm2510, 1, 0
        %v2535 = vsel %vm2511, 1, 0
        %v2536 = vsel %vm2512, 1, 0
        %v2537 = vsel %vm2513, 1, 0
        %v2538 = vsel %vm2514, 1, 0
        %v2539 = vsel %vm2515, 1, 0
        %v2540 = vsel %vm2516, 1, 0
        %v2541 = vsel %vm2517, 1, 0
        %v2542 = vsel %vm2518, 1, 0
        %v2543 = vsel %vm2519, 1, 0
        %v2544 = vsel %vm2520, 1, 0
        %v2545 = vsel %vm2521, 1, 0
        %v2546 = vsel %vm2522, 1, 0
        %v2547 = vsel %vm2523, 1, 0
        %v2548 = vsel %vm2524, 1, 0
        %v2549 = vsel %vm2525, 1, 0
        %v2550 = vsel %vm2526, 1, 0
        %v2551 = vsel %vm2527, 1, 0
        %v2552 = vsel %vm2528, 1, 0
        %v2553 = vsel %vm2529, 1, 0
        %v2554 = vcvt.s32.f32 %v2530
        %v2555 = vcvt.s32.f32 %v2531
        %v2556 = vcvt.s32.f32 %v2532
        %v2557 = vcvt.s32.f32 %v2533
        %v2558 = vcvt.s32.f32 %v2534
        %v2559 = vcvt.s32.f32 %v2535
        %v2560 = vcvt.s32.f32 %v2536
        %v2561 = vcvt.s32.f32 %v2537
        %v2562 = vcvt.s32.f32 %v2538
        %v2563 = vcvt.s32.f32 %v2539
        %v2564 = vcvt.s32.f32 %v2540
        %v2565 = vcvt.s32.f32 %v2541
        %v2566 = vcvt.s32.f32 %v2542
        %v2567 = vcvt.s32.f32 %v2543
        %v2568 = vcvt.s32.f32 %v2544
        %v2569 = vcvt.s32.f32 %v2545
        %v2570 = vcvt.s32.f32 %v2546
        %v2571 = vcvt.s32.f32 %v2547
        %v2572 = vcvt.s32.f32 %v2548
        %v2573 = vcvt.s32.f32 %v2549
        %v2574 = vcvt.s32.f32 %v2550
        %v2575 = vcvt.s32.f32 %v2551
        %v2576 = vcvt.s32.f32 %v2552
        %v2577 = vcvt.s32.f32 %v2553
        %v2578 = vmul.f32 %v2555, %v2556
        %v2579 = vmul.f32 %v2558, %v2559
        %v2580 = vmul.f32 %v2561, %v2562
        %v2581 = vmul.f32 %v2564, %v2565
        %v2582 = vmul.f32 %v2567, %v2568
        %v2583 = vmul.f32 %v2570, %v2571
        %v2584 = vmul.f32 %v2573, %v2574
        %v2585 = vmul.f32 %v2576, %v2577
        %v2586 = vadd.f32 %v2578, %v2579
        %v2587 = vadd.f32 %v2586, %v2580
        %v2588 = vadd.f32 %v2587, %v2581
        %v2589 = vadd.f32 %v2588, %v2582
        %v2590 = vadd.f32 %v2589, %v2583
        %v2591 = vadd.f32 %v2590, %v2584
        %v2592 = vadd.f32 %v2591, %v2585
        %v2593 = vrot.slane %v2592, 4
        %v2594 = vadd.f32 %v2592, %v2593
        %v2595 = vrot.slane %v2594, 2
        %v2596 = vadd.f32 %v2594, %v2595
        %v2597 = vrot.slane %v2596, 1
        %v2598 = vadd.f32 %v2596, %v2597
        %v2599 = vsub.f32 %v2598, %v2361
        %v2600 = vmul.f32 %v2599, 0.5
        %v2601 = vadd.f32 %v2361, %v2600
        %vm2602 = vcmp.ge.f32.partialorder %v2601, 0.5
        %v2603 = vsel %vm2602, 1, 0
        %v2604 = vcvt.s32.f32 %v2603
        %v2605 = vmul.f32 %v2554, %v2604
        %v2606 = vmul.f32 %v2557, %v2604
        %v2607 = vmul.f32 %v2560, %v2604
        %v2608 = vmul.f32 %v2563, %v2604
        %v2609 = vmul.f32 %v2566, %v2604
        %v2610 = vmul.f32 %v2569, %v2604
        %v2611 = vmul.f32 %v2572, %v2604
        %v2612 = vmul.f32 %v2575, %v2604
        %v2613 = vsub.f32 %v2605, %v2426
        %v2614 = vsub.f32 %v2606, %v2427
        %v2615 = vsub.f32 %v2607, %v2428
        %v2616 = vsub.f32 %v2608, %v2429
        %v2617 = vsub.f32 %v2609, %v2430
        %v2618 = vsub.f32 %v2610, %v2431
        %v2619 = vsub.f32 %v2611, %v2432
        %v2620 = vsub.f32 %v2612, %v2433
        %v2621 = vmul.f32 %v2613, 0.5
        %v2622 = vmul.f32 %v2614, 0.5
        %v2623 = vmul.f32 %v2615, 0.5
        %v2624 = vmul.f32 %v2616, 0.5
        %v2625 = vmul.f32 %v2617, 0.5
        %v2626 = vmul.f32 %v2618, 0.5
        %v2627 = vmul.f32 %v2619, 0.5
        %v2628 = vmul.f32 %v2620, 0.5
        %v2629 = vadd.f32 %v2426, %v2621
        %v2630 = vadd.f32 %v2427, %v2622
        %v2631 = vadd.f32 %v2428, %v2623
        %v2632 = vadd.f32 %v2429, %v2624
        %v2633 = vadd.f32 %v2430, %v2625
        %v2634 = vadd.f32 %v2431, %v2626
        %v2635 = vadd.f32 %v2432, %v2627
        %v2636 = vadd.f32 %v2433, %v2628
        %vm2637 = vcmp.ge.f32.partialorder %v2629, 0.5
        %vm2638 = vcmp.ge.f32.partialorder %v2630, 0.5
        %vm2639 = vcmp.ge.f32.partialorder %v2631, 0.5
        %vm2640 = vcmp.ge.f32.partialorder %v2632, 0.5
        %vm2641 = vcmp.ge.f32.partialorder %v2633, 0.5
        %vm2642 = vcmp.ge.f32.partialorder %v2634, 0.5
        %vm2643 = vcmp.ge.f32.partialorder %v2635, 0.5
        %vm2644 = vcmp.ge.f32.partialorder %v2636, 0.5
        %v2645 = vsel %vm2637, 1, 0
        %v2646 = vsel %vm2638, 1, 0
        %v2647 = vsel %vm2639, 1, 0
        %v2648 = vsel %vm2640, 1, 0
        %v2649 = vsel %vm2641, 1, 0
        %v2650 = vsel %vm2642, 1, 0
        %v2651 = vsel %vm2643, 1, 0
        %v2652 = vsel %vm2644, 1, 0
        %v2653 = vcvt.s32.f32 %v2645
        %v2654 = vcvt.s32.f32 %v2646
        %v2655 = vcvt.s32.f32 %v2647
        %v2656 = vcvt.s32.f32 %v2648
        %v2657 = vcvt.s32.f32 %v2649
        %v2658 = vcvt.s32.f32 %v2650
        %v2659 = vcvt.s32.f32 %v2651
        %v2660 = vcvt.s32.f32 %v2652
        %v2661 = vpack.c.bf16 %v1825, %v1824
        %v2662 = vpack.c.bf16 %v1827, %v1826
        %v2663 = vpack.c.bf16 %v1829, %v1828
        %v2664 = vpack.c.bf16 %v1831, %v1830
        %v2665 = vpack.c.bf16 %v2118, %v2117
        %v2666 = vpack.c.bf16 %v2120, %v2119
        %v2667 = vpack.c.bf16 %v2122, %v2121
        %v2668 = vpack.c.bf16 %v2124, %v2123
        %v2669 = vpack.c.bf16 %v2411, %v2410
        %v2670 = vpack.c.bf16 %v2413, %v2412
        %v2671 = vpack.c.bf16 %v2415, %v2414
        %v2672 = vpack.c.bf16 %v2417, %v2416
        %v2673 = vpack.c.bf16 %v2654, %v2653
        %v2674 = vpack.c.bf16 %v2656, %v2655
        %v2675 = vpack.c.bf16 %v2658, %v2657
        %v2676 = vpack.c.bf16 %v2660, %v2659
        %v2677 = vld [vmem:[#allocation10] sm:$0xf]
        %v2678 = vld [vmem:[#allocation10 + $0x4] sm:$0xf]
        %v2679 = vld [vmem:[#allocation10 + $0x8] sm:$0xf]
        %v2680 = vld [vmem:[#allocation10 + $0xc] sm:$0xf]
        %v2681 = vld [vmem:[#allocation10 + $0x10] sm:$0xf]
        %v2682 = vld [vmem:[#allocation10 + $0x14] sm:$0xf]
        %v2683 = vld [vmem:[#allocation10 + $0x18] sm:$0xf]
        %v2684 = vld [vmem:[#allocation10 + $0x1c] sm:$0xf]
        %v2685 = vld [vmem:[#allocation10 + $0x20] sm:$0xf]
        %v2686 = vld [vmem:[#allocation10 + $0x24] sm:$0xf]
        %v2687 = vld [vmem:[#allocation10 + $0x28] sm:$0xf]
        %v2688 = vld [vmem:[#allocation10 + $0x2c] sm:$0xf]
        %v2689 = vld [vmem:[#allocation10 + $0x30] sm:$0xf]
        %v2690 = vld [vmem:[#allocation10 + $0x34] sm:$0xf]
        %v2691 = vld [vmem:[#allocation10 + $0x38] sm:$0xf]
        %v2692 = vld [vmem:[#allocation10 + $0x3c] sm:$0xf]
        %v2709 = vunpack.c.l.b16 %v2677
        %v2710 = vunpack.c.l.b16 %v2678
        %v2711 = vunpack.c.l.b16 %v2679
        %v2712 = vunpack.c.l.b16 %v2680
        %v2713 = vunpack.c.l.b16 %v2681
        %v2714 = vunpack.c.l.b16 %v2682
        %v2715 = vunpack.c.l.b16 %v2683
        %v2716 = vunpack.c.l.b16 %v2684
        %v2717 = vunpack.c.l.b16 %v2685
        %v2718 = vunpack.c.l.b16 %v2686
        %v2719 = vunpack.c.l.b16 %v2687
        %v2720 = vunpack.c.l.b16 %v2688
        %v2721 = vunpack.c.l.b16 %v2689
        %v2722 = vunpack.c.l.b16 %v2690
        %v2723 = vunpack.c.l.b16 %v2691
        %v2724 = vunpack.c.l.b16 %v2692
        %v2725 = vpack.c.b16 %v2710, %v2709
        %v2726 = vpack.c.b16 %v2712, %v2711
        %v2727 = vpack.c.b16 %v2714, %v2713
        %v2728 = vpack.c.b16 %v2716, %v2715
        %v2729 = vpack.c.b16 %v2718, %v2717
        %v2730 = vpack.c.b16 %v2720, %v2719
        %v2731 = vpack.c.b16 %v2722, %v2721
        %v2732 = vpack.c.b16 %v2724, %v2723
        %2741 = vmatprep.subr.bf16.mxu0 0
        %2742 = vmatpush1.bf16.msra.mxu0 %v2732
        %2743 = vmatprep.subr.bf16.mxu0 0
        %2744 = vmatpush1.bf16.msra.mxu0 %v2731
        %2745 = vmatprep.subr.bf16.mxu0 0
        %2746 = vmatpush1.bf16.msra.mxu0 %v2730
        %2747 = vmatprep.subr.bf16.mxu0 0
        %2748 = vmatpush1.bf16.msra.mxu0 %v2729
        %2749 = vmatprep.subr.bf16.mxu0 0
        %2750 = vmatpush1.bf16.msra.mxu0 %v2728
        %2751 = vmatprep.subr.bf16.mxu0 0
        %2752 = vmatpush1.bf16.msra.mxu0 %v2727
        %2753 = vmatprep.subr.bf16.mxu0 0
        %2754 = vmatpush1.bf16.msra.mxu0 %v2726
        %2755 = vmatprep.subr.bf16.mxu0 0
        %2756 = vmatpush1.bf16.msra.mxu0 %v2725
        %2757 = vmatprep.subr.bf16.mxu0 0
        %2758 = vmatpush2.bf16.msra.mxu0 0
        %2759 = vmatprep.subr.bf16.mxu0 0
        %2760 = vmatpush2.bf16.msra.mxu0 0
        %2761 = vmatprep.subr.bf16.mxu0 0
        %2762 = vmatpush2.bf16.msra.mxu0 0
        %2763 = vmatprep.subr.bf16.mxu0 0
        %2764 = vmatpush2.bf16.msra.mxu0 0
        %2765 = vmatprep.subr.bf16.mxu0 0
        %2766 = vmatpush2.bf16.msra.mxu0 0
        %2767 = vmatprep.subr.bf16.mxu0 0
        %2768 = vmatpush2.bf16.msra.mxu0 0
        %2769 = vmatprep.subr.bf16.mxu0 0
        %2770 = vmatpush2.bf16.msra.mxu0 0
        %2771 = vmatprep.subr.bf16.mxu0 0
        %2772 = vmatpush2.bf16.msra.mxu0 0
        %2773 = vmatprep.mubr.bf16.mxu0 0
        %2774 = vmatmul.mubr.bf16.gmra.mxu0 %v2661
        %v2775 = vpop.f32.mrf.mxu0
        %v2776 = vadd.f32 0.0, %v2775
        %v2777 = vpop.f32.mrf.mxu0
        %v2778 = vpop.f32.mrf.mxu0
        %v2779 = vadd.f32 0.0, %v2778
        %v2780 = vpop.f32.mrf.mxu0
        %2781 = vmatprep.mubr.bf16.mxu0 0
        %2782 = vmatmul.mubr.bf16.gmra.mxu0 %v2662
        %v2783 = vpop.f32.mrf.mxu0
        %v2784 = vadd.f32 0.0, %v2783
        %v2785 = vpop.f32.mrf.mxu0
        %v2786 = vpop.f32.mrf.mxu0
        %v2787 = vadd.f32 0.0, %v2786
        %v2788 = vpop.f32.mrf.mxu0
        %2789 = vmatprep.mubr.bf16.mxu0 0
        %2790 = vmatmul.mubr.bf16.gmra.mxu0 %v2663
        %v2791 = vpop.f32.mrf.mxu0
        %v2792 = vadd.f32 0.0, %v2791
        %v2793 = vpop.f32.mrf.mxu0
        %v2794 = vpop.f32.mrf.mxu0
        %v2795 = vadd.f32 0.0, %v2794
        %v2796 = vpop.f32.mrf.mxu0
        %2797 = vmatprep.mubr.bf16.mxu0 0
        %2798 = vmatmul.mubr.bf16.gmra.mxu0 %v2664
        %v2799 = vpop.f32.mrf.mxu0
        %v2800 = vadd.f32 0.0, %v2799
        %v2801 = vpop.f32.mrf.mxu0
        %v2802 = vpop.f32.mrf.mxu0
        %v2803 = vadd.f32 0.0, %v2802
        %v2804 = vpop.f32.mrf.mxu0
        %2805 = vmatprep.mubr.bf16.mxu0 0
        %2806 = vmatmul.mubr.bf16.gmra.mxu0 %v2665
        %v2807 = vpop.f32.mrf.mxu0
        %v2808 = vadd.f32 0.0, %v2807
        %v2809 = vpop.f32.mrf.mxu0
        %v2810 = vpop.f32.mrf.mxu0
        %v2811 = vadd.f32 0.0, %v2810
        %v2812 = vpop.f32.mrf.mxu0
        %2813 = vmatprep.mubr.bf16.mxu0 0
        %2814 = vmatmul.mubr.bf16.gmra.mxu0 %v2666
        %v2815 = vpop.f32.mrf.mxu0
        %v2816 = vadd.f32 0.0, %v2815
        %v2817 = vpop.f32.mrf.mxu0
        %v2818 = vpop.f32.mrf.mxu0
        %v2819 = vadd.f32 0.0, %v2818
        %v2820 = vpop.f32.mrf.mxu0
        %2821 = vmatprep.mubr.bf16.mxu0 0
        %2822 = vmatmul.mubr.bf16.gmra.mxu0 %v2667
        %v2823 = vpop.f32.mrf.mxu0
        %v2824 = vadd.f32 0.0, %v2823
        %v2825 = vpop.f32.mrf.mxu0
        %v2826 = vpop.f32.mrf.mxu0
        %v2827 = vadd.f32 0.0, %v2826
        %v2828 = vpop.f32.mrf.mxu0
        %2829 = vmatprep.mubr.bf16.mxu0 0
        %2830 = vmatmul.mubr.bf16.gmra.mxu0 %v2668
        %v2831 = vpop.f32.mrf.mxu0
        %v2832 = vadd.f32 0.0, %v2831
        %v2833 = vpop.f32.mrf.mxu0
        %v2834 = vpop.f32.mrf.mxu0
        %v2835 = vadd.f32 0.0, %v2834
        %v2836 = vpop.f32.mrf.mxu0
        %2837 = vmatprep.mubr.bf16.mxu0 0
        %2838 = vmatmul.mubr.bf16.gmra.mxu0 %v2669
        %v2839 = vpop.f32.mrf.mxu0
        %v2840 = vadd.f32 0.0, %v2839
        %v2841 = vpop.f32.mrf.mxu0
        %v2842 = vpop.f32.mrf.mxu0
        %v2843 = vadd.f32 0.0, %v2842
        %v2844 = vpop.f32.mrf.mxu0
        %2845 = vmatprep.mubr.bf16.mxu0 0
        %2846 = vmatmul.mubr.bf16.gmra.mxu0 %v2670
        %v2847 = vpop.f32.mrf.mxu0
        %v2848 = vadd.f32 0.0, %v2847
        %v2849 = vpop.f32.mrf.mxu0
        %v2850 = vpop.f32.mrf.mxu0
        %v2851 = vadd.f32 0.0, %v2850
        %v2852 = vpop.f32.mrf.mxu0
        %2853 = vmatprep.mubr.bf16.mxu0 0
        %2854 = vmatmul.mubr.bf16.gmra.mxu0 %v2671
        %v2855 = vpop.f32.mrf.mxu0
        %v2856 = vadd.f32 0.0, %v2855
        %v2857 = vpop.f32.mrf.mxu0
        %v2858 = vpop.f32.mrf.mxu0
        %v2859 = vadd.f32 0.0, %v2858
        %v2860 = vpop.f32.mrf.mxu0
        %2861 = vmatprep.mubr.bf16.mxu0 0
        %2862 = vmatmul.mubr.bf16.gmra.mxu0 %v2672
        %v2863 = vpop.f32.mrf.mxu0
        %v2864 = vadd.f32 0.0, %v2863
        %v2865 = vpop.f32.mrf.mxu0
        %v2866 = vpop.f32.mrf.mxu0
        %v2867 = vadd.f32 0.0, %v2866
        %v2868 = vpop.f32.mrf.mxu0
        %2869 = vmatprep.mubr.bf16.mxu0 0
        %2870 = vmatmul.mubr.bf16.gmra.mxu0 %v2673
        %v2871 = vpop.f32.mrf.mxu0
        %v2872 = vadd.f32 0.0, %v2871
        %v2873 = vpop.f32.mrf.mxu0
        %v2874 = vpop.f32.mrf.mxu0
        %v2875 = vadd.f32 0.0, %v2874
        %v2876 = vpop.f32.mrf.mxu0
        %2877 = vmatprep.mubr.bf16.mxu0 0
        %2878 = vmatmul.mubr.bf16.gmra.mxu0 %v2674
        %v2879 = vpop.f32.mrf.mxu0
        %v2880 = vadd.f32 0.0, %v2879
        %v2881 = vpop.f32.mrf.mxu0
        %v2882 = vpop.f32.mrf.mxu0
        %v2883 = vadd.f32 0.0, %v2882
        %v2884 = vpop.f32.mrf.mxu0
        %2885 = vmatprep.mubr.bf16.mxu0 0
        %2886 = vmatmul.mubr.bf16.gmra.mxu0 %v2675
        %v2887 = vpop.f32.mrf.mxu0
        %v2888 = vadd.f32 0.0, %v2887
        %v2889 = vpop.f32.mrf.mxu0
        %v2890 = vpop.f32.mrf.mxu0
        %v2891 = vadd.f32 0.0, %v2890
        %v2892 = vpop.f32.mrf.mxu0
        %2893 = vmatprep.mubr.bf16.mxu0 0
        %2894 = vmatmul.mubr.bf16.gmra.mxu0 %v2676
        %v2895 = vpop.f32.mrf.mxu0
        %v2896 = vadd.f32 0.0, %v2895
        %v2897 = vpop.f32.mrf.mxu0
        %v2898 = vpop.f32.mrf.mxu0
        %v2899 = vadd.f32 0.0, %v2898
        %v2900 = vpop.f32.mrf.mxu0
        %2901 = vdwg.mxu0
        %v2902 = vld [vmem:[%s5] sm:$0x1]
        %v2904 = vlaneseq
        %v2905 = vshrl.u32 %v2904, 7
        %v2906 = vsub.s32 0, %v2905
        %v2907 = vrot.slane %v2902, %v2906
        %v2909 = vmul.f32 %v2776, %v2907
        %v2910 = vmul.f32 %v2779, %v2907
        %v2911 = vmul.f32 %v2784, %v2907
        %v2912 = vmul.f32 %v2787, %v2907
        %v2913 = vmul.f32 %v2792, %v2907
        %v2914 = vmul.f32 %v2795, %v2907
        %v2915 = vmul.f32 %v2800, %v2907
        %v2916 = vmul.f32 %v2803, %v2907
        %v2917 = vmul.f32 %v2808, %v2907
        %v2918 = vmul.f32 %v2811, %v2907
        %v2919 = vmul.f32 %v2816, %v2907
        %v2920 = vmul.f32 %v2819, %v2907
        %v2921 = vmul.f32 %v2824, %v2907
        %v2922 = vmul.f32 %v2827, %v2907
        %v2923 = vmul.f32 %v2832, %v2907
        %v2924 = vmul.f32 %v2835, %v2907
        %v2925 = vmul.f32 %v2840, %v2907
        %v2926 = vmul.f32 %v2843, %v2907
        %v2927 = vmul.f32 %v2848, %v2907
        %v2928 = vmul.f32 %v2851, %v2907
        %v2929 = vmul.f32 %v2856, %v2907
        %v2930 = vmul.f32 %v2859, %v2907
        %v2931 = vmul.f32 %v2864, %v2907
        %v2932 = vmul.f32 %v2867, %v2907
        %v2933 = vmul.f32 %v2872, %v2907
        %v2934 = vmul.f32 %v2875, %v2907
        %v2935 = vmul.f32 %v2880, %v2907
        %v2936 = vmul.f32 %v2883, %v2907
        %v2937 = vmul.f32 %v2888, %v2907
        %v2938 = vmul.f32 %v2891, %v2907
        %v2939 = vmul.f32 %v2896, %v2907
        %v2940 = vmul.f32 %v2899, %v2907
        %v2941 = vld [vmem:[%s6] sm:$0x1]
        %v2943 = vlaneseq
        %v2944 = vshrl.u32 %v2943, 7
        %v2945 = vsub.s32 0, %v2944
        %v2946 = vrot.slane %v2941, %v2945
        %v2948 = vadd.f32 %v2909, %v2946
        %v2949 = vadd.f32 %v2910, %v2946
        %v2950 = vadd.f32 %v2911, %v2946
        %v2951 = vadd.f32 %v2912, %v2946
        %v2952 = vadd.f32 %v2913, %v2946
        %v2953 = vadd.f32 %v2914, %v2946
        %v2954 = vadd.f32 %v2915, %v2946
        %v2955 = vadd.f32 %v2916, %v2946
        %v2956 = vadd.f32 %v2917, %v2946
        %v2957 = vadd.f32 %v2918, %v2946
        %v2958 = vadd.f32 %v2919, %v2946
        %v2959 = vadd.f32 %v2920, %v2946
        %v2960 = vadd.f32 %v2921, %v2946
        %v2961 = vadd.f32 %v2922, %v2946
        %v2962 = vadd.f32 %v2923, %v2946
        %v2963 = vadd.f32 %v2924, %v2946
        %v2964 = vadd.f32 %v2925, %v2946
        %v2965 = vadd.f32 %v2926, %v2946
        %v2966 = vadd.f32 %v2927, %v2946
        %v2967 = vadd.f32 %v2928, %v2946
        %v2968 = vadd.f32 %v2929, %v2946
        %v2969 = vadd.f32 %v2930, %v2946
        %v2970 = vadd.f32 %v2931, %v2946
        %v2971 = vadd.f32 %v2932, %v2946
        %v2972 = vadd.f32 %v2933, %v2946
        %v2973 = vadd.f32 %v2934, %v2946
        %v2974 = vadd.f32 %v2935, %v2946
        %v2975 = vadd.f32 %v2936, %v2946
        %v2976 = vadd.f32 %v2937, %v2946
        %v2977 = vadd.f32 %v2938, %v2946
        %v2978 = vadd.f32 %v2939, %v2946
        %v2979 = vadd.f32 %v2940, %v2946
        %v2980 = vadd.f32 %v2948, %v568
        %v2981 = vadd.f32 %v2949, %v569
        %v2982 = vadd.f32 %v2950, %v570
        %v2983 = vadd.f32 %v2951, %v571
        %v2984 = vadd.f32 %v2952, %v572
        %v2985 = vadd.f32 %v2953, %v573
        %v2986 = vadd.f32 %v2954, %v574
        %v2987 = vadd.f32 %v2955, %v575
        %v2988 = vadd.f32 %v2956, %v576
        %v2989 = vadd.f32 %v2957, %v577
        %v2990 = vadd.f32 %v2958, %v578
        %v2991 = vadd.f32 %v2959, %v579
        %v2992 = vadd.f32 %v2960, %v580
        %v2993 = vadd.f32 %v2961, %v581
        %v2994 = vadd.f32 %v2962, %v582
        %v2995 = vadd.f32 %v2963, %v583
        %v2996 = vadd.f32 %v2964, %v584
        %v2997 = vadd.f32 %v2965, %v585
        %v2998 = vadd.f32 %v2966, %v586
        %v2999 = vadd.f32 %v2967, %v587
        %v3000 = vadd.f32 %v2968, %v588
        %v3001 = vadd.f32 %v2969, %v589
        %v3002 = vadd.f32 %v2970, %v590
        %v3003 = vadd.f32 %v2971, %v591
        %v3004 = vadd.f32 %v2972, %v592
        %v3005 = vadd.f32 %v2973, %v593
        %v3006 = vadd.f32 %v2974, %v594
        %v3007 = vadd.f32 %v2975, %v595
        %v3008 = vadd.f32 %v2976, %v596
        %v3009 = vadd.f32 %v2977, %v597
        %v3010 = vadd.f32 %v2978, %v598
        %v3011 = vadd.f32 %v2979, %v599
        %v3012 = vmul.f32 %v2980, 0.5
        %v3013 = vmul.f32 %v2981, 0.5
        %v3014 = vmul.f32 %v2982, 0.5
        %v3015 = vmul.f32 %v2983, 0.5
        %v3016 = vmul.f32 %v2984, 0.5
        %v3017 = vmul.f32 %v2985, 0.5
        %v3018 = vmul.f32 %v2986, 0.5
        %v3019 = vmul.f32 %v2987, 0.5
        %v3020 = vadd.f32 %v3012, 0.0
        %v3021 = vadd.f32 %v3013, 0.0
        %v3022 = vadd.f32 %v3014, 0.0
        %v3023 = vadd.f32 %v3015, 0.0
        %v3024 = vadd.f32 %v3016, 0.0
        %v3025 = vadd.f32 %v3017, 0.0
        %v3026 = vadd.f32 %v3018, 0.0
        %v3027 = vadd.f32 %v3019, 0.0
        %vm3028 = vcmp.ge.f32.partialorder %v3020, 1.0
        %vm3029 = vcmp.ge.f32.partialorder %v3021, 1.0
        %vm3030 = vcmp.ge.f32.partialorder %v3022, 1.0
        %vm3031 = vcmp.ge.f32.partialorder %v3023, 1.0
        %vm3032 = vcmp.ge.f32.partialorder %v3024, 1.0
        %vm3033 = vcmp.ge.f32.partialorder %v3025, 1.0
        %vm3034 = vcmp.ge.f32.partialorder %v3026, 1.0
        %vm3035 = vcmp.ge.f32.partialorder %v3027, 1.0
        %v3036 = vsel %vm3028, 1, 0
        %v3037 = vsel %vm3029, 1, 0
        %v3038 = vsel %vm3030, 1, 0
        %v3039 = vsel %vm3031, 1, 0
        %v3040 = vsel %vm3032, 1, 0
        %v3041 = vsel %vm3033, 1, 0
        %v3042 = vsel %vm3034, 1, 0
        %v3043 = vsel %vm3035, 1, 0
        %v3044 = vcvt.s32.f32 %v3036
        %v3045 = vcvt.s32.f32 %v3037
        %v3046 = vcvt.s32.f32 %v3038
        %v3047 = vcvt.s32.f32 %v3039
        %v3048 = vcvt.s32.f32 %v3040
        %v3049 = vcvt.s32.f32 %v3041
        %v3050 = vcvt.s32.f32 %v3042
        %v3051 = vcvt.s32.f32 %v3043
        %v3052 = vsub.f32 1.0, %v3044
        %v3053 = vsub.f32 1.0, %v3045
        %v3054 = vsub.f32 1.0, %v3046
        %v3055 = vsub.f32 1.0, %v3047
        %v3056 = vsub.f32 1.0, %v3048
        %v3057 = vsub.f32 1.0, %v3049
        %v3058 = vsub.f32 1.0, %v3050
        %v3059 = vsub.f32 1.0, %v3051
        %v3060 = vmul.f32 %v3020, %v3052
        %v3061 = vmul.f32 %v3021, %v3053
        %v3062 = vmul.f32 %v3022, %v3054
        %v3063 = vmul.f32 %v3023, %v3055
        %v3064 = vmul.f32 %v3024, %v3056
        %v3065 = vmul.f32 %v3025, %v3057
        %v3066 = vmul.f32 %v3026, %v3058
        %v3067 = vmul.f32 %v3027, %v3059
        %v3068 = vsub.f32 %v2988, %v3060
        %v3069 = vsub.f32 %v2989, %v3061
        %v3070 = vsub.f32 %v2990, %v3062
        %v3071 = vsub.f32 %v2991, %v3063
        %v3072 = vsub.f32 %v2992, %v3064
        %v3073 = vsub.f32 %v2993, %v3065
        %v3074 = vsub.f32 %v2994, %v3066
        %v3075 = vsub.f32 %v2995, %v3067
        %v3076 = vmul.f32 %v3068, 0.5
        %v3077 = vmul.f32 %v3069, 0.5
        %v3078 = vmul.f32 %v3070, 0.5
        %v3079 = vmul.f32 %v3071, 0.5
        %v3080 = vmul.f32 %v3072, 0.5
        %v3081 = vmul.f32 %v3073, 0.5
        %v3082 = vmul.f32 %v3074, 0.5
        %v3083 = vmul.f32 %v3075, 0.5
        %v3084 = vadd.f32 %v3060, %v3076
        %v3085 = vadd.f32 %v3061, %v3077
        %v3086 = vadd.f32 %v3062, %v3078
        %v3087 = vadd.f32 %v3063, %v3079
        %v3088 = vadd.f32 %v3064, %v3080
        %v3089 = vadd.f32 %v3065, %v3081
        %v3090 = vadd.f32 %v3066, %v3082
        %v3091 = vadd.f32 %v3067, %v3083
        %vm3092 = vcmp.ge.f32.partialorder %v3084, 1.0
        %vm3093 = vcmp.ge.f32.partialorder %v3085, 1.0
        %vm3094 = vcmp.ge.f32.partialorder %v3086, 1.0
        %vm3095 = vcmp.ge.f32.partialorder %v3087, 1.0
        %vm3096 = vcmp.ge.f32.partialorder %v3088, 1.0
        %vm3097 = vcmp.ge.f32.partialorder %v3089, 1.0
        %vm3098 = vcmp.ge.f32.partialorder %v3090, 1.0
        %vm3099 = vcmp.ge.f32.partialorder %v3091, 1.0
        %v3100 = vsel %vm3092, 1, 0
        %v3101 = vsel %vm3093, 1, 0
        %v3102 = vsel %vm3094, 1, 0
        %v3103 = vsel %vm3095, 1, 0
        %v3104 = vsel %vm3096, 1, 0
        %v3105 = vsel %vm3097, 1, 0
        %v3106 = vsel %vm3098, 1, 0
        %v3107 = vsel %vm3099, 1, 0
        %v3108 = vcvt.s32.f32 %v3100
        %v3109 = vcvt.s32.f32 %v3101
        %v3110 = vcvt.s32.f32 %v3102
        %v3111 = vcvt.s32.f32 %v3103
        %v3112 = vcvt.s32.f32 %v3104
        %v3113 = vcvt.s32.f32 %v3105
        %v3114 = vcvt.s32.f32 %v3106
        %v3115 = vcvt.s32.f32 %v3107
        %v3116 = vsub.f32 1.0, %v3108
        %v3117 = vsub.f32 1.0, %v3109
        %v3118 = vsub.f32 1.0, %v3110
        %v3119 = vsub.f32 1.0, %v3111
        %v3120 = vsub.f32 1.0, %v3112
        %v3121 = vsub.f32 1.0, %v3113
        %v3122 = vsub.f32 1.0, %v3114
        %v3123 = vsub.f32 1.0, %v3115
        %v3124 = vmul.f32 %v3084, %v3116
        %v3125 = vmul.f32 %v3085, %v3117
        %v3126 = vmul.f32 %v3086, %v3118
        %v3127 = vmul.f32 %v3087, %v3119
        %v3128 = vmul.f32 %v3088, %v3120
        %v3129 = vmul.f32 %v3089, %v3121
        %v3130 = vmul.f32 %v3090, %v3122
        %v3131 = vmul.f32 %v3091, %v3123
        %v3132 = vsub.f32 %v2996, %v3124
        %v3133 = vsub.f32 %v2997, %v3125
        %v3134 = vsub.f32 %v2998, %v3126
        %v3135 = vsub.f32 %v2999, %v3127
        %v3136 = vsub.f32 %v3000, %v3128
        %v3137 = vsub.f32 %v3001, %v3129
        %v3138 = vsub.f32 %v3002, %v3130
        %v3139 = vsub.f32 %v3003, %v3131
        %v3140 = vmul.f32 %v3132, 0.5
        %v3141 = vmul.f32 %v3133, 0.5
        %v3142 = vmul.f32 %v3134, 0.5
        %v3143 = vmul.f32 %v3135, 0.5
        %v3144 = vmul.f32 %v3136, 0.5
        %v3145 = vmul.f32 %v3137, 0.5
        %v3146 = vmul.f32 %v3138, 0.5
        %v3147 = vmul.f32 %v3139, 0.5
        %v3148 = vadd.f32 %v3124, %v3140
        %v3149 = vadd.f32 %v3125, %v3141
        %v3150 = vadd.f32 %v3126, %v3142
        %v3151 = vadd.f32 %v3127, %v3143
        %v3152 = vadd.f32 %v3128, %v3144
        %v3153 = vadd.f32 %v3129, %v3145
        %v3154 = vadd.f32 %v3130, %v3146
        %v3155 = vadd.f32 %v3131, %v3147
        %vm3156 = vcmp.ge.f32.partialorder %v3148, 1.0
        %vm3157 = vcmp.ge.f32.partialorder %v3149, 1.0
        %vm3158 = vcmp.ge.f32.partialorder %v3150, 1.0
        %vm3159 = vcmp.ge.f32.partialorder %v3151, 1.0
        %vm3160 = vcmp.ge.f32.partialorder %v3152, 1.0
        %vm3161 = vcmp.ge.f32.partialorder %v3153, 1.0
        %vm3162 = vcmp.ge.f32.partialorder %v3154, 1.0
        %vm3163 = vcmp.ge.f32.partialorder %v3155, 1.0
        %v3164 = vsel %vm3156, 1, 0
        %v3165 = vsel %vm3157, 1, 0
        %v3166 = vsel %vm3158, 1, 0
        %v3167 = vsel %vm3159, 1, 0
        %v3168 = vsel %vm3160, 1, 0
        %v3169 = vsel %vm3161, 1, 0
        %v3170 = vsel %vm3162, 1, 0
        %v3171 = vsel %vm3163, 1, 0
        %v3172 = vcvt.s32.f32 %v3164
        %v3173 = vcvt.s32.f32 %v3165
        %v3174 = vcvt.s32.f32 %v3166
        %v3175 = vcvt.s32.f32 %v3167
        %v3176 = vcvt.s32.f32 %v3168
        %v3177 = vcvt.s32.f32 %v3169
        %v3178 = vcvt.s32.f32 %v3170
        %v3179 = vcvt.s32.f32 %v3171
        %v3180 = vsub.f32 1.0, %v3172
        %v3181 = vsub.f32 1.0, %v3173
        %v3182 = vsub.f32 1.0, %v3174
        %v3183 = vsub.f32 1.0, %v3175
        %v3184 = vsub.f32 1.0, %v3176
        %v3185 = vsub.f32 1.0, %v3177
        %v3186 = vsub.f32 1.0, %v3178
        %v3187 = vsub.f32 1.0, %v3179
        %v3188 = vmul.f32 %v3148, %v3180
        %v3189 = vmul.f32 %v3149, %v3181
        %v3190 = vmul.f32 %v3150, %v3182
        %v3191 = vmul.f32 %v3151, %v3183
        %v3192 = vmul.f32 %v3152, %v3184
        %v3193 = vmul.f32 %v3153, %v3185
        %v3194 = vmul.f32 %v3154, %v3186
        %v3195 = vmul.f32 %v3155, %v3187
        %v3196 = vsub.f32 %v3004, %v3188
        %v3197 = vsub.f32 %v3005, %v3189
        %v3198 = vsub.f32 %v3006, %v3190
        %v3199 = vsub.f32 %v3007, %v3191
        %v3200 = vsub.f32 %v3008, %v3192
        %v3201 = vsub.f32 %v3009, %v3193
        %v3202 = vsub.f32 %v3010, %v3194
        %v3203 = vsub.f32 %v3011, %v3195
        %v3204 = vmul.f32 %v3196, 0.5
        %v3205 = vmul.f32 %v3197, 0.5
        %v3206 = vmul.f32 %v3198, 0.5
        %v3207 = vmul.f32 %v3199, 0.5
        %v3208 = vmul.f32 %v3200, 0.5
        %v3209 = vmul.f32 %v3201, 0.5
        %v3210 = vmul.f32 %v3202, 0.5
        %v3211 = vmul.f32 %v3203, 0.5
        %v3212 = vadd.f32 %v3188, %v3204
        %v3213 = vadd.f32 %v3189, %v3205
        %v3214 = vadd.f32 %v3190, %v3206
        %v3215 = vadd.f32 %v3191, %v3207
        %v3216 = vadd.f32 %v3192, %v3208
        %v3217 = vadd.f32 %v3193, %v3209
        %v3218 = vadd.f32 %v3194, %v3210
        %v3219 = vadd.f32 %v3195, %v3211
        %vm3220 = vcmp.ge.f32.partialorder %v3212, 1.0
        %vm3221 = vcmp.ge.f32.partialorder %v3213, 1.0
        %vm3222 = vcmp.ge.f32.partialorder %v3214, 1.0
        %vm3223 = vcmp.ge.f32.partialorder %v3215, 1.0
        %vm3224 = vcmp.ge.f32.partialorder %v3216, 1.0
        %vm3225 = vcmp.ge.f32.partialorder %v3217, 1.0
        %vm3226 = vcmp.ge.f32.partialorder %v3218, 1.0
        %vm3227 = vcmp.ge.f32.partialorder %v3219, 1.0
        %v3228 = vsel %vm3220, 1, 0
        %v3229 = vsel %vm3221, 1, 0
        %v3230 = vsel %vm3222, 1, 0
        %v3231 = vsel %vm3223, 1, 0
        %v3232 = vsel %vm3224, 1, 0
        %v3233 = vsel %vm3225, 1, 0
        %v3234 = vsel %vm3226, 1, 0
        %v3235 = vsel %vm3227, 1, 0
        %v3236 = vcvt.s32.f32 %v3228
        %v3237 = vcvt.s32.f32 %v3229
        %v3238 = vcvt.s32.f32 %v3230
        %v3239 = vcvt.s32.f32 %v3231
        %v3240 = vcvt.s32.f32 %v3232
        %v3241 = vcvt.s32.f32 %v3233
        %v3242 = vcvt.s32.f32 %v3234
        %v3243 = vcvt.s32.f32 %v3235
        %v3244 = vpack.c.bf16 %v3045, %v3044
        %v3245 = vpack.c.bf16 %v3047, %v3046
        %v3246 = vpack.c.bf16 %v3049, %v3048
        %v3247 = vpack.c.bf16 %v3051, %v3050
        %v3248 = vpack.c.bf16 %v3109, %v3108
        %v3249 = vpack.c.bf16 %v3111, %v3110
        %v3250 = vpack.c.bf16 %v3113, %v3112
        %v3251 = vpack.c.bf16 %v3115, %v3114
        %v3252 = vpack.c.bf16 %v3173, %v3172
        %v3253 = vpack.c.bf16 %v3175, %v3174
        %v3254 = vpack.c.bf16 %v3177, %v3176
        %v3255 = vpack.c.bf16 %v3179, %v3178
        %v3256 = vpack.c.bf16 %v3237, %v3236
        %v3257 = vpack.c.bf16 %v3239, %v3238
        %v3258 = vpack.c.bf16 %v3241, %v3240
        %v3259 = vpack.c.bf16 %v3243, %v3242
        %v3260 = vld [vmem:[#allocation11] sm:$0xff]
        %v3261 = vld [vmem:[#allocation11 + $0x8] sm:$0xff]
        %v3262 = vld [vmem:[#allocation11 + $0x10] sm:$0xff]
        %v3263 = vld [vmem:[#allocation11 + $0x18] sm:$0xff]
        %v3264 = vld [vmem:[#allocation11 + $0x20] sm:$0xff]
        %v3265 = vld [vmem:[#allocation11 + $0x28] sm:$0xff]
        %v3266 = vld [vmem:[#allocation11 + $0x30] sm:$0xff]
        %v3267 = vld [vmem:[#allocation11 + $0x38] sm:$0xff]
        %v3268 = vld [vmem:[#allocation11 + $0x40] sm:$0xff]
        %v3269 = vld [vmem:[#allocation11 + $0x48] sm:$0xff]
        %v3270 = vld [vmem:[#allocation11 + $0x50] sm:$0xff]
        %v3271 = vld [vmem:[#allocation11 + $0x58] sm:$0xff]
        %v3272 = vld [vmem:[#allocation11 + $0x60] sm:$0xff]
        %v3273 = vld [vmem:[#allocation11 + $0x68] sm:$0xff]
        %v3274 = vld [vmem:[#allocation11 + $0x70] sm:$0xff]
        %v3275 = vld [vmem:[#allocation11 + $0x78] sm:$0xff]
        %v3276 = vld [vmem:[#allocation11 + $0x80] sm:$0xff]
        %v3277 = vld [vmem:[#allocation11 + $0x88] sm:$0xff]
        %v3278 = vld [vmem:[#allocation11 + $0x90] sm:$0xff]
        %v3279 = vld [vmem:[#allocation11 + $0x98] sm:$0xff]
        %v3280 = vld [vmem:[#allocation11 + $0xa0] sm:$0xff]
        %v3281 = vld [vmem:[#allocation11 + $0xa8] sm:$0xff]
        %v3282 = vld [vmem:[#allocation11 + $0xb0] sm:$0xff]
        %v3283 = vld [vmem:[#allocation11 + $0xb8] sm:$0xff]
        %v3284 = vld [vmem:[#allocation11 + $0xc0] sm:$0xff]
        %v3285 = vld [vmem:[#allocation11 + $0xc8] sm:$0xff]
        %v3286 = vld [vmem:[#allocation11 + $0xd0] sm:$0xff]
        %v3287 = vld [vmem:[#allocation11 + $0xd8] sm:$0xff]
        %v3288 = vld [vmem:[#allocation11 + $0xe0] sm:$0xff]
        %v3289 = vld [vmem:[#allocation11 + $0xe8] sm:$0xff]
        %v3290 = vld [vmem:[#allocation11 + $0xf0] sm:$0xff]
        %v3291 = vld [vmem:[#allocation11 + $0xf8] sm:$0xff]
        %v3324 = vunpack.c.l.b16 %v3260
        %v3325 = vunpack.c.h.b16 %v3260
        %v3326 = vunpack.c.l.b16 %v3261
        %v3327 = vunpack.c.h.b16 %v3261
        %v3328 = vunpack.c.l.b16 %v3262
        %v3329 = vunpack.c.h.b16 %v3262
        %v3330 = vunpack.c.l.b16 %v3263
        %v3331 = vunpack.c.h.b16 %v3263
        %v3332 = vunpack.c.l.b16 %v3264
        %v3333 = vunpack.c.h.b16 %v3264
        %v3334 = vunpack.c.l.b16 %v3265
        %v3335 = vunpack.c.h.b16 %v3265
        %v3336 = vunpack.c.l.b16 %v3266
        %v3337 = vunpack.c.h.b16 %v3266
        %v3338 = vunpack.c.l.b16 %v3267
        %v3339 = vunpack.c.h.b16 %v3267
        %v3340 = vunpack.c.l.b16 %v3268
        %v3341 = vunpack.c.h.b16 %v3268
        %v3342 = vunpack.c.l.b16 %v3269
        %v3343 = vunpack.c.h.b16 %v3269
        %v3344 = vunpack.c.l.b16 %v3270
        %v3345 = vunpack.c.h.b16 %v3270
        %v3346 = vunpack.c.l.b16 %v3271
        %v3347 = vunpack.c.h.b16 %v3271
        %v3348 = vunpack.c.l.b16 %v3272
        %v3349 = vunpack.c.h.b16 %v3272
        %v3350 = vunpack.c.l.b16 %v3273
        %v3351 = vunpack.c.h.b16 %v3273
        %v3352 = vunpack.c.l.b16 %v3274
        %v3353 = vunpack.c.h.b16 %v3274
        %v3354 = vunpack.c.l.b16 %v3275
        %v3355 = vunpack.c.h.b16 %v3275
        %v3356 = vunpack.c.l.b16 %v3276
        %v3357 = vunpack.c.h.b16 %v3276
        %v3358 = vunpack.c.l.b16 %v3277
        %v3359 = vunpack.c.h.b16 %v3277
        %v3360 = vunpack.c.l.b16 %v3278
        %v3361 = vunpack.c.h.b16 %v3278
        %v3362 = vunpack.c.l.b16 %v3279
        %v3363 = vunpack.c.h.b16 %v3279
        %v3364 = vunpack.c.l.b16 %v3280
        %v3365 = vunpack.c.h.b16 %v3280
        %v3366 = vunpack.c.l.b16 %v3281
        %v3367 = vunpack.c.h.b16 %v3281
        %v3368 = vunpack.c.l.b16 %v3282
        %v3369 = vunpack.c.h.b16 %v3282
        %v3370 = vunpack.c.l.b16 %v3283
        %v3371 = vunpack.c.h.b16 %v3283
        %v3372 = vunpack.c.l.b16 %v3284
        %v3373 = vunpack.c.h.b16 %v3284
        %v3374 = vunpack.c.l.b16 %v3285
        %v3375 = vunpack.c.h.b16 %v3285
        %v3376 = vunpack.c.l.b16 %v3286
        %v3377 = vunpack.c.h.b16 %v3286
        %v3378 = vunpack.c.l.b16 %v3287
        %v3379 = vunpack.c.h.b16 %v3287
        %v3380 = vunpack.c.l.b16 %v3288
        %v3381 = vunpack.c.h.b16 %v3288
        %v3382 = vunpack.c.l.b16 %v3289
        %v3383 = vunpack.c.h.b16 %v3289
        %v3384 = vunpack.c.l.b16 %v3290
        %v3385 = vunpack.c.h.b16 %v3290
        %v3386 = vunpack.c.l.b16 %v3291
        %v3387 = vunpack.c.h.b16 %v3291
        %v3388 = vpack.c.b16 %v3328, %v3324
        %v3389 = vpack.c.b16 %v3329, %v3325
        %v3390 = vpack.c.b16 %v3330, %v3326
        %v3391 = vpack.c.b16 %v3331, %v3327
        %v3392 = vpack.c.b16 %v3336, %v3332
        %v3393 = vpack.c.b16 %v3337, %v3333
        %v3394 = vpack.c.b16 %v3338, %v3334
        %v3395 = vpack.c.b16 %v3339, %v3335
        %v3396 = vpack.c.b16 %v3344, %v3340
        %v3397 = vpack.c.b16 %v3345, %v3341
        %v3398 = vpack.c.b16 %v3346, %v3342
        %v3399 = vpack.c.b16 %v3347, %v3343
        %v3400 = vpack.c.b16 %v3352, %v3348
        %v3401 = vpack.c.b16 %v3353, %v3349
        %v3402 = vpack.c.b16 %v3354, %v3350
        %v3403 = vpack.c.b16 %v3355, %v3351
        %v3404 = vpack.c.b16 %v3360, %v3356
        %v3405 = vpack.c.b16 %v3361, %v3357
        %v3406 = vpack.c.b16 %v3362, %v3358
        %v3407 = vpack.c.b16 %v3363, %v3359
        %v3408 = vpack.c.b16 %v3368, %v3364
        %v3409 = vpack.c.b16 %v3369, %v3365
        %v3410 = vpack.c.b16 %v3370, %v3366
        %v3411 = vpack.c.b16 %v3371, %v3367
        %v3412 = vpack.c.b16 %v3376, %v3372
        %v3413 = vpack.c.b16 %v3377, %v3373
        %v3414 = vpack.c.b16 %v3378, %v3374
        %v3415 = vpack.c.b16 %v3379, %v3375
        %v3416 = vpack.c.b16 %v3384, %v3380
        %v3417 = vpack.c.b16 %v3385, %v3381
        %v3418 = vpack.c.b16 %v3386, %v3382
        %v3419 = vpack.c.b16 %v3387, %v3383
        %3452 = vmatprep.subr.bf16.mxu0 %v3417
        %3453 = vmatpush1.bf16.msra.mxu0 %v3416
        %3454 = vmatprep.subr.bf16.mxu0 %v3413
        %3455 = vmatpush1.bf16.msra.mxu0 %v3412
        %3456 = vmatprep.subr.bf16.mxu0 %v3409
        %3457 = vmatpush1.bf16.msra.mxu0 %v3408
        %3458 = vmatprep.subr.bf16.mxu0 %v3405
        %3459 = vmatpush1.bf16.msra.mxu0 %v3404
        %3460 = vmatprep.subr.bf16.mxu0 %v3401
        %3461 = vmatpush1.bf16.msra.mxu0 %v3400
        %3462 = vmatprep.subr.bf16.mxu0 %v3397
        %3463 = vmatpush1.bf16.msra.mxu0 %v3396
        %3464 = vmatprep.subr.bf16.mxu0 %v3393
        %3465 = vmatpush1.bf16.msra.mxu0 %v3392
        %3466 = vmatprep.subr.bf16.mxu0 %v3389
        %3467 = vmatpush1.bf16.msra.mxu0 %v3388
        %3468 = vmatprep.subr.bf16.mxu0 0
        %3469 = vmatpush2.bf16.msra.mxu0 0
        %3470 = vmatprep.subr.bf16.mxu0 0
        %3471 = vmatpush2.bf16.msra.mxu0 0
        %3472 = vmatprep.subr.bf16.mxu0 0
        %3473 = vmatpush2.bf16.msra.mxu0 0
        %3474 = vmatprep.subr.bf16.mxu0 0
        %3475 = vmatpush2.bf16.msra.mxu0 0
        %3476 = vmatprep.subr.bf16.mxu0 0
        %3477 = vmatpush2.bf16.msra.mxu0 0
        %3478 = vmatprep.subr.bf16.mxu0 0
        %3479 = vmatpush2.bf16.msra.mxu0 0
        %3480 = vmatprep.subr.bf16.mxu0 0
        %3481 = vmatpush2.bf16.msra.mxu0 0
        %3482 = vmatprep.subr.bf16.mxu0 0
        %3483 = vmatpush2.bf16.msra.mxu0 0
        %3484 = vmatprep.mubr.bf16.mxu0 0
        %3485 = vmatmul.mubr.bf16.gmra.mxu0 %v3244
        %v3486 = vpop.f32.mrf.mxu0
        %v3487 = vadd.f32 0.0, %v3486
        %v3488 = vpop.f32.mrf.mxu0
        %v3489 = vadd.f32 0.0, %v3488
        %v3490 = vpop.f32.mrf.mxu0
        %v3491 = vadd.f32 0.0, %v3490
        %v3492 = vpop.f32.mrf.mxu0
        %v3493 = vadd.f32 0.0, %v3492
        %3494 = vmatprep.mubr.bf16.mxu0 0
        %3495 = vmatmul.mubr.bf16.gmra.mxu0 %v3245
        %v3496 = vpop.f32.mrf.mxu0
        %v3497 = vadd.f32 0.0, %v3496
        %v3498 = vpop.f32.mrf.mxu0
        %v3499 = vadd.f32 0.0, %v3498
        %v3500 = vpop.f32.mrf.mxu0
        %v3501 = vadd.f32 0.0, %v3500
        %v3502 = vpop.f32.mrf.mxu0
        %v3503 = vadd.f32 0.0, %v3502
        %3504 = vmatprep.mubr.bf16.mxu0 0
        %3505 = vmatmul.mubr.bf16.gmra.mxu0 %v3246
        %v3506 = vpop.f32.mrf.mxu0
        %v3507 = vadd.f32 0.0, %v3506
        %v3508 = vpop.f32.mrf.mxu0
        %v3509 = vadd.f32 0.0, %v3508
        %v3510 = vpop.f32.mrf.mxu0
        %v3511 = vadd.f32 0.0, %v3510
        %v3512 = vpop.f32.mrf.mxu0
        %v3513 = vadd.f32 0.0, %v3512
        %3514 = vmatprep.mubr.bf16.mxu0 0
        %3515 = vmatmul.mubr.bf16.gmra.mxu0 %v3247
        %v3516 = vpop.f32.mrf.mxu0
        %v3517 = vadd.f32 0.0, %v3516
        %v3518 = vpop.f32.mrf.mxu0
        %v3519 = vadd.f32 0.0, %v3518
        %v3520 = vpop.f32.mrf.mxu0
        %v3521 = vadd.f32 0.0, %v3520
        %v3522 = vpop.f32.mrf.mxu0
        %v3523 = vadd.f32 0.0, %v3522
        %3524 = vmatprep.mubr.bf16.mxu0 0
        %3525 = vmatmul.mubr.bf16.gmra.mxu0 %v3248
        %v3526 = vpop.f32.mrf.mxu0
        %v3527 = vadd.f32 0.0, %v3526
        %v3528 = vpop.f32.mrf.mxu0
        %v3529 = vadd.f32 0.0, %v3528
        %v3530 = vpop.f32.mrf.mxu0
        %v3531 = vadd.f32 0.0, %v3530
        %v3532 = vpop.f32.mrf.mxu0
        %v3533 = vadd.f32 0.0, %v3532
        %3534 = vmatprep.mubr.bf16.mxu0 0
        %3535 = vmatmul.mubr.bf16.gmra.mxu0 %v3249
        %v3536 = vpop.f32.mrf.mxu0
        %v3537 = vadd.f32 0.0, %v3536
        %v3538 = vpop.f32.mrf.mxu0
        %v3539 = vadd.f32 0.0, %v3538
        %v3540 = vpop.f32.mrf.mxu0
        %v3541 = vadd.f32 0.0, %v3540
        %v3542 = vpop.f32.mrf.mxu0
        %v3543 = vadd.f32 0.0, %v3542
        %3544 = vmatprep.mubr.bf16.mxu0 0
        %3545 = vmatmul.mubr.bf16.gmra.mxu0 %v3250
        %v3546 = vpop.f32.mrf.mxu0
        %v3547 = vadd.f32 0.0, %v3546
        %v3548 = vpop.f32.mrf.mxu0
        %v3549 = vadd.f32 0.0, %v3548
        %v3550 = vpop.f32.mrf.mxu0
        %v3551 = vadd.f32 0.0, %v3550
        %v3552 = vpop.f32.mrf.mxu0
        %v3553 = vadd.f32 0.0, %v3552
        %3554 = vmatprep.mubr.bf16.mxu0 0
        %3555 = vmatmul.mubr.bf16.gmra.mxu0 %v3251
        %v3556 = vpop.f32.mrf.mxu0
        %v3557 = vadd.f32 0.0, %v3556
        %v3558 = vpop.f32.mrf.mxu0
        %v3559 = vadd.f32 0.0, %v3558
        %v3560 = vpop.f32.mrf.mxu0
        %v3561 = vadd.f32 0.0, %v3560
        %v3562 = vpop.f32.mrf.mxu0
        %v3563 = vadd.f32 0.0, %v3562
        %3564 = vmatprep.mubr.bf16.mxu0 0
        %3565 = vmatmul.mubr.bf16.gmra.mxu0 %v3252
        %v3566 = vpop.f32.mrf.mxu0
        %v3567 = vadd.f32 0.0, %v3566
        %v3568 = vpop.f32.mrf.mxu0
        %v3569 = vadd.f32 0.0, %v3568
        %v3570 = vpop.f32.mrf.mxu0
        %v3571 = vadd.f32 0.0, %v3570
        %v3572 = vpop.f32.mrf.mxu0
        %v3573 = vadd.f32 0.0, %v3572
        %3574 = vmatprep.mubr.bf16.mxu0 0
        %3575 = vmatmul.mubr.bf16.gmra.mxu0 %v3253
        %v3576 = vpop.f32.mrf.mxu0
        %v3577 = vadd.f32 0.0, %v3576
        %v3578 = vpop.f32.mrf.mxu0
        %v3579 = vadd.f32 0.0, %v3578
        %v3580 = vpop.f32.mrf.mxu0
        %v3581 = vadd.f32 0.0, %v3580
        %v3582 = vpop.f32.mrf.mxu0
        %v3583 = vadd.f32 0.0, %v3582
        %3584 = vmatprep.mubr.bf16.mxu0 0
        %3585 = vmatmul.mubr.bf16.gmra.mxu0 %v3254
        %v3586 = vpop.f32.mrf.mxu0
        %v3587 = vadd.f32 0.0, %v3586
        %v3588 = vpop.f32.mrf.mxu0
        %v3589 = vadd.f32 0.0, %v3588
        %v3590 = vpop.f32.mrf.mxu0
        %v3591 = vadd.f32 0.0, %v3590
        %v3592 = vpop.f32.mrf.mxu0
        %v3593 = vadd.f32 0.0, %v3592
        %3594 = vmatprep.mubr.bf16.mxu0 0
        %3595 = vmatmul.mubr.bf16.gmra.mxu0 %v3255
        %v3596 = vpop.f32.mrf.mxu0
        %v3597 = vadd.f32 0.0, %v3596
        %v3598 = vpop.f32.mrf.mxu0
        %v3599 = vadd.f32 0.0, %v3598
        %v3600 = vpop.f32.mrf.mxu0
        %v3601 = vadd.f32 0.0, %v3600
        %v3602 = vpop.f32.mrf.mxu0
        %v3603 = vadd.f32 0.0, %v3602
        %3604 = vmatprep.mubr.bf16.mxu0 0
        %3605 = vmatmul.mubr.bf16.gmra.mxu0 %v3256
        %v3606 = vpop.f32.mrf.mxu0
        %v3607 = vadd.f32 0.0, %v3606
        %v3608 = vpop.f32.mrf.mxu0
        %v3609 = vadd.f32 0.0, %v3608
        %v3610 = vpop.f32.mrf.mxu0
        %v3611 = vadd.f32 0.0, %v3610
        %v3612 = vpop.f32.mrf.mxu0
        %v3613 = vadd.f32 0.0, %v3612
        %3614 = vmatprep.mubr.bf16.mxu0 0
        %3615 = vmatmul.mubr.bf16.gmra.mxu0 %v3257
        %v3616 = vpop.f32.mrf.mxu0
        %v3617 = vadd.f32 0.0, %v3616
        %v3618 = vpop.f32.mrf.mxu0
        %v3619 = vadd.f32 0.0, %v3618
        %v3620 = vpop.f32.mrf.mxu0
        %v3621 = vadd.f32 0.0, %v3620
        %v3622 = vpop.f32.mrf.mxu0
        %v3623 = vadd.f32 0.0, %v3622
        %3624 = vmatprep.mubr.bf16.mxu0 0
        %3625 = vmatmul.mubr.bf16.gmra.mxu0 %v3258
        %v3626 = vpop.f32.mrf.mxu0
        %v3627 = vadd.f32 0.0, %v3626
        %v3628 = vpop.f32.mrf.mxu0
        %v3629 = vadd.f32 0.0, %v3628
        %v3630 = vpop.f32.mrf.mxu0
        %v3631 = vadd.f32 0.0, %v3630
        %v3632 = vpop.f32.mrf.mxu0
        %v3633 = vadd.f32 0.0, %v3632
        %3634 = vmatprep.mubr.bf16.mxu0 0
        %3635 = vmatmul.mubr.bf16.gmra.mxu0 %v3259
        %v3636 = vpop.f32.mrf.mxu0
        %v3637 = vadd.f32 0.0, %v3636
        %v3638 = vpop.f32.mrf.mxu0
        %v3639 = vadd.f32 0.0, %v3638
        %v3640 = vpop.f32.mrf.mxu0
        %v3641 = vadd.f32 0.0, %v3640
        %v3642 = vpop.f32.mrf.mxu0
        %v3643 = vadd.f32 0.0, %v3642
        %3644 = vdwg.mxu0
        %3645 = vmatprep.subr.bf16.mxu0 %v3419
        %3646 = vmatpush1.bf16.msra.mxu0 %v3418
        %3647 = vmatprep.subr.bf16.mxu0 %v3415
        %3648 = vmatpush1.bf16.msra.mxu0 %v3414
        %3649 = vmatprep.subr.bf16.mxu0 %v3411
        %3650 = vmatpush1.bf16.msra.mxu0 %v3410
        %3651 = vmatprep.subr.bf16.mxu0 %v3407
        %3652 = vmatpush1.bf16.msra.mxu0 %v3406
        %3653 = vmatprep.subr.bf16.mxu0 %v3403
        %3654 = vmatpush1.bf16.msra.mxu0 %v3402
        %3655 = vmatprep.subr.bf16.mxu0 %v3399
        %3656 = vmatpush1.bf16.msra.mxu0 %v3398
        %3657 = vmatprep.subr.bf16.mxu0 %v3395
        %3658 = vmatpush1.bf16.msra.mxu0 %v3394
        %3659 = vmatprep.subr.bf16.mxu0 %v3391
        %3660 = vmatpush1.bf16.msra.mxu0 %v3390
        %3661 = vmatprep.subr.bf16.mxu0 0
        %3662 = vmatpush2.bf16.msra.mxu0 0
        %3663 = vmatprep.subr.bf16.mxu0 0
        %3664 = vmatpush2.bf16.msra.mxu0 0
        %3665 = vmatprep.subr.bf16.mxu0 0
        %3666 = vmatpush2.bf16.msra.mxu0 0
        %3667 = vmatprep.subr.bf16.mxu0 0
        %3668 = vmatpush2.bf16.msra.mxu0 0
        %3669 = vmatprep.subr.bf16.mxu0 0
        %3670 = vmatpush2.bf16.msra.mxu0 0
        %3671 = vmatprep.subr.bf16.mxu0 0
        %3672 = vmatpush2.bf16.msra.mxu0 0
        %3673 = vmatprep.subr.bf16.mxu0 0
        %3674 = vmatpush2.bf16.msra.mxu0 0
        %3675 = vmatprep.subr.bf16.mxu0 0
        %3676 = vmatpush2.bf16.msra.mxu0 0
        %3677 = vmatprep.mubr.bf16.mxu0 0
        %3678 = vmatmul.mubr.bf16.gmra.mxu0 %v3244
        %v3679 = vpop.f32.mrf.mxu0
        %v3680 = vadd.f32 0.0, %v3679
        %v3681 = vpop.f32.mrf.mxu0
        %v3682 = vadd.f32 0.0, %v3681
        %v3683 = vpop.f32.mrf.mxu0
        %v3684 = vadd.f32 0.0, %v3683
        %v3685 = vpop.f32.mrf.mxu0
        %v3686 = vadd.f32 0.0, %v3685
        %3687 = vmatprep.mubr.bf16.mxu0 0
        %3688 = vmatmul.mubr.bf16.gmra.mxu0 %v3245
        %v3689 = vpop.f32.mrf.mxu0
        %v3690 = vadd.f32 0.0, %v3689
        %v3691 = vpop.f32.mrf.mxu0
        %v3692 = vadd.f32 0.0, %v3691
        %v3693 = vpop.f32.mrf.mxu0
        %v3694 = vadd.f32 0.0, %v3693
        %v3695 = vpop.f32.mrf.mxu0
        %v3696 = vadd.f32 0.0, %v3695
        %3697 = vmatprep.mubr.bf16.mxu0 0
        %3698 = vmatmul.mubr.bf16.gmra.mxu0 %v3246
        %v3699 = vpop.f32.mrf.mxu0
        %v3700 = vadd.f32 0.0, %v3699
        %v3701 = vpop.f32.mrf.mxu0
        %v3702 = vadd.f32 0.0, %v3701
        %v3703 = vpop.f32.mrf.mxu0
        %v3704 = vadd.f32 0.0, %v3703
        %v3705 = vpop.f32.mrf.mxu0
        %v3706 = vadd.f32 0.0, %v3705
        %3707 = vmatprep.mubr.bf16.mxu0 0
        %3708 = vmatmul.mubr.bf16.gmra.mxu0 %v3247
        %v3709 = vpop.f32.mrf.mxu0
        %v3710 = vadd.f32 0.0, %v3709
        %v3711 = vpop.f32.mrf.mxu0
        %v3712 = vadd.f32 0.0, %v3711
        %v3713 = vpop.f32.mrf.mxu0
        %v3714 = vadd.f32 0.0, %v3713
        %v3715 = vpop.f32.mrf.mxu0
        %v3716 = vadd.f32 0.0, %v3715
        %3717 = vmatprep.mubr.bf16.mxu0 0
        %3718 = vmatmul.mubr.bf16.gmra.mxu0 %v3248
        %v3719 = vpop.f32.mrf.mxu0
        %v3720 = vadd.f32 0.0, %v3719
        %v3721 = vpop.f32.mrf.mxu0
        %v3722 = vadd.f32 0.0, %v3721
        %v3723 = vpop.f32.mrf.mxu0
        %v3724 = vadd.f32 0.0, %v3723
        %v3725 = vpop.f32.mrf.mxu0
        %v3726 = vadd.f32 0.0, %v3725
        %3727 = vmatprep.mubr.bf16.mxu0 0
        %3728 = vmatmul.mubr.bf16.gmra.mxu0 %v3249
        %v3729 = vpop.f32.mrf.mxu0
        %v3730 = vadd.f32 0.0, %v3729
        %v3731 = vpop.f32.mrf.mxu0
        %v3732 = vadd.f32 0.0, %v3731
        %v3733 = vpop.f32.mrf.mxu0
        %v3734 = vadd.f32 0.0, %v3733
        %v3735 = vpop.f32.mrf.mxu0
        %v3736 = vadd.f32 0.0, %v3735
        %3737 = vmatprep.mubr.bf16.mxu0 0
        %3738 = vmatmul.mubr.bf16.gmra.mxu0 %v3250
        %v3739 = vpop.f32.mrf.mxu0
        %v3740 = vadd.f32 0.0, %v3739
        %v3741 = vpop.f32.mrf.mxu0
        %v3742 = vadd.f32 0.0, %v3741
        %v3743 = vpop.f32.mrf.mxu0
        %v3744 = vadd.f32 0.0, %v3743
        %v3745 = vpop.f32.mrf.mxu0
        %v3746 = vadd.f32 0.0, %v3745
        %3747 = vmatprep.mubr.bf16.mxu0 0
        %3748 = vmatmul.mubr.bf16.gmra.mxu0 %v3251
        %v3749 = vpop.f32.mrf.mxu0
        %v3750 = vadd.f32 0.0, %v3749
        %v3751 = vpop.f32.mrf.mxu0
        %v3752 = vadd.f32 0.0, %v3751
        %v3753 = vpop.f32.mrf.mxu0
        %v3754 = vadd.f32 0.0, %v3753
        %v3755 = vpop.f32.mrf.mxu0
        %v3756 = vadd.f32 0.0, %v3755
        %3757 = vmatprep.mubr.bf16.mxu0 0
        %3758 = vmatmul.mubr.bf16.gmra.mxu0 %v3252
        %v3759 = vpop.f32.mrf.mxu0
        %v3760 = vadd.f32 0.0, %v3759
        %v3761 = vpop.f32.mrf.mxu0
        %v3762 = vadd.f32 0.0, %v3761
        %v3763 = vpop.f32.mrf.mxu0
        %v3764 = vadd.f32 0.0, %v3763
        %v3765 = vpop.f32.mrf.mxu0
        %v3766 = vadd.f32 0.0, %v3765
        %3767 = vmatprep.mubr.bf16.mxu0 0
        %3768 = vmatmul.mubr.bf16.gmra.mxu0 %v3253
        %v3769 = vpop.f32.mrf.mxu0
        %v3770 = vadd.f32 0.0, %v3769
        %v3771 = vpop.f32.mrf.mxu0
        %v3772 = vadd.f32 0.0, %v3771
        %v3773 = vpop.f32.mrf.mxu0
        %v3774 = vadd.f32 0.0, %v3773
        %v3775 = vpop.f32.mrf.mxu0
        %v3776 = vadd.f32 0.0, %v3775
        %3777 = vmatprep.mubr.bf16.mxu0 0
        %3778 = vmatmul.mubr.bf16.gmra.mxu0 %v3254
        %v3779 = vpop.f32.mrf.mxu0
        %v3780 = vadd.f32 0.0, %v3779
        %v3781 = vpop.f32.mrf.mxu0
        %v3782 = vadd.f32 0.0, %v3781
        %v3783 = vpop.f32.mrf.mxu0
        %v3784 = vadd.f32 0.0, %v3783
        %v3785 = vpop.f32.mrf.mxu0
        %v3786 = vadd.f32 0.0, %v3785
        %3787 = vmatprep.mubr.bf16.mxu0 0
        %3788 = vmatmul.mubr.bf16.gmra.mxu0 %v3255
        %v3789 = vpop.f32.mrf.mxu0
        %v3790 = vadd.f32 0.0, %v3789
        %v3791 = vpop.f32.mrf.mxu0
        %v3792 = vadd.f32 0.0, %v3791
        %v3793 = vpop.f32.mrf.mxu0
        %v3794 = vadd.f32 0.0, %v3793
        %v3795 = vpop.f32.mrf.mxu0
        %v3796 = vadd.f32 0.0, %v3795
        %3797 = vmatprep.mubr.bf16.mxu0 0
        %3798 = vmatmul.mubr.bf16.gmra.mxu0 %v3256
        %v3799 = vpop.f32.mrf.mxu0
        %v3800 = vadd.f32 0.0, %v3799
        %v3801 = vpop.f32.mrf.mxu0
        %v3802 = vadd.f32 0.0, %v3801
        %v3803 = vpop.f32.mrf.mxu0
        %v3804 = vadd.f32 0.0, %v3803
        %v3805 = vpop.f32.mrf.mxu0
        %v3806 = vadd.f32 0.0, %v3805
        %3807 = vmatprep.mubr.bf16.mxu0 0
        %3808 = vmatmul.mubr.bf16.gmra.mxu0 %v3257
        %v3809 = vpop.f32.mrf.mxu0
        %v3810 = vadd.f32 0.0, %v3809
        %v3811 = vpop.f32.mrf.mxu0
        %v3812 = vadd.f32 0.0, %v3811
        %v3813 = vpop.f32.mrf.mxu0
        %v3814 = vadd.f32 0.0, %v3813
        %v3815 = vpop.f32.mrf.mxu0
        %v3816 = vadd.f32 0.0, %v3815
        %3817 = vmatprep.mubr.bf16.mxu0 0
        %3818 = vmatmul.mubr.bf16.gmra.mxu0 %v3258
        %v3819 = vpop.f32.mrf.mxu0
        %v3820 = vadd.f32 0.0, %v3819
        %v3821 = vpop.f32.mrf.mxu0
        %v3822 = vadd.f32 0.0, %v3821
        %v3823 = vpop.f32.mrf.mxu0
        %v3824 = vadd.f32 0.0, %v3823
        %v3825 = vpop.f32.mrf.mxu0
        %v3826 = vadd.f32 0.0, %v3825
        %3827 = vmatprep.mubr.bf16.mxu0 0
        %3828 = vmatmul.mubr.bf16.gmra.mxu0 %v3259
        %v3829 = vpop.f32.mrf.mxu0
        %v3830 = vadd.f32 0.0, %v3829
        %v3831 = vpop.f32.mrf.mxu0
        %v3832 = vadd.f32 0.0, %v3831
        %v3833 = vpop.f32.mrf.mxu0
        %v3834 = vadd.f32 0.0, %v3833
        %v3835 = vpop.f32.mrf.mxu0
        %v3836 = vadd.f32 0.0, %v3835
        %3837 = vdwg.mxu0
        %v3838 = vld [vmem:[%s8] sm:$0xf]
        %v3840 = vlaneseq
        %v3841 = vshrl.u32 %v3840, 7
        %v3842 = vsub.s32 0, %v3841
        %v3843 = vrot.slane %v3838, %v3842
        %v3844 = vlaneseq
        %v3845 = vshrl.u32 %v3844, 7
        %v3846 = vsub.s32 1, %v3845
        %v3847 = vrot.slane %v3838, %v3846
        %v3848 = vlaneseq
        %v3849 = vshrl.u32 %v3848, 7
        %v3850 = vsub.s32 2, %v3849
        %v3851 = vrot.slane %v3838, %v3850
        %v3852 = vlaneseq
        %v3853 = vshrl.u32 %v3852, 7
        %v3854 = vsub.s32 3, %v3853
        %v3855 = vrot.slane %v3838, %v3854
        %v3860 = vmul.f32 %v3487, %v3843
        %v3861 = vmul.f32 %v3489, %v3847
        %v3862 = vmul.f32 %v3680, %v3851
        %v3863 = vmul.f32 %v3682, %v3855
        %v3864 = vmul.f32 %v3491, %v3843
        %v3865 = vmul.f32 %v3493, %v3847
        %v3866 = vmul.f32 %v3684, %v3851
        %v3867 = vmul.f32 %v3686, %v3855
        %v3868 = vmul.f32 %v3497, %v3843
        %v3869 = vmul.f32 %v3499, %v3847
        %v3870 = vmul.f32 %v3690, %v3851
        %v3871 = vmul.f32 %v3692, %v3855
        %v3872 = vmul.f32 %v3501, %v3843
        %v3873 = vmul.f32 %v3503, %v3847
        %v3874 = vmul.f32 %v3694, %v3851
        %v3875 = vmul.f32 %v3696, %v3855
        %v3876 = vmul.f32 %v3507, %v3843
        %v3877 = vmul.f32 %v3509, %v3847
        %v3878 = vmul.f32 %v3700, %v3851
        %v3879 = vmul.f32 %v3702, %v3855
        %v3880 = vmul.f32 %v3511, %v3843
        %v3881 = vmul.f32 %v3513, %v3847
        %v3882 = vmul.f32 %v3704, %v3851
        %v3883 = vmul.f32 %v3706, %v3855
        %v3884 = vmul.f32 %v3517, %v3843
        %v3885 = vmul.f32 %v3519, %v3847
        %v3886 = vmul.f32 %v3710, %v3851
        %v3887 = vmul.f32 %v3712, %v3855
        %v3888 = vmul.f32 %v3521, %v3843
        %v3889 = vmul.f32 %v3523, %v3847
        %v3890 = vmul.f32 %v3714, %v3851
        %v3891 = vmul.f32 %v3716, %v3855
        %v3892 = vmul.f32 %v3527, %v3843
        %v3893 = vmul.f32 %v3529, %v3847
        %v3894 = vmul.f32 %v3720, %v3851
        %v3895 = vmul.f32 %v3722, %v3855
        %v3896 = vmul.f32 %v3531, %v3843
        %v3897 = vmul.f32 %v3533, %v3847
        %v3898 = vmul.f32 %v3724, %v3851
        %v3899 = vmul.f32 %v3726, %v3855
        %v3900 = vmul.f32 %v3537, %v3843
        %v3901 = vmul.f32 %v3539, %v3847
        %v3902 = vmul.f32 %v3730, %v3851
        %v3903 = vmul.f32 %v3732, %v3855
        %v3904 = vmul.f32 %v3541, %v3843
        %v3905 = vmul.f32 %v3543, %v3847
        %v3906 = vmul.f32 %v3734, %v3851
        %v3907 = vmul.f32 %v3736, %v3855
        %v3908 = vmul.f32 %v3547, %v3843
        %v3909 = vmul.f32 %v3549, %v3847
        %v3910 = vmul.f32 %v3740, %v3851
        %v3911 = vmul.f32 %v3742, %v3855
        %v3912 = vmul.f32 %v3551, %v3843
        %v3913 = vmul.f32 %v3553, %v3847
        %v3914 = vmul.f32 %v3744, %v3851
        %v3915 = vmul.f32 %v3746, %v3855
        %v3916 = vmul.f32 %v3557, %v3843
        %v3917 = vmul.f32 %v3559, %v3847
        %v3918 = vmul.f32 %v3750, %v3851
        %v3919 = vmul.f32 %v3752, %v3855
        %v3920 = vmul.f32 %v3561, %v3843
        %v3921 = vmul.f32 %v3563, %v3847
        %v3922 = vmul.f32 %v3754, %v3851
        %v3923 = vmul.f32 %v3756, %v3855
        %v3924 = vmul.f32 %v3567, %v3843
        %v3925 = vmul.f32 %v3569, %v3847
        %v3926 = vmul.f32 %v3760, %v3851
        %v3927 = vmul.f32 %v3762, %v3855
        %v3928 = vmul.f32 %v3571, %v3843
        %v3929 = vmul.f32 %v3573, %v3847
        %v3930 = vmul.f32 %v3764, %v3851
        %v3931 = vmul.f32 %v3766, %v3855
        %v3932 = vmul.f32 %v3577, %v3843
        %v3933 = vmul.f32 %v3579, %v3847
        %v3934 = vmul.f32 %v3770, %v3851
        %v3935 = vmul.f32 %v3772, %v3855
        %v3936 = vmul.f32 %v3581, %v3843
        %v3937 = vmul.f32 %v3583, %v3847
        %v3938 = vmul.f32 %v3774, %v3851
        %v3939 = vmul.f32 %v3776, %v3855
        %v3940 = vmul.f32 %v3587, %v3843
        %v3941 = vmul.f32 %v3589, %v3847
        %v3942 = vmul.f32 %v3780, %v3851
        %v3943 = vmul.f32 %v3782, %v3855
        %v3944 = vmul.f32 %v3591, %v3843
        %v3945 = vmul.f32 %v3593, %v3847
        %v3946 = vmul.f32 %v3784, %v3851
        %v3947 = vmul.f32 %v3786, %v3855
        %v3948 = vmul.f32 %v3597, %v3843
        %v3949 = vmul.f32 %v3599, %v3847
        %v3950 = vmul.f32 %v3790, %v3851
        %v3951 = vmul.f32 %v3792, %v3855
        %v3952 = vmul.f32 %v3601, %v3843
        %v3953 = vmul.f32 %v3603, %v3847
        %v3954 = vmul.f32 %v3794, %v3851
        %v3955 = vmul.f32 %v3796, %v3855
        %v3956 = vmul.f32 %v3607, %v3843
        %v3957 = vmul.f32 %v3609, %v3847
        %v3958 = vmul.f32 %v3800, %v3851
        %v3959 = vmul.f32 %v3802, %v3855
        %v3960 = vmul.f32 %v3611, %v3843
        %v3961 = vmul.f32 %v3613, %v3847
        %v3962 = vmul.f32 %v3804, %v3851
        %v3963 = vmul.f32 %v3806, %v3855
        %v3964 = vmul.f32 %v3617, %v3843
        %v3965 = vmul.f32 %v3619, %v3847
        %v3966 = vmul.f32 %v3810, %v3851
        %v3967 = vmul.f32 %v3812, %v3855
        %v3968 = vmul.f32 %v3621, %v3843
        %v3969 = vmul.f32 %v3623, %v3847
        %v3970 = vmul.f32 %v3814, %v3851
        %v3971 = vmul.f32 %v3816, %v3855
        %v3972 = vmul.f32 %v3627, %v3843
        %v3973 = vmul.f32 %v3629, %v3847
        %v3974 = vmul.f32 %v3820, %v3851
        %v3975 = vmul.f32 %v3822, %v3855
        %v3976 = vmul.f32 %v3631, %v3843
        %v3977 = vmul.f32 %v3633, %v3847
        %v3978 = vmul.f32 %v3824, %v3851
        %v3979 = vmul.f32 %v3826, %v3855
        %v3980 = vmul.f32 %v3637, %v3843
        %v3981 = vmul.f32 %v3639, %v3847
        %v3982 = vmul.f32 %v3830, %v3851
        %v3983 = vmul.f32 %v3832, %v3855
        %v3984 = vmul.f32 %v3641, %v3843
        %v3985 = vmul.f32 %v3643, %v3847
        %v3986 = vmul.f32 %v3834, %v3851
        %v3987 = vmul.f32 %v3836, %v3855
        %v3988 = vld [vmem:[%s9] sm:$0xf]
        %v3990 = vlaneseq
        %v3991 = vshrl.u32 %v3990, 7
        %v3992 = vsub.s32 0, %v3991
        %v3993 = vrot.slane %v3988, %v3992
        %v3994 = vlaneseq
        %v3995 = vshrl.u32 %v3994, 7
        %v3996 = vsub.s32 1, %v3995
        %v3997 = vrot.slane %v3988, %v3996
        %v3998 = vlaneseq
        %v3999 = vshrl.u32 %v3998, 7
        %v4000 = vsub.s32 2, %v3999
        %v4001 = vrot.slane %v3988, %v4000
        %v4002 = vlaneseq
        %v4003 = vshrl.u32 %v4002, 7
        %v4004 = vsub.s32 3, %v4003
        %v4005 = vrot.slane %v3988, %v4004
        %v4010 = vadd.f32 %v3860, %v3993
        %v4011 = vadd.f32 %v3861, %v3997
        %v4012 = vadd.f32 %v3862, %v4001
        %v4013 = vadd.f32 %v3863, %v4005
        %v4014 = vadd.f32 %v3864, %v3993
        %v4015 = vadd.f32 %v3865, %v3997
        %v4016 = vadd.f32 %v3866, %v4001
        %v4017 = vadd.f32 %v3867, %v4005
        %v4018 = vadd.f32 %v3868, %v3993
        %v4019 = vadd.f32 %v3869, %v3997
        %v4020 = vadd.f32 %v3870, %v4001
        %v4021 = vadd.f32 %v3871, %v4005
        %v4022 = vadd.f32 %v3872, %v3993
        %v4023 = vadd.f32 %v3873, %v3997
        %v4024 = vadd.f32 %v3874, %v4001
        %v4025 = vadd.f32 %v3875, %v4005
        %v4026 = vadd.f32 %v3876, %v3993
        %v4027 = vadd.f32 %v3877, %v3997
        %v4028 = vadd.f32 %v3878, %v4001
        %v4029 = vadd.f32 %v3879, %v4005
        %v4030 = vadd.f32 %v3880, %v3993
        %v4031 = vadd.f32 %v3881, %v3997
        %v4032 = vadd.f32 %v3882, %v4001
        %v4033 = vadd.f32 %v3883, %v4005
        %v4034 = vadd.f32 %v3884, %v3993
        %v4035 = vadd.f32 %v3885, %v3997
        %v4036 = vadd.f32 %v3886, %v4001
        %v4037 = vadd.f32 %v3887, %v4005
        %v4038 = vadd.f32 %v3888, %v3993
        %v4039 = vadd.f32 %v3889, %v3997
        %v4040 = vadd.f32 %v3890, %v4001
        %v4041 = vadd.f32 %v3891, %v4005
        %v4042 = vadd.f32 %v3892, %v3993
        %v4043 = vadd.f32 %v3893, %v3997
        %v4044 = vadd.f32 %v3894, %v4001
        %v4045 = vadd.f32 %v3895, %v4005
        %v4046 = vadd.f32 %v3896, %v3993
        %v4047 = vadd.f32 %v3897, %v3997
        %v4048 = vadd.f32 %v3898, %v4001
        %v4049 = vadd.f32 %v3899, %v4005
        %v4050 = vadd.f32 %v3900, %v3993
        %v4051 = vadd.f32 %v3901, %v3997
        %v4052 = vadd.f32 %v3902, %v4001
        %v4053 = vadd.f32 %v3903, %v4005
        %v4054 = vadd.f32 %v3904, %v3993
        %v4055 = vadd.f32 %v3905, %v3997
        %v4056 = vadd.f32 %v3906, %v4001
        %v4057 = vadd.f32 %v3907, %v4005
        %v4058 = vadd.f32 %v3908, %v3993
        %v4059 = vadd.f32 %v3909, %v3997
        %v4060 = vadd.f32 %v3910, %v4001
        %v4061 = vadd.f32 %v3911, %v4005
        %v4062 = vadd.f32 %v3912, %v3993
        %v4063 = vadd.f32 %v3913, %v3997
        %v4064 = vadd.f32 %v3914, %v4001
        %v4065 = vadd.f32 %v3915, %v4005
        %v4066 = vadd.f32 %v3916, %v3993
        %v4067 = vadd.f32 %v3917, %v3997
        %v4068 = vadd.f32 %v3918, %v4001
        %v4069 = vadd.f32 %v3919, %v4005
        %v4070 = vadd.f32 %v3920, %v3993
        %v4071 = vadd.f32 %v3921, %v3997
        %v4072 = vadd.f32 %v3922, %v4001
        %v4073 = vadd.f32 %v3923, %v4005
        %v4074 = vadd.f32 %v3924, %v3993
        %v4075 = vadd.f32 %v3925, %v3997
        %v4076 = vadd.f32 %v3926, %v4001
        %v4077 = vadd.f32 %v3927, %v4005
        %v4078 = vadd.f32 %v3928, %v3993
        %v4079 = vadd.f32 %v3929, %v3997
        %v4080 = vadd.f32 %v3930, %v4001
        %v4081 = vadd.f32 %v3931, %v4005
        %v4082 = vadd.f32 %v3932, %v3993
        %v4083 = vadd.f32 %v3933, %v3997
        %v4084 = vadd.f32 %v3934, %v4001
        %v4085 = vadd.f32 %v3935, %v4005
        %v4086 = vadd.f32 %v3936, %v3993
        %v4087 = vadd.f32 %v3937, %v3997
        %v4088 = vadd.f32 %v3938, %v4001
        %v4089 = vadd.f32 %v3939, %v4005
        %v4090 = vadd.f32 %v3940, %v3993
        %v4091 = vadd.f32 %v3941, %v3997
        %v4092 = vadd.f32 %v3942, %v4001
        %v4093 = vadd.f32 %v3943, %v4005
        %v4094 = vadd.f32 %v3944, %v3993
        %v4095 = vadd.f32 %v3945, %v3997
        %v4096 = vadd.f32 %v3946, %v4001
        %v4097 = vadd.f32 %v3947, %v4005
        %v4098 = vadd.f32 %v3948, %v3993
        %v4099 = vadd.f32 %v3949, %v3997
        %v4100 = vadd.f32 %v3950, %v4001
        %v4101 = vadd.f32 %v3951, %v4005
        %v4102 = vadd.f32 %v3952, %v3993
        %v4103 = vadd.f32 %v3953, %v3997
        %v4104 = vadd.f32 %v3954, %v4001
        %v4105 = vadd.f32 %v3955, %v4005
        %v4106 = vadd.f32 %v3956, %v3993
        %v4107 = vadd.f32 %v3957, %v3997
        %v4108 = vadd.f32 %v3958, %v4001
        %v4109 = vadd.f32 %v3959, %v4005
        %v4110 = vadd.f32 %v3960, %v3993
        %v4111 = vadd.f32 %v3961, %v3997
        %v4112 = vadd.f32 %v3962, %v4001
        %v4113 = vadd.f32 %v3963, %v4005
        %v4114 = vadd.f32 %v3964, %v3993
        %v4115 = vadd.f32 %v3965, %v3997
        %v4116 = vadd.f32 %v3966, %v4001
        %v4117 = vadd.f32 %v3967, %v4005
        %v4118 = vadd.f32 %v3968, %v3993
        %v4119 = vadd.f32 %v3969, %v3997
        %v4120 = vadd.f32 %v3970, %v4001
        %v4121 = vadd.f32 %v3971, %v4005
        %v4122 = vadd.f32 %v3972, %v3993
        %v4123 = vadd.f32 %v3973, %v3997
        %v4124 = vadd.f32 %v3974, %v4001
        %v4125 = vadd.f32 %v3975, %v4005
        %v4126 = vadd.f32 %v3976, %v3993
        %v4127 = vadd.f32 %v3977, %v3997
        %v4128 = vadd.f32 %v3978, %v4001
        %v4129 = vadd.f32 %v3979, %v4005
        %v4130 = vadd.f32 %v3980, %v3993
        %v4131 = vadd.f32 %v3981, %v3997
        %v4132 = vadd.f32 %v3982, %v4001
        %v4133 = vadd.f32 %v3983, %v4005
        %v4134 = vadd.f32 %v3984, %v3993
        %v4135 = vadd.f32 %v3985, %v3997
        %v4136 = vadd.f32 %v3986, %v4001
        %v4137 = vadd.f32 %v3987, %v4005
        %v4138 = vmul.f32 %v4010, 0.5
        %v4139 = vmul.f32 %v4011, 0.5
        %v4140 = vmul.f32 %v4012, 0.5
        %v4141 = vmul.f32 %v4013, 0.5
        %v4142 = vmul.f32 %v4014, 0.5
        %v4143 = vmul.f32 %v4015, 0.5
        %v4144 = vmul.f32 %v4016, 0.5
        %v4145 = vmul.f32 %v4017, 0.5
        %v4146 = vmul.f32 %v4018, 0.5
        %v4147 = vmul.f32 %v4019, 0.5
        %v4148 = vmul.f32 %v4020, 0.5
        %v4149 = vmul.f32 %v4021, 0.5
        %v4150 = vmul.f32 %v4022, 0.5
        %v4151 = vmul.f32 %v4023, 0.5
        %v4152 = vmul.f32 %v4024, 0.5
        %v4153 = vmul.f32 %v4025, 0.5
        %v4154 = vmul.f32 %v4026, 0.5
        %v4155 = vmul.f32 %v4027, 0.5
        %v4156 = vmul.f32 %v4028, 0.5
        %v4157 = vmul.f32 %v4029, 0.5
        %v4158 = vmul.f32 %v4030, 0.5
        %v4159 = vmul.f32 %v4031, 0.5
        %v4160 = vmul.f32 %v4032, 0.5
        %v4161 = vmul.f32 %v4033, 0.5
        %v4162 = vmul.f32 %v4034, 0.5
        %v4163 = vmul.f32 %v4035, 0.5
        %v4164 = vmul.f32 %v4036, 0.5
        %v4165 = vmul.f32 %v4037, 0.5
        %v4166 = vmul.f32 %v4038, 0.5
        %v4167 = vmul.f32 %v4039, 0.5
        %v4168 = vmul.f32 %v4040, 0.5
        %v4169 = vmul.f32 %v4041, 0.5
        %v4170 = vadd.f32 %v4138, 0.0
        %v4171 = vadd.f32 %v4139, 0.0
        %v4172 = vadd.f32 %v4140, 0.0
        %v4173 = vadd.f32 %v4141, 0.0
        %v4174 = vadd.f32 %v4142, 0.0
        %v4175 = vadd.f32 %v4143, 0.0
        %v4176 = vadd.f32 %v4144, 0.0
        %v4177 = vadd.f32 %v4145, 0.0
        %v4178 = vadd.f32 %v4146, 0.0
        %v4179 = vadd.f32 %v4147, 0.0
        %v4180 = vadd.f32 %v4148, 0.0
        %v4181 = vadd.f32 %v4149, 0.0
        %v4182 = vadd.f32 %v4150, 0.0
        %v4183 = vadd.f32 %v4151, 0.0
        %v4184 = vadd.f32 %v4152, 0.0
        %v4185 = vadd.f32 %v4153, 0.0
        %v4186 = vadd.f32 %v4154, 0.0
        %v4187 = vadd.f32 %v4155, 0.0
        %v4188 = vadd.f32 %v4156, 0.0
        %v4189 = vadd.f32 %v4157, 0.0
        %v4190 = vadd.f32 %v4158, 0.0
        %v4191 = vadd.f32 %v4159, 0.0
        %v4192 = vadd.f32 %v4160, 0.0
        %v4193 = vadd.f32 %v4161, 0.0
        %v4194 = vadd.f32 %v4162, 0.0
        %v4195 = vadd.f32 %v4163, 0.0
        %v4196 = vadd.f32 %v4164, 0.0
        %v4197 = vadd.f32 %v4165, 0.0
        %v4198 = vadd.f32 %v4166, 0.0
        %v4199 = vadd.f32 %v4167, 0.0
        %v4200 = vadd.f32 %v4168, 0.0
        %v4201 = vadd.f32 %v4169, 0.0
        %vm4202 = vcmp.ge.f32.partialorder %v4170, 1.0
        %vm4203 = vcmp.ge.f32.partialorder %v4171, 1.0
        %vm4204 = vcmp.ge.f32.partialorder %v4172, 1.0
        %vm4205 = vcmp.ge.f32.partialorder %v4173, 1.0
        %vm4206 = vcmp.ge.f32.partialorder %v4174, 1.0
        %vm4207 = vcmp.ge.f32.partialorder %v4175, 1.0
        %vm4208 = vcmp.ge.f32.partialorder %v4176, 1.0
        %vm4209 = vcmp.ge.f32.partialorder %v4177, 1.0
        %vm4210 = vcmp.ge.f32.partialorder %v4178, 1.0
        %vm4211 = vcmp.ge.f32.partialorder %v4179, 1.0
        %vm4212 = vcmp.ge.f32.partialorder %v4180, 1.0
        %vm4213 = vcmp.ge.f32.partialorder %v4181, 1.0
        %vm4214 = vcmp.ge.f32.partialorder %v4182, 1.0
        %vm4215 = vcmp.ge.f32.partialorder %v4183, 1.0
        %vm4216 = vcmp.ge.f32.partialorder %v4184, 1.0
        %vm4217 = vcmp.ge.f32.partialorder %v4185, 1.0
        %vm4218 = vcmp.ge.f32.partialorder %v4186, 1.0
        %vm4219 = vcmp.ge.f32.partialorder %v4187, 1.0
        %vm4220 = vcmp.ge.f32.partialorder %v4188, 1.0
        %vm4221 = vcmp.ge.f32.partialorder %v4189, 1.0
        %vm4222 = vcmp.ge.f32.partialorder %v4190, 1.0
        %vm4223 = vcmp.ge.f32.partialorder %v4191, 1.0
        %vm4224 = vcmp.ge.f32.partialorder %v4192, 1.0
        %vm4225 = vcmp.ge.f32.partialorder %v4193, 1.0
        %vm4226 = vcmp.ge.f32.partialorder %v4194, 1.0
        %vm4227 = vcmp.ge.f32.partialorder %v4195, 1.0
        %vm4228 = vcmp.ge.f32.partialorder %v4196, 1.0
        %vm4229 = vcmp.ge.f32.partialorder %v4197, 1.0
        %vm4230 = vcmp.ge.f32.partialorder %v4198, 1.0
        %vm4231 = vcmp.ge.f32.partialorder %v4199, 1.0
        %vm4232 = vcmp.ge.f32.partialorder %v4200, 1.0
        %vm4233 = vcmp.ge.f32.partialorder %v4201, 1.0
        %v4234 = vsel %vm4202, 1, 0
        %v4235 = vsel %vm4203, 1, 0
        %v4236 = vsel %vm4204, 1, 0
        %v4237 = vsel %vm4205, 1, 0
        %v4238 = vsel %vm4206, 1, 0
        %v4239 = vsel %vm4207, 1, 0
        %v4240 = vsel %vm4208, 1, 0
        %v4241 = vsel %vm4209, 1, 0
        %v4242 = vsel %vm4210, 1, 0
        %v4243 = vsel %vm4211, 1, 0
        %v4244 = vsel %vm4212, 1, 0
        %v4245 = vsel %vm4213, 1, 0
        %v4246 = vsel %vm4214, 1, 0
        %v4247 = vsel %vm4215, 1, 0
        %v4248 = vsel %vm4216, 1, 0
        %v4249 = vsel %vm4217, 1, 0
        %v4250 = vsel %vm4218, 1, 0
        %v4251 = vsel %vm4219, 1, 0
        %v4252 = vsel %vm4220, 1, 0
        %v4253 = vsel %vm4221, 1, 0
        %v4254 = vsel %vm4222, 1, 0
        %v4255 = vsel %vm4223, 1, 0
        %v4256 = vsel %vm4224, 1, 0
        %v4257 = vsel %vm4225, 1, 0
        %v4258 = vsel %vm4226, 1, 0
        %v4259 = vsel %vm4227, 1, 0
        %v4260 = vsel %vm4228, 1, 0
        %v4261 = vsel %vm4229, 1, 0
        %v4262 = vsel %vm4230, 1, 0
        %v4263 = vsel %vm4231, 1, 0
        %v4264 = vsel %vm4232, 1, 0
        %v4265 = vsel %vm4233, 1, 0
        %v4266 = vcvt.s32.f32 %v4234
        %v4267 = vcvt.s32.f32 %v4235
        %v4268 = vcvt.s32.f32 %v4236
        %v4269 = vcvt.s32.f32 %v4237
        %v4270 = vcvt.s32.f32 %v4238
        %v4271 = vcvt.s32.f32 %v4239
        %v4272 = vcvt.s32.f32 %v4240
        %v4273 = vcvt.s32.f32 %v4241
        %v4274 = vcvt.s32.f32 %v4242
        %v4275 = vcvt.s32.f32 %v4243
        %v4276 = vcvt.s32.f32 %v4244
        %v4277 = vcvt.s32.f32 %v4245
        %v4278 = vcvt.s32.f32 %v4246
        %v4279 = vcvt.s32.f32 %v4247
        %v4280 = vcvt.s32.f32 %v4248
        %v4281 = vcvt.s32.f32 %v4249
        %v4282 = vcvt.s32.f32 %v4250
        %v4283 = vcvt.s32.f32 %v4251
        %v4284 = vcvt.s32.f32 %v4252
        %v4285 = vcvt.s32.f32 %v4253
        %v4286 = vcvt.s32.f32 %v4254
        %v4287 = vcvt.s32.f32 %v4255
        %v4288 = vcvt.s32.f32 %v4256
        %v4289 = vcvt.s32.f32 %v4257
        %v4290 = vcvt.s32.f32 %v4258
        %v4291 = vcvt.s32.f32 %v4259
        %v4292 = vcvt.s32.f32 %v4260
        %v4293 = vcvt.s32.f32 %v4261
        %v4294 = vcvt.s32.f32 %v4262
        %v4295 = vcvt.s32.f32 %v4263
        %v4296 = vcvt.s32.f32 %v4264
        %v4297 = vcvt.s32.f32 %v4265
        %v4298 = vsub.f32 1.0, %v4266
        %v4299 = vsub.f32 1.0, %v4267
        %v4300 = vsub.f32 1.0, %v4268
        %v4301 = vsub.f32 1.0, %v4269
        %v4302 = vsub.f32 1.0, %v4270
        %v4303 = vsub.f32 1.0, %v4271
        %v4304 = vsub.f32 1.0, %v4272
        %v4305 = vsub.f32 1.0, %v4273
        %v4306 = vsub.f32 1.0, %v4274
        %v4307 = vsub.f32 1.0, %v4275
        %v4308 = vsub.f32 1.0, %v4276
        %v4309 = vsub.f32 1.0, %v4277
        %v4310 = vsub.f32 1.0, %v4278
        %v4311 = vsub.f32 1.0, %v4279
        %v4312 = vsub.f32 1.0, %v4280
        %v4313 = vsub.f32 1.0, %v4281
        %v4314 = vsub.f32 1.0, %v4282
        %v4315 = vsub.f32 1.0, %v4283
        %v4316 = vsub.f32 1.0, %v4284
        %v4317 = vsub.f32 1.0, %v4285
        %v4318 = vsub.f32 1.0, %v4286
        %v4319 = vsub.f32 1.0, %v4287
        %v4320 = vsub.f32 1.0, %v4288
        %v4321 = vsub.f32 1.0, %v4289
        %v4322 = vsub.f32 1.0, %v4290
        %v4323 = vsub.f32 1.0, %v4291
        %v4324 = vsub.f32 1.0, %v4292
        %v4325 = vsub.f32 1.0, %v4293
        %v4326 = vsub.f32 1.0, %v4294
        %v4327 = vsub.f32 1.0, %v4295
        %v4328 = vsub.f32 1.0, %v4296
        %v4329 = vsub.f32 1.0, %v4297
        %v4330 = vmul.f32 %v4170, %v4298
        %v4331 = vmul.f32 %v4171, %v4299
        %v4332 = vmul.f32 %v4172, %v4300
        %v4333 = vmul.f32 %v4173, %v4301
        %v4334 = vmul.f32 %v4174, %v4302
        %v4335 = vmul.f32 %v4175, %v4303
        %v4336 = vmul.f32 %v4176, %v4304
        %v4337 = vmul.f32 %v4177, %v4305
        %v4338 = vmul.f32 %v4178, %v4306
        %v4339 = vmul.f32 %v4179, %v4307
        %v4340 = vmul.f32 %v4180, %v4308
        %v4341 = vmul.f32 %v4181, %v4309
        %v4342 = vmul.f32 %v4182, %v4310
        %v4343 = vmul.f32 %v4183, %v4311
        %v4344 = vmul.f32 %v4184, %v4312
        %v4345 = vmul.f32 %v4185, %v4313
        %v4346 = vmul.f32 %v4186, %v4314
        %v4347 = vmul.f32 %v4187, %v4315
        %v4348 = vmul.f32 %v4188, %v4316
        %v4349 = vmul.f32 %v4189, %v4317
        %v4350 = vmul.f32 %v4190, %v4318
        %v4351 = vmul.f32 %v4191, %v4319
        %v4352 = vmul.f32 %v4192, %v4320
        %v4353 = vmul.f32 %v4193, %v4321
        %v4354 = vmul.f32 %v4194, %v4322
        %v4355 = vmul.f32 %v4195, %v4323
        %v4356 = vmul.f32 %v4196, %v4324
        %v4357 = vmul.f32 %v4197, %v4325
        %v4358 = vmul.f32 %v4198, %v4326
        %v4359 = vmul.f32 %v4199, %v4327
        %v4360 = vmul.f32 %v4200, %v4328
        %v4361 = vmul.f32 %v4201, %v4329
        %v4362 = vsub.f32 %v4042, %v4330
        %v4363 = vsub.f32 %v4043, %v4331
        %v4364 = vsub.f32 %v4044, %v4332
        %v4365 = vsub.f32 %v4045, %v4333
        %v4366 = vsub.f32 %v4046, %v4334
        %v4367 = vsub.f32 %v4047, %v4335
        %v4368 = vsub.f32 %v4048, %v4336
        %v4369 = vsub.f32 %v4049, %v4337
        %v4370 = vsub.f32 %v4050, %v4338
        %v4371 = vsub.f32 %v4051, %v4339
        %v4372 = vsub.f32 %v4052, %v4340
        %v4373 = vsub.f32 %v4053, %v4341
        %v4374 = vsub.f32 %v4054, %v4342
        %v4375 = vsub.f32 %v4055, %v4343
        %v4376 = vsub.f32 %v4056, %v4344
        %v4377 = vsub.f32 %v4057, %v4345
        %v4378 = vsub.f32 %v4058, %v4346
        %v4379 = vsub.f32 %v4059, %v4347
        %v4380 = vsub.f32 %v4060, %v4348
        %v4381 = vsub.f32 %v4061, %v4349
        %v4382 = vsub.f32 %v4062, %v4350
        %v4383 = vsub.f32 %v4063, %v4351
        %v4384 = vsub.f32 %v4064, %v4352
        %v4385 = vsub.f32 %v4065, %v4353
        %v4386 = vsub.f32 %v4066, %v4354
        %v4387 = vsub.f32 %v4067, %v4355
        %v4388 = vsub.f32 %v4068, %v4356
        %v4389 = vsub.f32 %v4069, %v4357
        %v4390 = vsub.f32 %v4070, %v4358
        %v4391 = vsub.f32 %v4071, %v4359
        %v4392 = vsub.f32 %v4072, %v4360
        %v4393 = vsub.f32 %v4073, %v4361
        %v4394 = vmul.f32 %v4362, 0.5
        %v4395 = vmul.f32 %v4363, 0.5
        %v4396 = vmul.f32 %v4364, 0.5
        %v4397 = vmul.f32 %v4365, 0.5
        %v4398 = vmul.f32 %v4366, 0.5
        %v4399 = vmul.f32 %v4367, 0.5
        %v4400 = vmul.f32 %v4368, 0.5
        %v4401 = vmul.f32 %v4369, 0.5
        %v4402 = vmul.f32 %v4370, 0.5
        %v4403 = vmul.f32 %v4371, 0.5
        %v4404 = vmul.f32 %v4372, 0.5
        %v4405 = vmul.f32 %v4373, 0.5
        %v4406 = vmul.f32 %v4374, 0.5
        %v4407 = vmul.f32 %v4375, 0.5
        %v4408 = vmul.f32 %v4376, 0.5
        %v4409 = vmul.f32 %v4377, 0.5
        %v4410 = vmul.f32 %v4378, 0.5
        %v4411 = vmul.f32 %v4379, 0.5
        %v4412 = vmul.f32 %v4380, 0.5
        %v4413 = vmul.f32 %v4381, 0.5
        %v4414 = vmul.f32 %v4382, 0.5
        %v4415 = vmul.f32 %v4383, 0.5
        %v4416 = vmul.f32 %v4384, 0.5
        %v4417 = vmul.f32 %v4385, 0.5
        %v4418 = vmul.f32 %v4386, 0.5
        %v4419 = vmul.f32 %v4387, 0.5
        %v4420 = vmul.f32 %v4388, 0.5
        %v4421 = vmul.f32 %v4389, 0.5
        %v4422 = vmul.f32 %v4390, 0.5
        %v4423 = vmul.f32 %v4391, 0.5
        %v4424 = vmul.f32 %v4392, 0.5
        %v4425 = vmul.f32 %v4393, 0.5
        %v4426 = vadd.f32 %v4330, %v4394
        %v4427 = vadd.f32 %v4331, %v4395
        %v4428 = vadd.f32 %v4332, %v4396
        %v4429 = vadd.f32 %v4333, %v4397
        %v4430 = vadd.f32 %v4334, %v4398
        %v4431 = vadd.f32 %v4335, %v4399
        %v4432 = vadd.f32 %v4336, %v4400
        %v4433 = vadd.f32 %v4337, %v4401
        %v4434 = vadd.f32 %v4338, %v4402
        %v4435 = vadd.f32 %v4339, %v4403
        %v4436 = vadd.f32 %v4340, %v4404
        %v4437 = vadd.f32 %v4341, %v4405
        %v4438 = vadd.f32 %v4342, %v4406
        %v4439 = vadd.f32 %v4343, %v4407
        %v4440 = vadd.f32 %v4344, %v4408
        %v4441 = vadd.f32 %v4345, %v4409
        %v4442 = vadd.f32 %v4346, %v4410
        %v4443 = vadd.f32 %v4347, %v4411
        %v4444 = vadd.f32 %v4348, %v4412
        %v4445 = vadd.f32 %v4349, %v4413
        %v4446 = vadd.f32 %v4350, %v4414
        %v4447 = vadd.f32 %v4351, %v4415
        %v4448 = vadd.f32 %v4352, %v4416
        %v4449 = vadd.f32 %v4353, %v4417
        %v4450 = vadd.f32 %v4354, %v4418
        %v4451 = vadd.f32 %v4355, %v4419
        %v4452 = vadd.f32 %v4356, %v4420
        %v4453 = vadd.f32 %v4357, %v4421
        %v4454 = vadd.f32 %v4358, %v4422
        %v4455 = vadd.f32 %v4359, %v4423
        %v4456 = vadd.f32 %v4360, %v4424
        %v4457 = vadd.f32 %v4361, %v4425
        %vm4458 = vcmp.ge.f32.partialorder %v4426, 1.0
        %vm4459 = vcmp.ge.f32.partialorder %v4427, 1.0
        %vm4460 = vcmp.ge.f32.partialorder %v4428, 1.0
        %vm4461 = vcmp.ge.f32.partialorder %v4429, 1.0
        %vm4462 = vcmp.ge.f32.partialorder %v4430, 1.0
        %vm4463 = vcmp.ge.f32.partialorder %v4431, 1.0
        %vm4464 = vcmp.ge.f32.partialorder %v4432, 1.0
        %vm4465 = vcmp.ge.f32.partialorder %v4433, 1.0
        %vm4466 = vcmp.ge.f32.partialorder %v4434, 1.0
        %vm4467 = vcmp.ge.f32.partialorder %v4435, 1.0
        %vm4468 = vcmp.ge.f32.partialorder %v4436, 1.0
        %vm4469 = vcmp.ge.f32.partialorder %v4437, 1.0
        %vm4470 = vcmp.ge.f32.partialorder %v4438, 1.0
        %vm4471 = vcmp.ge.f32.partialorder %v4439, 1.0
        %vm4472 = vcmp.ge.f32.partialorder %v4440, 1.0
        %vm4473 = vcmp.ge.f32.partialorder %v4441, 1.0
        %vm4474 = vcmp.ge.f32.partialorder %v4442, 1.0
        %vm4475 = vcmp.ge.f32.partialorder %v4443, 1.0
        %vm4476 = vcmp.ge.f32.partialorder %v4444, 1.0
        %vm4477 = vcmp.ge.f32.partialorder %v4445, 1.0
        %vm4478 = vcmp.ge.f32.partialorder %v4446, 1.0
        %vm4479 = vcmp.ge.f32.partialorder %v4447, 1.0
        %vm4480 = vcmp.ge.f32.partialorder %v4448, 1.0
        %vm4481 = vcmp.ge.f32.partialorder %v4449, 1.0
        %vm4482 = vcmp.ge.f32.partialorder %v4450, 1.0
        %vm4483 = vcmp.ge.f32.partialorder %v4451, 1.0
        %vm4484 = vcmp.ge.f32.partialorder %v4452, 1.0
        %vm4485 = vcmp.ge.f32.partialorder %v4453, 1.0
        %vm4486 = vcmp.ge.f32.partialorder %v4454, 1.0
        %vm4487 = vcmp.ge.f32.partialorder %v4455, 1.0
        %vm4488 = vcmp.ge.f32.partialorder %v4456, 1.0
        %vm4489 = vcmp.ge.f32.partialorder %v4457, 1.0
        %v4490 = vsel %vm4458, 1, 0
        %v4491 = vsel %vm4459, 1, 0
        %v4492 = vsel %vm4460, 1, 0
        %v4493 = vsel %vm4461, 1, 0
        %v4494 = vsel %vm4462, 1, 0
        %v4495 = vsel %vm4463, 1, 0
        %v4496 = vsel %vm4464, 1, 0
        %v4497 = vsel %vm4465, 1, 0
        %v4498 = vsel %vm4466, 1, 0
        %v4499 = vsel %vm4467, 1, 0
        %v4500 = vsel %vm4468, 1, 0
        %v4501 = vsel %vm4469, 1, 0
        %v4502 = vsel %vm4470, 1, 0
        %v4503 = vsel %vm4471, 1, 0
        %v4504 = vsel %vm4472, 1, 0
        %v4505 = vsel %vm4473, 1, 0
        %v4506 = vsel %vm4474, 1, 0
        %v4507 = vsel %vm4475, 1, 0
        %v4508 = vsel %vm4476, 1, 0
        %v4509 = vsel %vm4477, 1, 0
        %v4510 = vsel %vm4478, 1, 0
        %v4511 = vsel %vm4479, 1, 0
        %v4512 = vsel %vm4480, 1, 0
        %v4513 = vsel %vm4481, 1, 0
        %v4514 = vsel %vm4482, 1, 0
        %v4515 = vsel %vm4483, 1, 0
        %v4516 = vsel %vm4484, 1, 0
        %v4517 = vsel %vm4485, 1, 0
        %v4518 = vsel %vm4486, 1, 0
        %v4519 = vsel %vm4487, 1, 0
        %v4520 = vsel %vm4488, 1, 0
        %v4521 = vsel %vm4489, 1, 0
        %v4522 = vcvt.s32.f32 %v4490
        %v4523 = vcvt.s32.f32 %v4491
        %v4524 = vcvt.s32.f32 %v4492
        %v4525 = vcvt.s32.f32 %v4493
        %v4526 = vcvt.s32.f32 %v4494
        %v4527 = vcvt.s32.f32 %v4495
        %v4528 = vcvt.s32.f32 %v4496
        %v4529 = vcvt.s32.f32 %v4497
        %v4530 = vcvt.s32.f32 %v4498
        %v4531 = vcvt.s32.f32 %v4499
        %v4532 = vcvt.s32.f32 %v4500
        %v4533 = vcvt.s32.f32 %v4501
        %v4534 = vcvt.s32.f32 %v4502
        %v4535 = vcvt.s32.f32 %v4503
        %v4536 = vcvt.s32.f32 %v4504
        %v4537 = vcvt.s32.f32 %v4505
        %v4538 = vcvt.s32.f32 %v4506
        %v4539 = vcvt.s32.f32 %v4507
        %v4540 = vcvt.s32.f32 %v4508
        %v4541 = vcvt.s32.f32 %v4509
        %v4542 = vcvt.s32.f32 %v4510
        %v4543 = vcvt.s32.f32 %v4511
        %v4544 = vcvt.s32.f32 %v4512
        %v4545 = vcvt.s32.f32 %v4513
        %v4546 = vcvt.s32.f32 %v4514
        %v4547 = vcvt.s32.f32 %v4515
        %v4548 = vcvt.s32.f32 %v4516
        %v4549 = vcvt.s32.f32 %v4517
        %v4550 = vcvt.s32.f32 %v4518
        %v4551 = vcvt.s32.f32 %v4519
        %v4552 = vcvt.s32.f32 %v4520
        %v4553 = vcvt.s32.f32 %v4521
        %v4554 = vsub.f32 1.0, %v4522
        %v4555 = vsub.f32 1.0, %v4523
        %v4556 = vsub.f32 1.0, %v4524
        %v4557 = vsub.f32 1.0, %v4525
        %v4558 = vsub.f32 1.0, %v4526
        %v4559 = vsub.f32 1.0, %v4527
        %v4560 = vsub.f32 1.0, %v4528
        %v4561 = vsub.f32 1.0, %v4529
        %v4562 = vsub.f32 1.0, %v4530
        %v4563 = vsub.f32 1.0, %v4531
        %v4564 = vsub.f32 1.0, %v4532
        %v4565 = vsub.f32 1.0, %v4533
        %v4566 = vsub.f32 1.0, %v4534
        %v4567 = vsub.f32 1.0, %v4535
        %v4568 = vsub.f32 1.0, %v4536
        %v4569 = vsub.f32 1.0, %v4537
        %v4570 = vsub.f32 1.0, %v4538
        %v4571 = vsub.f32 1.0, %v4539
        %v4572 = vsub.f32 1.0, %v4540
        %v4573 = vsub.f32 1.0, %v4541
        %v4574 = vsub.f32 1.0, %v4542
        %v4575 = vsub.f32 1.0, %v4543
        %v4576 = vsub.f32 1.0, %v4544
        %v4577 = vsub.f32 1.0, %v4545
        %v4578 = vsub.f32 1.0, %v4546
        %v4579 = vsub.f32 1.0, %v4547
        %v4580 = vsub.f32 1.0, %v4548
        %v4581 = vsub.f32 1.0, %v4549
        %v4582 = vsub.f32 1.0, %v4550
        %v4583 = vsub.f32 1.0, %v4551
        %v4584 = vsub.f32 1.0, %v4552
        %v4585 = vsub.f32 1.0, %v4553
        %v4586 = vmul.f32 %v4426, %v4554
        %v4587 = vmul.f32 %v4427, %v4555
        %v4588 = vmul.f32 %v4428, %v4556
        %v4589 = vmul.f32 %v4429, %v4557
        %v4590 = vmul.f32 %v4430, %v4558
        %v4591 = vmul.f32 %v4431, %v4559
        %v4592 = vmul.f32 %v4432, %v4560
        %v4593 = vmul.f32 %v4433, %v4561
        %v4594 = vmul.f32 %v4434, %v4562
        %v4595 = vmul.f32 %v4435, %v4563
        %v4596 = vmul.f32 %v4436, %v4564
        %v4597 = vmul.f32 %v4437, %v4565
        %v4598 = vmul.f32 %v4438, %v4566
        %v4599 = vmul.f32 %v4439, %v4567
        %v4600 = vmul.f32 %v4440, %v4568
        %v4601 = vmul.f32 %v4441, %v4569
        %v4602 = vmul.f32 %v4442, %v4570
        %v4603 = vmul.f32 %v4443, %v4571
        %v4604 = vmul.f32 %v4444, %v4572
        %v4605 = vmul.f32 %v4445, %v4573
        %v4606 = vmul.f32 %v4446, %v4574
        %v4607 = vmul.f32 %v4447, %v4575
        %v4608 = vmul.f32 %v4448, %v4576
        %v4609 = vmul.f32 %v4449, %v4577
        %v4610 = vmul.f32 %v4450, %v4578
        %v4611 = vmul.f32 %v4451, %v4579
        %v4612 = vmul.f32 %v4452, %v4580
        %v4613 = vmul.f32 %v4453, %v4581
        %v4614 = vmul.f32 %v4454, %v4582
        %v4615 = vmul.f32 %v4455, %v4583
        %v4616 = vmul.f32 %v4456, %v4584
        %v4617 = vmul.f32 %v4457, %v4585
        %v4618 = vsub.f32 %v4074, %v4586
        %v4619 = vsub.f32 %v4075, %v4587
        %v4620 = vsub.f32 %v4076, %v4588
        %v4621 = vsub.f32 %v4077, %v4589
        %v4622 = vsub.f32 %v4078, %v4590
        %v4623 = vsub.f32 %v4079, %v4591
        %v4624 = vsub.f32 %v4080, %v4592
        %v4625 = vsub.f32 %v4081, %v4593
        %v4626 = vsub.f32 %v4082, %v4594
        %v4627 = vsub.f32 %v4083, %v4595
        %v4628 = vsub.f32 %v4084, %v4596
        %v4629 = vsub.f32 %v4085, %v4597
        %v4630 = vsub.f32 %v4086, %v4598
        %v4631 = vsub.f32 %v4087, %v4599
        %v4632 = vsub.f32 %v4088, %v4600
        %v4633 = vsub.f32 %v4089, %v4601
        %v4634 = vsub.f32 %v4090, %v4602
        %v4635 = vsub.f32 %v4091, %v4603
        %v4636 = vsub.f32 %v4092, %v4604
        %v4637 = vsub.f32 %v4093, %v4605
        %v4638 = vsub.f32 %v4094, %v4606
        %v4639 = vsub.f32 %v4095, %v4607
        %v4640 = vsub.f32 %v4096, %v4608
        %v4641 = vsub.f32 %v4097, %v4609
        %v4642 = vsub.f32 %v4098, %v4610
        %v4643 = vsub.f32 %v4099, %v4611
        %v4644 = vsub.f32 %v4100, %v4612
        %v4645 = vsub.f32 %v4101, %v4613
        %v4646 = vsub.f32 %v4102, %v4614
        %v4647 = vsub.f32 %v4103, %v4615
        %v4648 = vsub.f32 %v4104, %v4616
        %v4649 = vsub.f32 %v4105, %v4617
        %v4650 = vmul.f32 %v4618, 0.5
        %v4651 = vmul.f32 %v4619, 0.5
        %v4652 = vmul.f32 %v4620, 0.5
        %v4653 = vmul.f32 %v4621, 0.5
        %v4654 = vmul.f32 %v4622, 0.5
        %v4655 = vmul.f32 %v4623, 0.5
        %v4656 = vmul.f32 %v4624, 0.5
        %v4657 = vmul.f32 %v4625, 0.5
        %v4658 = vmul.f32 %v4626, 0.5
        %v4659 = vmul.f32 %v4627, 0.5
        %v4660 = vmul.f32 %v4628, 0.5
        %v4661 = vmul.f32 %v4629, 0.5
        %v4662 = vmul.f32 %v4630, 0.5
        %v4663 = vmul.f32 %v4631, 0.5
        %v4664 = vmul.f32 %v4632, 0.5
        %v4665 = vmul.f32 %v4633, 0.5
        %v4666 = vmul.f32 %v4634, 0.5
        %v4667 = vmul.f32 %v4635, 0.5
        %v4668 = vmul.f32 %v4636, 0.5
        %v4669 = vmul.f32 %v4637, 0.5
        %v4670 = vmul.f32 %v4638, 0.5
        %v4671 = vmul.f32 %v4639, 0.5
        %v4672 = vmul.f32 %v4640, 0.5
        %v4673 = vmul.f32 %v4641, 0.5
        %v4674 = vmul.f32 %v4642, 0.5
        %v4675 = vmul.f32 %v4643, 0.5
        %v4676 = vmul.f32 %v4644, 0.5
        %v4677 = vmul.f32 %v4645, 0.5
        %v4678 = vmul.f32 %v4646, 0.5
        %v4679 = vmul.f32 %v4647, 0.5
        %v4680 = vmul.f32 %v4648, 0.5
        %v4681 = vmul.f32 %v4649, 0.5
        %v4682 = vadd.f32 %v4586, %v4650
        %v4683 = vadd.f32 %v4587, %v4651
        %v4684 = vadd.f32 %v4588, %v4652
        %v4685 = vadd.f32 %v4589, %v4653
        %v4686 = vadd.f32 %v4590, %v4654
        %v4687 = vadd.f32 %v4591, %v4655
        %v4688 = vadd.f32 %v4592, %v4656
        %v4689 = vadd.f32 %v4593, %v4657
        %v4690 = vadd.f32 %v4594, %v4658
        %v4691 = vadd.f32 %v4595, %v4659
        %v4692 = vadd.f32 %v4596, %v4660
        %v4693 = vadd.f32 %v4597, %v4661
        %v4694 = vadd.f32 %v4598, %v4662
        %v4695 = vadd.f32 %v4599, %v4663
        %v4696 = vadd.f32 %v4600, %v4664
        %v4697 = vadd.f32 %v4601, %v4665
        %v4698 = vadd.f32 %v4602, %v4666
        %v4699 = vadd.f32 %v4603, %v4667
        %v4700 = vadd.f32 %v4604, %v4668
        %v4701 = vadd.f32 %v4605, %v4669
        %v4702 = vadd.f32 %v4606, %v4670
        %v4703 = vadd.f32 %v4607, %v4671
        %v4704 = vadd.f32 %v4608, %v4672
        %v4705 = vadd.f32 %v4609, %v4673
        %v4706 = vadd.f32 %v4610, %v4674
        %v4707 = vadd.f32 %v4611, %v4675
        %v4708 = vadd.f32 %v4612, %v4676
        %v4709 = vadd.f32 %v4613, %v4677
        %v4710 = vadd.f32 %v4614, %v4678
        %v4711 = vadd.f32 %v4615, %v4679
        %v4712 = vadd.f32 %v4616, %v4680
        %v4713 = vadd.f32 %v4617, %v4681
        %vm4714 = vcmp.ge.f32.partialorder %v4682, 1.0
        %vm4715 = vcmp.ge.f32.partialorder %v4683, 1.0
        %vm4716 = vcmp.ge.f32.partialorder %v4684, 1.0
        %vm4717 = vcmp.ge.f32.partialorder %v4685, 1.0
        %vm4718 = vcmp.ge.f32.partialorder %v4686, 1.0
        %vm4719 = vcmp.ge.f32.partialorder %v4687, 1.0
        %vm4720 = vcmp.ge.f32.partialorder %v4688, 1.0
        %vm4721 = vcmp.ge.f32.partialorder %v4689, 1.0
        %vm4722 = vcmp.ge.f32.partialorder %v4690, 1.0
        %vm4723 = vcmp.ge.f32.partialorder %v4691, 1.0
        %vm4724 = vcmp.ge.f32.partialorder %v4692, 1.0
        %vm4725 = vcmp.ge.f32.partialorder %v4693, 1.0
        %vm4726 = vcmp.ge.f32.partialorder %v4694, 1.0
        %vm4727 = vcmp.ge.f32.partialorder %v4695, 1.0
        %vm4728 = vcmp.ge.f32.partialorder %v4696, 1.0
        %vm4729 = vcmp.ge.f32.partialorder %v4697, 1.0
        %vm4730 = vcmp.ge.f32.partialorder %v4698, 1.0
        %vm4731 = vcmp.ge.f32.partialorder %v4699, 1.0
        %vm4732 = vcmp.ge.f32.partialorder %v4700, 1.0
        %vm4733 = vcmp.ge.f32.partialorder %v4701, 1.0
        %vm4734 = vcmp.ge.f32.partialorder %v4702, 1.0
        %vm4735 = vcmp.ge.f32.partialorder %v4703, 1.0
        %vm4736 = vcmp.ge.f32.partialorder %v4704, 1.0
        %vm4737 = vcmp.ge.f32.partialorder %v4705, 1.0
        %vm4738 = vcmp.ge.f32.partialorder %v4706, 1.0
        %vm4739 = vcmp.ge.f32.partialorder %v4707, 1.0
        %vm4740 = vcmp.ge.f32.partialorder %v4708, 1.0
        %vm4741 = vcmp.ge.f32.partialorder %v4709, 1.0
        %vm4742 = vcmp.ge.f32.partialorder %v4710, 1.0
        %vm4743 = vcmp.ge.f32.partialorder %v4711, 1.0
        %vm4744 = vcmp.ge.f32.partialorder %v4712, 1.0
        %vm4745 = vcmp.ge.f32.partialorder %v4713, 1.0
        %v4746 = vsel %vm4714, 1, 0
        %v4747 = vsel %vm4715, 1, 0
        %v4748 = vsel %vm4716, 1, 0
        %v4749 = vsel %vm4717, 1, 0
        %v4750 = vsel %vm4718, 1, 0
        %v4751 = vsel %vm4719, 1, 0
        %v4752 = vsel %vm4720, 1, 0
        %v4753 = vsel %vm4721, 1, 0
        %v4754 = vsel %vm4722, 1, 0
        %v4755 = vsel %vm4723, 1, 0
        %v4756 = vsel %vm4724, 1, 0
        %v4757 = vsel %vm4725, 1, 0
        %v4758 = vsel %vm4726, 1, 0
        %v4759 = vsel %vm4727, 1, 0
        %v4760 = vsel %vm4728, 1, 0
        %v4761 = vsel %vm4729, 1, 0
        %v4762 = vsel %vm4730, 1, 0
        %v4763 = vsel %vm4731, 1, 0
        %v4764 = vsel %vm4732, 1, 0
        %v4765 = vsel %vm4733, 1, 0
        %v4766 = vsel %vm4734, 1, 0
        %v4767 = vsel %vm4735, 1, 0
        %v4768 = vsel %vm4736, 1, 0
        %v4769 = vsel %vm4737, 1, 0
        %v4770 = vsel %vm4738, 1, 0
        %v4771 = vsel %vm4739, 1, 0
        %v4772 = vsel %vm4740, 1, 0
        %v4773 = vsel %vm4741, 1, 0
        %v4774 = vsel %vm4742, 1, 0
        %v4775 = vsel %vm4743, 1, 0
        %v4776 = vsel %vm4744, 1, 0
        %v4777 = vsel %vm4745, 1, 0
        %v4778 = vcvt.s32.f32 %v4746
        %v4779 = vcvt.s32.f32 %v4747
        %v4780 = vcvt.s32.f32 %v4748
        %v4781 = vcvt.s32.f32 %v4749
        %v4782 = vcvt.s32.f32 %v4750
        %v4783 = vcvt.s32.f32 %v4751
        %v4784 = vcvt.s32.f32 %v4752
        %v4785 = vcvt.s32.f32 %v4753
        %v4786 = vcvt.s32.f32 %v4754
        %v4787 = vcvt.s32.f32 %v4755
        %v4788 = vcvt.s32.f32 %v4756
        %v4789 = vcvt.s32.f32 %v4757
        %v4790 = vcvt.s32.f32 %v4758
        %v4791 = vcvt.s32.f32 %v4759
        %v4792 = vcvt.s32.f32 %v4760
        %v4793 = vcvt.s32.f32 %v4761
        %v4794 = vcvt.s32.f32 %v4762
        %v4795 = vcvt.s32.f32 %v4763
        %v4796 = vcvt.s32.f32 %v4764
        %v4797 = vcvt.s32.f32 %v4765
        %v4798 = vcvt.s32.f32 %v4766
        %v4799 = vcvt.s32.f32 %v4767
        %v4800 = vcvt.s32.f32 %v4768
        %v4801 = vcvt.s32.f32 %v4769
        %v4802 = vcvt.s32.f32 %v4770
        %v4803 = vcvt.s32.f32 %v4771
        %v4804 = vcvt.s32.f32 %v4772
        %v4805 = vcvt.s32.f32 %v4773
        %v4806 = vcvt.s32.f32 %v4774
        %v4807 = vcvt.s32.f32 %v4775
        %v4808 = vcvt.s32.f32 %v4776
        %v4809 = vcvt.s32.f32 %v4777
        %v4810 = vsub.f32 1.0, %v4778
        %v4811 = vsub.f32 1.0, %v4779
        %v4812 = vsub.f32 1.0, %v4780
        %v4813 = vsub.f32 1.0, %v4781
        %v4814 = vsub.f32 1.0, %v4782
        %v4815 = vsub.f32 1.0, %v4783
        %v4816 = vsub.f32 1.0, %v4784
        %v4817 = vsub.f32 1.0, %v4785
        %v4818 = vsub.f32 1.0, %v4786
        %v4819 = vsub.f32 1.0, %v4787
        %v4820 = vsub.f32 1.0, %v4788
        %v4821 = vsub.f32 1.0, %v4789
        %v4822 = vsub.f32 1.0, %v4790
        %v4823 = vsub.f32 1.0, %v4791
        %v4824 = vsub.f32 1.0, %v4792
        %v4825 = vsub.f32 1.0, %v4793
        %v4826 = vsub.f32 1.0, %v4794
        %v4827 = vsub.f32 1.0, %v4795
        %v4828 = vsub.f32 1.0, %v4796
        %v4829 = vsub.f32 1.0, %v4797
        %v4830 = vsub.f32 1.0, %v4798
        %v4831 = vsub.f32 1.0, %v4799
        %v4832 = vsub.f32 1.0, %v4800
        %v4833 = vsub.f32 1.0, %v4801
        %v4834 = vsub.f32 1.0, %v4802
        %v4835 = vsub.f32 1.0, %v4803
        %v4836 = vsub.f32 1.0, %v4804
        %v4837 = vsub.f32 1.0, %v4805
        %v4838 = vsub.f32 1.0, %v4806
        %v4839 = vsub.f32 1.0, %v4807
        %v4840 = vsub.f32 1.0, %v4808
        %v4841 = vsub.f32 1.0, %v4809
        %v4842 = vmul.f32 %v4682, %v4810
        %v4843 = vmul.f32 %v4683, %v4811
        %v4844 = vmul.f32 %v4684, %v4812
        %v4845 = vmul.f32 %v4685, %v4813
        %v4846 = vmul.f32 %v4686, %v4814
        %v4847 = vmul.f32 %v4687, %v4815
        %v4848 = vmul.f32 %v4688, %v4816
        %v4849 = vmul.f32 %v4689, %v4817
        %v4850 = vmul.f32 %v4690, %v4818
        %v4851 = vmul.f32 %v4691, %v4819
        %v4852 = vmul.f32 %v4692, %v4820
        %v4853 = vmul.f32 %v4693, %v4821
        %v4854 = vmul.f32 %v4694, %v4822
        %v4855 = vmul.f32 %v4695, %v4823
        %v4856 = vmul.f32 %v4696, %v4824
        %v4857 = vmul.f32 %v4697, %v4825
        %v4858 = vmul.f32 %v4698, %v4826
        %v4859 = vmul.f32 %v4699, %v4827
        %v4860 = vmul.f32 %v4700, %v4828
        %v4861 = vmul.f32 %v4701, %v4829
        %v4862 = vmul.f32 %v4702, %v4830
        %v4863 = vmul.f32 %v4703, %v4831
        %v4864 = vmul.f32 %v4704, %v4832
        %v4865 = vmul.f32 %v4705, %v4833
        %v4866 = vmul.f32 %v4706, %v4834
        %v4867 = vmul.f32 %v4707, %v4835
        %v4868 = vmul.f32 %v4708, %v4836
        %v4869 = vmul.f32 %v4709, %v4837
        %v4870 = vmul.f32 %v4710, %v4838
        %v4871 = vmul.f32 %v4711, %v4839
        %v4872 = vmul.f32 %v4712, %v4840
        %v4873 = vmul.f32 %v4713, %v4841
        %v4874 = vsub.f32 %v4106, %v4842
        %v4875 = vsub.f32 %v4107, %v4843
        %v4876 = vsub.f32 %v4108, %v4844
        %v4877 = vsub.f32 %v4109, %v4845
        %v4878 = vsub.f32 %v4110, %v4846
        %v4879 = vsub.f32 %v4111, %v4847
        %v4880 = vsub.f32 %v4112, %v4848
        %v4881 = vsub.f32 %v4113, %v4849
        %v4882 = vsub.f32 %v4114, %v4850
        %v4883 = vsub.f32 %v4115, %v4851
        %v4884 = vsub.f32 %v4116, %v4852
        %v4885 = vsub.f32 %v4117, %v4853
        %v4886 = vsub.f32 %v4118, %v4854
        %v4887 = vsub.f32 %v4119, %v4855
        %v4888 = vsub.f32 %v4120, %v4856
        %v4889 = vsub.f32 %v4121, %v4857
        %v4890 = vsub.f32 %v4122, %v4858
        %v4891 = vsub.f32 %v4123, %v4859
        %v4892 = vsub.f32 %v4124, %v4860
        %v4893 = vsub.f32 %v4125, %v4861
        %v4894 = vsub.f32 %v4126, %v4862
        %v4895 = vsub.f32 %v4127, %v4863
        %v4896 = vsub.f32 %v4128, %v4864
        %v4897 = vsub.f32 %v4129, %v4865
        %v4898 = vsub.f32 %v4130, %v4866
        %v4899 = vsub.f32 %v4131, %v4867
        %v4900 = vsub.f32 %v4132, %v4868
        %v4901 = vsub.f32 %v4133, %v4869
        %v4902 = vsub.f32 %v4134, %v4870
        %v4903 = vsub.f32 %v4135, %v4871
        %v4904 = vsub.f32 %v4136, %v4872
        %v4905 = vsub.f32 %v4137, %v4873
        %v4906 = vmul.f32 %v4874, 0.5
        %v4907 = vmul.f32 %v4875, 0.5
        %v4908 = vmul.f32 %v4876, 0.5
        %v4909 = vmul.f32 %v4877, 0.5
        %v4910 = vmul.f32 %v4878, 0.5
        %v4911 = vmul.f32 %v4879, 0.5
        %v4912 = vmul.f32 %v4880, 0.5
        %v4913 = vmul.f32 %v4881, 0.5
        %v4914 = vmul.f32 %v4882, 0.5
        %v4915 = vmul.f32 %v4883, 0.5
        %v4916 = vmul.f32 %v4884, 0.5
        %v4917 = vmul.f32 %v4885, 0.5
        %v4918 = vmul.f32 %v4886, 0.5
        %v4919 = vmul.f32 %v4887, 0.5
        %v4920 = vmul.f32 %v4888, 0.5
        %v4921 = vmul.f32 %v4889, 0.5
        %v4922 = vmul.f32 %v4890, 0.5
        %v4923 = vmul.f32 %v4891, 0.5
        %v4924 = vmul.f32 %v4892, 0.5
        %v4925 = vmul.f32 %v4893, 0.5
        %v4926 = vmul.f32 %v4894, 0.5
        %v4927 = vmul.f32 %v4895, 0.5
        %v4928 = vmul.f32 %v4896, 0.5
        %v4929 = vmul.f32 %v4897, 0.5
        %v4930 = vmul.f32 %v4898, 0.5
        %v4931 = vmul.f32 %v4899, 0.5
        %v4932 = vmul.f32 %v4900, 0.5
        %v4933 = vmul.f32 %v4901, 0.5
        %v4934 = vmul.f32 %v4902, 0.5
        %v4935 = vmul.f32 %v4903, 0.5
        %v4936 = vmul.f32 %v4904, 0.5
        %v4937 = vmul.f32 %v4905, 0.5
        %v4938 = vadd.f32 %v4842, %v4906
        %v4939 = vadd.f32 %v4843, %v4907
        %v4940 = vadd.f32 %v4844, %v4908
        %v4941 = vadd.f32 %v4845, %v4909
        %v4942 = vadd.f32 %v4846, %v4910
        %v4943 = vadd.f32 %v4847, %v4911
        %v4944 = vadd.f32 %v4848, %v4912
        %v4945 = vadd.f32 %v4849, %v4913
        %v4946 = vadd.f32 %v4850, %v4914
        %v4947 = vadd.f32 %v4851, %v4915
        %v4948 = vadd.f32 %v4852, %v4916
        %v4949 = vadd.f32 %v4853, %v4917
        %v4950 = vadd.f32 %v4854, %v4918
        %v4951 = vadd.f32 %v4855, %v4919
        %v4952 = vadd.f32 %v4856, %v4920
        %v4953 = vadd.f32 %v4857, %v4921
        %v4954 = vadd.f32 %v4858, %v4922
        %v4955 = vadd.f32 %v4859, %v4923
        %v4956 = vadd.f32 %v4860, %v4924
        %v4957 = vadd.f32 %v4861, %v4925
        %v4958 = vadd.f32 %v4862, %v4926
        %v4959 = vadd.f32 %v4863, %v4927
        %v4960 = vadd.f32 %v4864, %v4928
        %v4961 = vadd.f32 %v4865, %v4929
        %v4962 = vadd.f32 %v4866, %v4930
        %v4963 = vadd.f32 %v4867, %v4931
        %v4964 = vadd.f32 %v4868, %v4932
        %v4965 = vadd.f32 %v4869, %v4933
        %v4966 = vadd.f32 %v4870, %v4934
        %v4967 = vadd.f32 %v4871, %v4935
        %v4968 = vadd.f32 %v4872, %v4936
        %v4969 = vadd.f32 %v4873, %v4937
        %vm4970 = vcmp.ge.f32.partialorder %v4938, 1.0
        %vm4971 = vcmp.ge.f32.partialorder %v4939, 1.0
        %vm4972 = vcmp.ge.f32.partialorder %v4940, 1.0
        %vm4973 = vcmp.ge.f32.partialorder %v4941, 1.0
        %vm4974 = vcmp.ge.f32.partialorder %v4942, 1.0
        %vm4975 = vcmp.ge.f32.partialorder %v4943, 1.0
        %vm4976 = vcmp.ge.f32.partialorder %v4944, 1.0
        %vm4977 = vcmp.ge.f32.partialorder %v4945, 1.0
        %vm4978 = vcmp.ge.f32.partialorder %v4946, 1.0
        %vm4979 = vcmp.ge.f32.partialorder %v4947, 1.0
        %vm4980 = vcmp.ge.f32.partialorder %v4948, 1.0
        %vm4981 = vcmp.ge.f32.partialorder %v4949, 1.0
        %vm4982 = vcmp.ge.f32.partialorder %v4950, 1.0
        %vm4983 = vcmp.ge.f32.partialorder %v4951, 1.0
        %vm4984 = vcmp.ge.f32.partialorder %v4952, 1.0
        %vm4985 = vcmp.ge.f32.partialorder %v4953, 1.0
        %vm4986 = vcmp.ge.f32.partialorder %v4954, 1.0
        %vm4987 = vcmp.ge.f32.partialorder %v4955, 1.0
        %vm4988 = vcmp.ge.f32.partialorder %v4956, 1.0
        %vm4989 = vcmp.ge.f32.partialorder %v4957, 1.0
        %vm4990 = vcmp.ge.f32.partialorder %v4958, 1.0
        %vm4991 = vcmp.ge.f32.partialorder %v4959, 1.0
        %vm4992 = vcmp.ge.f32.partialorder %v4960, 1.0
        %vm4993 = vcmp.ge.f32.partialorder %v4961, 1.0
        %vm4994 = vcmp.ge.f32.partialorder %v4962, 1.0
        %vm4995 = vcmp.ge.f32.partialorder %v4963, 1.0
        %vm4996 = vcmp.ge.f32.partialorder %v4964, 1.0
        %vm4997 = vcmp.ge.f32.partialorder %v4965, 1.0
        %vm4998 = vcmp.ge.f32.partialorder %v4966, 1.0
        %vm4999 = vcmp.ge.f32.partialorder %v4967, 1.0
        %vm5000 = vcmp.ge.f32.partialorder %v4968, 1.0
        %vm5001 = vcmp.ge.f32.partialorder %v4969, 1.0
        %v5002 = vsel %vm4970, 1, 0
        %v5003 = vsel %vm4971, 1, 0
        %v5004 = vsel %vm4972, 1, 0
        %v5005 = vsel %vm4973, 1, 0
        %v5006 = vsel %vm4974, 1, 0
        %v5007 = vsel %vm4975, 1, 0
        %v5008 = vsel %vm4976, 1, 0
        %v5009 = vsel %vm4977, 1, 0
        %v5010 = vsel %vm4978, 1, 0
        %v5011 = vsel %vm4979, 1, 0
        %v5012 = vsel %vm4980, 1, 0
        %v5013 = vsel %vm4981, 1, 0
        %v5014 = vsel %vm4982, 1, 0
        %v5015 = vsel %vm4983, 1, 0
        %v5016 = vsel %vm4984, 1, 0
        %v5017 = vsel %vm4985, 1, 0
        %v5018 = vsel %vm4986, 1, 0
        %v5019 = vsel %vm4987, 1, 0
        %v5020 = vsel %vm4988, 1, 0
        %v5021 = vsel %vm4989, 1, 0
        %v5022 = vsel %vm4990, 1, 0
        %v5023 = vsel %vm4991, 1, 0
        %v5024 = vsel %vm4992, 1, 0
        %v5025 = vsel %vm4993, 1, 0
        %v5026 = vsel %vm4994, 1, 0
        %v5027 = vsel %vm4995, 1, 0
        %v5028 = vsel %vm4996, 1, 0
        %v5029 = vsel %vm4997, 1, 0
        %v5030 = vsel %vm4998, 1, 0
        %v5031 = vsel %vm4999, 1, 0
        %v5032 = vsel %vm5000, 1, 0
        %v5033 = vsel %vm5001, 1, 0
        %v5034 = vcvt.s32.f32 %v5002
        %v5035 = vcvt.s32.f32 %v5003
        %v5036 = vcvt.s32.f32 %v5004
        %v5037 = vcvt.s32.f32 %v5005
        %v5038 = vcvt.s32.f32 %v5006
        %v5039 = vcvt.s32.f32 %v5007
        %v5040 = vcvt.s32.f32 %v5008
        %v5041 = vcvt.s32.f32 %v5009
        %v5042 = vcvt.s32.f32 %v5010
        %v5043 = vcvt.s32.f32 %v5011
        %v5044 = vcvt.s32.f32 %v5012
        %v5045 = vcvt.s32.f32 %v5013
        %v5046 = vcvt.s32.f32 %v5014
        %v5047 = vcvt.s32.f32 %v5015
        %v5048 = vcvt.s32.f32 %v5016
        %v5049 = vcvt.s32.f32 %v5017
        %v5050 = vcvt.s32.f32 %v5018
        %v5051 = vcvt.s32.f32 %v5019
        %v5052 = vcvt.s32.f32 %v5020
        %v5053 = vcvt.s32.f32 %v5021
        %v5054 = vcvt.s32.f32 %v5022
        %v5055 = vcvt.s32.f32 %v5023
        %v5056 = vcvt.s32.f32 %v5024
        %v5057 = vcvt.s32.f32 %v5025
        %v5058 = vcvt.s32.f32 %v5026
        %v5059 = vcvt.s32.f32 %v5027
        %v5060 = vcvt.s32.f32 %v5028
        %v5061 = vcvt.s32.f32 %v5029
        %v5062 = vcvt.s32.f32 %v5030
        %v5063 = vcvt.s32.f32 %v5031
        %v5064 = vcvt.s32.f32 %v5032
        %v5065 = vcvt.s32.f32 %v5033
        %v5066 = vpack.c.bf16 %v4270, %v4266
        %v5067 = vpack.c.bf16 %v4271, %v4267
        %v5068 = vpack.c.bf16 %v4272, %v4268
        %v5069 = vpack.c.bf16 %v4273, %v4269
        %v5070 = vpack.c.bf16 %v4278, %v4274
        %v5071 = vpack.c.bf16 %v4279, %v4275
        %v5072 = vpack.c.bf16 %v4280, %v4276
        %v5073 = vpack.c.bf16 %v4281, %v4277
        %v5074 = vpack.c.bf16 %v4286, %v4282
        %v5075 = vpack.c.bf16 %v4287, %v4283
        %v5076 = vpack.c.bf16 %v4288, %v4284
        %v5077 = vpack.c.bf16 %v4289, %v4285
        %v5078 = vpack.c.bf16 %v4294, %v4290
        %v5079 = vpack.c.bf16 %v4295, %v4291
        %v5080 = vpack.c.bf16 %v4296, %v4292
        %v5081 = vpack.c.bf16 %v4297, %v4293
        %v5082 = vpack.c.bf16 %v4526, %v4522
        %v5083 = vpack.c.bf16 %v4527, %v4523
        %v5084 = vpack.c.bf16 %v4528, %v4524
        %v5085 = vpack.c.bf16 %v4529, %v4525
        %v5086 = vpack.c.bf16 %v4534, %v4530
        %v5087 = vpack.c.bf16 %v4535, %v4531
        %v5088 = vpack.c.bf16 %v4536, %v4532
        %v5089 = vpack.c.bf16 %v4537, %v4533
        %v5090 = vpack.c.bf16 %v4542, %v4538
        %v5091 = vpack.c.bf16 %v4543, %v4539
        %v5092 = vpack.c.bf16 %v4544, %v4540
        %v5093 = vpack.c.bf16 %v4545, %v4541
        %v5094 = vpack.c.bf16 %v4550, %v4546
        %v5095 = vpack.c.bf16 %v4551, %v4547
        %v5096 = vpack.c.bf16 %v4552, %v4548
        %v5097 = vpack.c.bf16 %v4553, %v4549
        %v5098 = vpack.c.bf16 %v4782, %v4778
        %v5099 = vpack.c.bf16 %v4783, %v4779
        %v5100 = vpack.c.bf16 %v4784, %v4780
        %v5101 = vpack.c.bf16 %v4785, %v4781
        %v5102 = vpack.c.bf16 %v4790, %v4786
        %v5103 = vpack.c.bf16 %v4791, %v4787
        %v5104 = vpack.c.bf16 %v4792, %v4788
        %v5105 = vpack.c.bf16 %v4793, %v4789
        %v5106 = vpack.c.bf16 %v4798, %v4794
        %v5107 = vpack.c.bf16 %v4799, %v4795
        %v5108 = vpack.c.bf16 %v4800, %v4796
        %v5109 = vpack.c.bf16 %v4801, %v4797
        %v5110 = vpack.c.bf16 %v4806, %v4802
        %v5111 = vpack.c.bf16 %v4807, %v4803
        %v5112 = vpack.c.bf16 %v4808, %v4804
        %v5113 = vpack.c.bf16 %v4809, %v4805
        %v5114 = vpack.c.bf16 %v5038, %v5034
        %v5115 = vpack.c.bf16 %v5039, %v5035
        %v5116 = vpack.c.bf16 %v5040, %v5036
        %v5117 = vpack.c.bf16 %v5041, %v5037
        %v5118 = vpack.c.bf16 %v5046, %v5042
        %v5119 = vpack.c.bf16 %v5047, %v5043
        %v5120 = vpack.c.bf16 %v5048, %v5044
        %v5121 = vpack.c.bf16 %v5049, %v5045
        %v5122 = vpack.c.bf16 %v5054, %v5050
        %v5123 = vpack.c.bf16 %v5055, %v5051
        %v5124 = vpack.c.bf16 %v5056, %v5052
        %v5125 = vpack.c.bf16 %v5057, %v5053
        %v5126 = vpack.c.bf16 %v5062, %v5058
        %v5127 = vpack.c.bf16 %v5063, %v5059
        %v5128 = vpack.c.bf16 %v5064, %v5060
        %v5129 = vpack.c.bf16 %v5065, %v5061
        %v5130 = vld [vmem:[#allocation13] sm:$0xf]
        %v5131 = vld [vmem:[#allocation13 + $0x4] sm:$0xf]
        %v5132 = vld [vmem:[#allocation13 + $0x8] sm:$0xf]
        %v5133 = vld [vmem:[#allocation13 + $0xc] sm:$0xf]
        %v5134 = vld [vmem:[#allocation13 + $0x10] sm:$0xf]
        %v5135 = vld [vmem:[#allocation13 + $0x14] sm:$0xf]
        %v5136 = vld [vmem:[#allocation13 + $0x18] sm:$0xf]
        %v5137 = vld [vmem:[#allocation13 + $0x1c] sm:$0xf]
        %v5138 = vld [vmem:[#allocation13 + $0x20] sm:$0xf]
        %v5139 = vld [vmem:[#allocation13 + $0x24] sm:$0xf]
        %v5140 = vld [vmem:[#allocation13 + $0x28] sm:$0xf]
        %v5141 = vld [vmem:[#allocation13 + $0x2c] sm:$0xf]
        %v5142 = vld [vmem:[#allocation13 + $0x30] sm:$0xf]
        %v5143 = vld [vmem:[#allocation13 + $0x34] sm:$0xf]
        %v5144 = vld [vmem:[#allocation13 + $0x38] sm:$0xf]
        %v5145 = vld [vmem:[#allocation13 + $0x3c] sm:$0xf]
        %v5146 = vld [vmem:[#allocation13 + $0x40] sm:$0xf]
        %v5147 = vld [vmem:[#allocation13 + $0x44] sm:$0xf]
        %v5148 = vld [vmem:[#allocation13 + $0x48] sm:$0xf]
        %v5149 = vld [vmem:[#allocation13 + $0x4c] sm:$0xf]
        %v5150 = vld [vmem:[#allocation13 + $0x50] sm:$0xf]
        %v5151 = vld [vmem:[#allocation13 + $0x54] sm:$0xf]
        %v5152 = vld [vmem:[#allocation13 + $0x58] sm:$0xf]
        %v5153 = vld [vmem:[#allocation13 + $0x5c] sm:$0xf]
        %v5154 = vld [vmem:[#allocation13 + $0x60] sm:$0xf]
        %v5155 = vld [vmem:[#allocation13 + $0x64] sm:$0xf]
        %v5156 = vld [vmem:[#allocation13 + $0x68] sm:$0xf]
        %v5157 = vld [vmem:[#allocation13 + $0x6c] sm:$0xf]
        %v5158 = vld [vmem:[#allocation13 + $0x70] sm:$0xf]
        %v5159 = vld [vmem:[#allocation13 + $0x74] sm:$0xf]
        %v5160 = vld [vmem:[#allocation13 + $0x78] sm:$0xf]
        %v5161 = vld [vmem:[#allocation13 + $0x7c] sm:$0xf]
        %v5162 = vld [vmem:[#allocation13 + $0x80] sm:$0xf]
        %v5163 = vld [vmem:[#allocation13 + $0x84] sm:$0xf]
        %v5164 = vld [vmem:[#allocation13 + $0x88] sm:$0xf]
        %v5165 = vld [vmem:[#allocation13 + $0x8c] sm:$0xf]
        %v5166 = vld [vmem:[#allocation13 + $0x90] sm:$0xf]
        %v5167 = vld [vmem:[#allocation13 + $0x94] sm:$0xf]
        %v5168 = vld [vmem:[#allocation13 + $0x98] sm:$0xf]
        %v5169 = vld [vmem:[#allocation13 + $0x9c] sm:$0xf]
        %v5170 = vld [vmem:[#allocation13 + $0xa0] sm:$0xf]
        %v5171 = vld [vmem:[#allocation13 + $0xa4] sm:$0xf]
        %v5172 = vld [vmem:[#allocation13 + $0xa8] sm:$0xf]
        %v5173 = vld [vmem:[#allocation13 + $0xac] sm:$0xf]
        %v5174 = vld [vmem:[#allocation13 + $0xb0] sm:$0xf]
        %v5175 = vld [vmem:[#allocation13 + $0xb4] sm:$0xf]
        %v5176 = vld [vmem:[#allocation13 + $0xb8] sm:$0xf]
        %v5177 = vld [vmem:[#allocation13 + $0xbc] sm:$0xf]
        %v5178 = vld [vmem:[#allocation13 + $0xc0] sm:$0xf]
        %v5179 = vld [vmem:[#allocation13 + $0xc4] sm:$0xf]
        %v5180 = vld [vmem:[#allocation13 + $0xc8] sm:$0xf]
        %v5181 = vld [vmem:[#allocation13 + $0xcc] sm:$0xf]
        %v5182 = vld [vmem:[#allocation13 + $0xd0] sm:$0xf]
        %v5183 = vld [vmem:[#allocation13 + $0xd4] sm:$0xf]
        %v5184 = vld [vmem:[#allocation13 + $0xd8] sm:$0xf]
        %v5185 = vld [vmem:[#allocation13 + $0xdc] sm:$0xf]
        %v5186 = vld [vmem:[#allocation13 + $0xe0] sm:$0xf]
        %v5187 = vld [vmem:[#allocation13 + $0xe4] sm:$0xf]
        %v5188 = vld [vmem:[#allocation13 + $0xe8] sm:$0xf]
        %v5189 = vld [vmem:[#allocation13 + $0xec] sm:$0xf]
        %v5190 = vld [vmem:[#allocation13 + $0xf0] sm:$0xf]
        %v5191 = vld [vmem:[#allocation13 + $0xf4] sm:$0xf]
        %v5192 = vld [vmem:[#allocation13 + $0xf8] sm:$0xf]
        %v5193 = vld [vmem:[#allocation13 + $0xfc] sm:$0xf]
        %v5258 = vunpack.c.l.b16 %v5130
        %v5259 = vunpack.c.l.b16 %v5131
        %v5260 = vunpack.c.l.b16 %v5132
        %v5261 = vunpack.c.l.b16 %v5133
        %v5262 = vunpack.c.l.b16 %v5134
        %v5263 = vunpack.c.l.b16 %v5135
        %v5264 = vunpack.c.l.b16 %v5136
        %v5265 = vunpack.c.l.b16 %v5137
        %v5266 = vunpack.c.l.b16 %v5138
        %v5267 = vunpack.c.l.b16 %v5139
        %v5268 = vunpack.c.l.b16 %v5140
        %v5269 = vunpack.c.l.b16 %v5141
        %v5270 = vunpack.c.l.b16 %v5142
        %v5271 = vunpack.c.l.b16 %v5143
        %v5272 = vunpack.c.l.b16 %v5144
        %v5273 = vunpack.c.l.b16 %v5145
        %v5274 = vunpack.c.l.b16 %v5146
        %v5275 = vunpack.c.l.b16 %v5147
        %v5276 = vunpack.c.l.b16 %v5148
        %v5277 = vunpack.c.l.b16 %v5149
        %v5278 = vunpack.c.l.b16 %v5150
        %v5279 = vunpack.c.l.b16 %v5151
        %v5280 = vunpack.c.l.b16 %v5152
        %v5281 = vunpack.c.l.b16 %v5153
        %v5282 = vunpack.c.l.b16 %v5154
        %v5283 = vunpack.c.l.b16 %v5155
        %v5284 = vunpack.c.l.b16 %v5156
        %v5285 = vunpack.c.l.b16 %v5157
        %v5286 = vunpack.c.l.b16 %v5158
        %v5287 = vunpack.c.l.b16 %v5159
        %v5288 = vunpack.c.l.b16 %v5160
        %v5289 = vunpack.c.l.b16 %v5161
        %v5290 = vunpack.c.l.b16 %v5162
        %v5291 = vunpack.c.l.b16 %v5163
        %v5292 = vunpack.c.l.b16 %v5164
        %v5293 = vunpack.c.l.b16 %v5165
        %v5294 = vunpack.c.l.b16 %v5166
        %v5295 = vunpack.c.l.b16 %v5167
        %v5296 = vunpack.c.l.b16 %v5168
        %v5297 = vunpack.c.l.b16 %v5169
        %v5298 = vunpack.c.l.b16 %v5170
        %v5299 = vunpack.c.l.b16 %v5171
        %v5300 = vunpack.c.l.b16 %v5172
        %v5301 = vunpack.c.l.b16 %v5173
        %v5302 = vunpack.c.l.b16 %v5174
        %v5303 = vunpack.c.l.b16 %v5175
        %v5304 = vunpack.c.l.b16 %v5176
        %v5305 = vunpack.c.l.b16 %v5177
        %v5306 = vunpack.c.l.b16 %v5178
        %v5307 = vunpack.c.l.b16 %v5179
        %v5308 = vunpack.c.l.b16 %v5180
        %v5309 = vunpack.c.l.b16 %v5181
        %v5310 = vunpack.c.l.b16 %v5182
        %v5311 = vunpack.c.l.b16 %v5183
        %v5312 = vunpack.c.l.b16 %v5184
        %v5313 = vunpack.c.l.b16 %v5185
        %v5314 = vunpack.c.l.b16 %v5186
        %v5315 = vunpack.c.l.b16 %v5187
        %v5316 = vunpack.c.l.b16 %v5188
        %v5317 = vunpack.c.l.b16 %v5189
        %v5318 = vunpack.c.l.b16 %v5190
        %v5319 = vunpack.c.l.b16 %v5191
        %v5320 = vunpack.c.l.b16 %v5192
        %v5321 = vunpack.c.l.b16 %v5193
        %v5322 = vpack.c.b16 %v5259, %v5258
        %v5323 = vpack.c.b16 %v5261, %v5260
        %v5324 = vpack.c.b16 %v5263, %v5262
        %v5325 = vpack.c.b16 %v5265, %v5264
        %v5326 = vpack.c.b16 %v5267, %v5266
        %v5327 = vpack.c.b16 %v5269, %v5268
        %v5328 = vpack.c.b16 %v5271, %v5270
        %v5329 = vpack.c.b16 %v5273, %v5272
        %v5330 = vpack.c.b16 %v5275, %v5274
        %v5331 = vpack.c.b16 %v5277, %v5276
        %v5332 = vpack.c.b16 %v5279, %v5278
        %v5333 = vpack.c.b16 %v5281, %v5280
        %v5334 = vpack.c.b16 %v5283, %v5282
        %v5335 = vpack.c.b16 %v5285, %v5284
        %v5336 = vpack.c.b16 %v5287, %v5286
        %v5337 = vpack.c.b16 %v5289, %v5288
        %v5338 = vpack.c.b16 %v5291, %v5290
        %v5339 = vpack.c.b16 %v5293, %v5292
        %v5340 = vpack.c.b16 %v5295, %v5294
        %v5341 = vpack.c.b16 %v5297, %v5296
        %v5342 = vpack.c.b16 %v5299, %v5298
        %v5343 = vpack.c.b16 %v5301, %v5300
        %v5344 = vpack.c.b16 %v5303, %v5302
        %v5345 = vpack.c.b16 %v5305, %v5304
        %v5346 = vpack.c.b16 %v5307, %v5306
        %v5347 = vpack.c.b16 %v5309, %v5308
        %v5348 = vpack.c.b16 %v5311, %v5310
        %v5349 = vpack.c.b16 %v5313, %v5312
        %v5350 = vpack.c.b16 %v5315, %v5314
        %v5351 = vpack.c.b16 %v5317, %v5316
        %v5352 = vpack.c.b16 %v5319, %v5318
        %v5353 = vpack.c.b16 %v5321, %v5320
        %5386 = vmatprep.subr.bf16.mxu0 0
        %5387 = vmatpush1.bf16.msra.mxu0 %v5329
        %5388 = vmatprep.subr.bf16.mxu0 0
        %5389 = vmatpush1.bf16.msra.mxu0 %v5328
        %5390 = vmatprep.subr.bf16.mxu0 0
        %5391 = vmatpush1.bf16.msra.mxu0 %v5327
        %5392 = vmatprep.subr.bf16.mxu0 0
        %5393 = vmatpush1.bf16.msra.mxu0 %v5326
        %5394 = vmatprep.subr.bf16.mxu0 0
        %5395 = vmatpush1.bf16.msra.mxu0 %v5325
        %5396 = vmatprep.subr.bf16.mxu0 0
        %5397 = vmatpush1.bf16.msra.mxu0 %v5324
        %5398 = vmatprep.subr.bf16.mxu0 0
        %5399 = vmatpush1.bf16.msra.mxu0 %v5323
        %5400 = vmatprep.subr.bf16.mxu0 0
        %5401 = vmatpush1.bf16.msra.mxu0 %v5322
        %5402 = vmatprep.subr.bf16.mxu0 0
        %5403 = vmatpush2.bf16.msra.mxu0 %v5337
        %5404 = vmatprep.subr.bf16.mxu0 0
        %5405 = vmatpush2.bf16.msra.mxu0 %v5336
        %5406 = vmatprep.subr.bf16.mxu0 0
        %5407 = vmatpush2.bf16.msra.mxu0 %v5335
        %5408 = vmatprep.subr.bf16.mxu0 0
        %5409 = vmatpush2.bf16.msra.mxu0 %v5334
        %5410 = vmatprep.subr.bf16.mxu0 0
        %5411 = vmatpush2.bf16.msra.mxu0 %v5333
        %5412 = vmatprep.subr.bf16.mxu0 0
        %5413 = vmatpush2.bf16.msra.mxu0 %v5332
        %5414 = vmatprep.subr.bf16.mxu0 0
        %5415 = vmatpush2.bf16.msra.mxu0 %v5331
        %5416 = vmatprep.subr.bf16.mxu0 0
        %5417 = vmatpush2.bf16.msra.mxu0 %v5330
        %5418 = vmatprep.mubr.bf16.mxu0 %v5067
        %5419 = vmatmul.mubr.bf16.gmra.mxu0 %v5066
        %v5420 = vpop.f32.mrf.mxu0
        %v5421 = vadd.f32 0.0, %v5420
        %v5422 = vpop.f32.mrf.mxu0
        %v5423 = vpop.f32.mrf.mxu0
        %v5424 = vadd.f32 0.0, %v5423
        %v5425 = vpop.f32.mrf.mxu0
        %5426 = vmatprep.mubr.bf16.mxu0 %v5071
        %5427 = vmatmul.mubr.bf16.gmra.mxu0 %v5070
        %v5428 = vpop.f32.mrf.mxu0
        %v5429 = vadd.f32 0.0, %v5428
        %v5430 = vpop.f32.mrf.mxu0
        %v5431 = vpop.f32.mrf.mxu0
        %v5432 = vadd.f32 0.0, %v5431
        %v5433 = vpop.f32.mrf.mxu0
        %5434 = vmatprep.mubr.bf16.mxu0 %v5075
        %5435 = vmatmul.mubr.bf16.gmra.mxu0 %v5074
        %v5436 = vpop.f32.mrf.mxu0
        %v5437 = vadd.f32 0.0, %v5436
        %v5438 = vpop.f32.mrf.mxu0
        %v5439 = vpop.f32.mrf.mxu0
        %v5440 = vadd.f32 0.0, %v5439
        %v5441 = vpop.f32.mrf.mxu0
        %5442 = vmatprep.mubr.bf16.mxu0 %v5079
        %5443 = vmatmul.mubr.bf16.gmra.mxu0 %v5078
        %v5444 = vpop.f32.mrf.mxu0
        %v5445 = vadd.f32 0.0, %v5444
        %v5446 = vpop.f32.mrf.mxu0
        %v5447 = vpop.f32.mrf.mxu0
        %v5448 = vadd.f32 0.0, %v5447
        %v5449 = vpop.f32.mrf.mxu0
        %5450 = vmatprep.mubr.bf16.mxu0 %v5083
        %5451 = vmatmul.mubr.bf16.gmra.mxu0 %v5082
        %v5452 = vpop.f32.mrf.mxu0
        %v5453 = vadd.f32 0.0, %v5452
        %v5454 = vpop.f32.mrf.mxu0
        %v5455 = vpop.f32.mrf.mxu0
        %v5456 = vadd.f32 0.0, %v5455
        %v5457 = vpop.f32.mrf.mxu0
        %5458 = vmatprep.mubr.bf16.mxu0 %v5087
        %5459 = vmatmul.mubr.bf16.gmra.mxu0 %v5086
        %v5460 = vpop.f32.mrf.mxu0
        %v5461 = vadd.f32 0.0, %v5460
        %v5462 = vpop.f32.mrf.mxu0
        %v5463 = vpop.f32.mrf.mxu0
        %v5464 = vadd.f32 0.0, %v5463
        %v5465 = vpop.f32.mrf.mxu0
        %5466 = vmatprep.mubr.bf16.mxu0 %v5091
        %5467 = vmatmul.mubr.bf16.gmra.mxu0 %v5090
        %v5468 = vpop.f32.mrf.mxu0
        %v5469 = vadd.f32 0.0, %v5468
        %v5470 = vpop.f32.mrf.mxu0
        %v5471 = vpop.f32.mrf.mxu0
        %v5472 = vadd.f32 0.0, %v5471
        %v5473 = vpop.f32.mrf.mxu0
        %5474 = vmatprep.mubr.bf16.mxu0 %v5095
        %5475 = vmatmul.mubr.bf16.gmra.mxu0 %v5094
        %v5476 = vpop.f32.mrf.mxu0
        %v5477 = vadd.f32 0.0, %v5476
        %v5478 = vpop.f32.mrf.mxu0
        %v5479 = vpop.f32.mrf.mxu0
        %v5480 = vadd.f32 0.0, %v5479
        %v5481 = vpop.f32.mrf.mxu0
        %5482 = vmatprep.mubr.bf16.mxu0 %v5099
        %5483 = vmatmul.mubr.bf16.gmra.mxu0 %v5098
        %v5484 = vpop.f32.mrf.mxu0
        %v5485 = vadd.f32 0.0, %v5484
        %v5486 = vpop.f32.mrf.mxu0
        %v5487 = vpop.f32.mrf.mxu0
        %v5488 = vadd.f32 0.0, %v5487
        %v5489 = vpop.f32.mrf.mxu0
        %5490 = vmatprep.mubr.bf16.mxu0 %v5103
        %5491 = vmatmul.mubr.bf16.gmra.mxu0 %v5102
        %v5492 = vpop.f32.mrf.mxu0
        %v5493 = vadd.f32 0.0, %v5492
        %v5494 = vpop.f32.mrf.mxu0
        %v5495 = vpop.f32.mrf.mxu0
        %v5496 = vadd.f32 0.0, %v5495
        %v5497 = vpop.f32.mrf.mxu0
        %5498 = vmatprep.mubr.bf16.mxu0 %v5107
        %5499 = vmatmul.mubr.bf16.gmra.mxu0 %v5106
        %v5500 = vpop.f32.mrf.mxu0
        %v5501 = vadd.f32 0.0, %v5500
        %v5502 = vpop.f32.mrf.mxu0
        %v5503 = vpop.f32.mrf.mxu0
        %v5504 = vadd.f32 0.0, %v5503
        %v5505 = vpop.f32.mrf.mxu0
        %5506 = vmatprep.mubr.bf16.mxu0 %v5111
        %5507 = vmatmul.mubr.bf16.gmra.mxu0 %v5110
        %v5508 = vpop.f32.mrf.mxu0
        %v5509 = vadd.f32 0.0, %v5508
        %v5510 = vpop.f32.mrf.mxu0
        %v5511 = vpop.f32.mrf.mxu0
        %v5512 = vadd.f32 0.0, %v5511
        %v5513 = vpop.f32.mrf.mxu0
        %5514 = vmatprep.mubr.bf16.mxu0 %v5115
        %5515 = vmatmul.mubr.bf16.gmra.mxu0 %v5114
        %v5516 = vpop.f32.mrf.mxu0
        %v5517 = vadd.f32 0.0, %v5516
        %v5518 = vpop.f32.mrf.mxu0
        %v5519 = vpop.f32.mrf.mxu0
        %v5520 = vadd.f32 0.0, %v5519
        %v5521 = vpop.f32.mrf.mxu0
        %5522 = vmatprep.mubr.bf16.mxu0 %v5119
        %5523 = vmatmul.mubr.bf16.gmra.mxu0 %v5118
        %v5524 = vpop.f32.mrf.mxu0
        %v5525 = vadd.f32 0.0, %v5524
        %v5526 = vpop.f32.mrf.mxu0
        %v5527 = vpop.f32.mrf.mxu0
        %v5528 = vadd.f32 0.0, %v5527
        %v5529 = vpop.f32.mrf.mxu0
        %5530 = vmatprep.mubr.bf16.mxu0 %v5123
        %5531 = vmatmul.mubr.bf16.gmra.mxu0 %v5122
        %v5532 = vpop.f32.mrf.mxu0
        %v5533 = vadd.f32 0.0, %v5532
        %v5534 = vpop.f32.mrf.mxu0
        %v5535 = vpop.f32.mrf.mxu0
        %v5536 = vadd.f32 0.0, %v5535
        %v5537 = vpop.f32.mrf.mxu0
        %5538 = vmatprep.mubr.bf16.mxu0 %v5127
        %5539 = vmatmul.mubr.bf16.gmra.mxu0 %v5126
        %v5540 = vpop.f32.mrf.mxu0
        %v5541 = vadd.f32 0.0, %v5540
        %v5542 = vpop.f32.mrf.mxu0
        %v5543 = vpop.f32.mrf.mxu0
        %v5544 = vadd.f32 0.0, %v5543
        %v5545 = vpop.f32.mrf.mxu0
        %5546 = vdwg.mxu0
        %5547 = vmatprep.subr.bf16.mxu0 0
        %5548 = vmatpush1.bf16.msra.mxu0 %v5345
        %5549 = vmatprep.subr.bf16.mxu0 0
        %5550 = vmatpush1.bf16.msra.mxu0 %v5344
        %5551 = vmatprep.subr.bf16.mxu0 0
        %5552 = vmatpush1.bf16.msra.mxu0 %v5343
        %5553 = vmatprep.subr.bf16.mxu0 0
        %5554 = vmatpush1.bf16.msra.mxu0 %v5342
        %5555 = vmatprep.subr.bf16.mxu0 0
        %5556 = vmatpush1.bf16.msra.mxu0 %v5341
        %5557 = vmatprep.subr.bf16.mxu0 0
        %5558 = vmatpush1.bf16.msra.mxu0 %v5340
        %5559 = vmatprep.subr.bf16.mxu0 0
        %5560 = vmatpush1.bf16.msra.mxu0 %v5339
        %5561 = vmatprep.subr.bf16.mxu0 0
        %5562 = vmatpush1.bf16.msra.mxu0 %v5338
        %5563 = vmatprep.subr.bf16.mxu0 0
        %5564 = vmatpush2.bf16.msra.mxu0 %v5353
        %5565 = vmatprep.subr.bf16.mxu0 0
        %5566 = vmatpush2.bf16.msra.mxu0 %v5352
        %5567 = vmatprep.subr.bf16.mxu0 0
        %5568 = vmatpush2.bf16.msra.mxu0 %v5351
        %5569 = vmatprep.subr.bf16.mxu0 0
        %5570 = vmatpush2.bf16.msra.mxu0 %v5350
        %5571 = vmatprep.subr.bf16.mxu0 0
        %5572 = vmatpush2.bf16.msra.mxu0 %v5349
        %5573 = vmatprep.subr.bf16.mxu0 0
        %5574 = vmatpush2.bf16.msra.mxu0 %v5348
        %5575 = vmatprep.subr.bf16.mxu0 0
        %5576 = vmatpush2.bf16.msra.mxu0 %v5347
        %5577 = vmatprep.subr.bf16.mxu0 0
        %5578 = vmatpush2.bf16.msra.mxu0 %v5346
        %5579 = vmatprep.mubr.bf16.mxu0 %v5069
        %5580 = vmatmul.mubr.bf16.gmra.mxu0 %v5068
        %v5581 = vpop.f32.mrf.mxu0
        %v5582 = vadd.f32 %v5421, %v5581
        %v5583 = vpop.f32.mrf.mxu0
        %v5584 = vpop.f32.mrf.mxu0
        %v5585 = vadd.f32 %v5424, %v5584
        %v5586 = vpop.f32.mrf.mxu0
        %5587 = vmatprep.mubr.bf16.mxu0 %v5073
        %5588 = vmatmul.mubr.bf16.gmra.mxu0 %v5072
        %v5589 = vpop.f32.mrf.mxu0
        %v5590 = vadd.f32 %v5429, %v5589
        %v5591 = vpop.f32.mrf.mxu0
        %v5592 = vpop.f32.mrf.mxu0
        %v5593 = vadd.f32 %v5432, %v5592
        %v5594 = vpop.f32.mrf.mxu0
        %5595 = vmatprep.mubr.bf16.mxu0 %v5077
        %5596 = vmatmul.mubr.bf16.gmra.mxu0 %v5076
        %v5597 = vpop.f32.mrf.mxu0
        %v5598 = vadd.f32 %v5437, %v5597
        %v5599 = vpop.f32.mrf.mxu0
        %v5600 = vpop.f32.mrf.mxu0
        %v5601 = vadd.f32 %v5440, %v5600
        %v5602 = vpop.f32.mrf.mxu0
        %5603 = vmatprep.mubr.bf16.mxu0 %v5081
        %5604 = vmatmul.mubr.bf16.gmra.mxu0 %v5080
        %v5605 = vpop.f32.mrf.mxu0
        %v5606 = vadd.f32 %v5445, %v5605
        %v5607 = vpop.f32.mrf.mxu0
        %v5608 = vpop.f32.mrf.mxu0
        %v5609 = vadd.f32 %v5448, %v5608
        %v5610 = vpop.f32.mrf.mxu0
        %5611 = vmatprep.mubr.bf16.mxu0 %v5085
        %5612 = vmatmul.mubr.bf16.gmra.mxu0 %v5084
        %v5613 = vpop.f32.mrf.mxu0
        %v5614 = vadd.f32 %v5453, %v5613
        %v5615 = vpop.f32.mrf.mxu0
        %v5616 = vpop.f32.mrf.mxu0
        %v5617 = vadd.f32 %v5456, %v5616
        %v5618 = vpop.f32.mrf.mxu0
        %5619 = vmatprep.mubr.bf16.mxu0 %v5089
        %5620 = vmatmul.mubr.bf16.gmra.mxu0 %v5088
        %v5621 = vpop.f32.mrf.mxu0
        %v5622 = vadd.f32 %v5461, %v5621
        %v5623 = vpop.f32.mrf.mxu0
        %v5624 = vpop.f32.mrf.mxu0
        %v5625 = vadd.f32 %v5464, %v5624
        %v5626 = vpop.f32.mrf.mxu0
        %5627 = vmatprep.mubr.bf16.mxu0 %v5093
        %5628 = vmatmul.mubr.bf16.gmra.mxu0 %v5092
        %v5629 = vpop.f32.mrf.mxu0
        %v5630 = vadd.f32 %v5469, %v5629
        %v5631 = vpop.f32.mrf.mxu0
        %v5632 = vpop.f32.mrf.mxu0
        %v5633 = vadd.f32 %v5472, %v5632
        %v5634 = vpop.f32.mrf.mxu0
        %5635 = vmatprep.mubr.bf16.mxu0 %v5097
        %5636 = vmatmul.mubr.bf16.gmra.mxu0 %v5096
        %v5637 = vpop.f32.mrf.mxu0
        %v5638 = vadd.f32 %v5477, %v5637
        %v5639 = vpop.f32.mrf.mxu0
        %v5640 = vpop.f32.mrf.mxu0
        %v5641 = vadd.f32 %v5480, %v5640
        %v5642 = vpop.f32.mrf.mxu0
        %5643 = vmatprep.mubr.bf16.mxu0 %v5101
        %5644 = vmatmul.mubr.bf16.gmra.mxu0 %v5100
        %v5645 = vpop.f32.mrf.mxu0
        %v5646 = vadd.f32 %v5485, %v5645
        %v5647 = vpop.f32.mrf.mxu0
        %v5648 = vpop.f32.mrf.mxu0
        %v5649 = vadd.f32 %v5488, %v5648
        %v5650 = vpop.f32.mrf.mxu0
        %5651 = vmatprep.mubr.bf16.mxu0 %v5105
        %5652 = vmatmul.mubr.bf16.gmra.mxu0 %v5104
        %v5653 = vpop.f32.mrf.mxu0
        %v5654 = vadd.f32 %v5493, %v5653
        %v5655 = vpop.f32.mrf.mxu0
        %v5656 = vpop.f32.mrf.mxu0
        %v5657 = vadd.f32 %v5496, %v5656
        %v5658 = vpop.f32.mrf.mxu0
        %5659 = vmatprep.mubr.bf16.mxu0 %v5109
        %5660 = vmatmul.mubr.bf16.gmra.mxu0 %v5108
        %v5661 = vpop.f32.mrf.mxu0
        %v5662 = vadd.f32 %v5501, %v5661
        %v5663 = vpop.f32.mrf.mxu0
        %v5664 = vpop.f32.mrf.mxu0
        %v5665 = vadd.f32 %v5504, %v5664
        %v5666 = vpop.f32.mrf.mxu0
        %5667 = vmatprep.mubr.bf16.mxu0 %v5113
        %5668 = vmatmul.mubr.bf16.gmra.mxu0 %v5112
        %v5669 = vpop.f32.mrf.mxu0
        %v5670 = vadd.f32 %v5509, %v5669
        %v5671 = vpop.f32.mrf.mxu0
        %v5672 = vpop.f32.mrf.mxu0
        %v5673 = vadd.f32 %v5512, %v5672
        %v5674 = vpop.f32.mrf.mxu0
        %5675 = vmatprep.mubr.bf16.mxu0 %v5117
        %5676 = vmatmul.mubr.bf16.gmra.mxu0 %v5116
        %v5677 = vpop.f32.mrf.mxu0
        %v5678 = vadd.f32 %v5517, %v5677
        %v5679 = vpop.f32.mrf.mxu0
        %v5680 = vpop.f32.mrf.mxu0
        %v5681 = vadd.f32 %v5520, %v5680
        %v5682 = vpop.f32.mrf.mxu0
        %5683 = vmatprep.mubr.bf16.mxu0 %v5121
        %5684 = vmatmul.mubr.bf16.gmra.mxu0 %v5120
        %v5685 = vpop.f32.mrf.mxu0
        %v5686 = vadd.f32 %v5525, %v5685
        %v5687 = vpop.f32.mrf.mxu0
        %v5688 = vpop.f32.mrf.mxu0
        %v5689 = vadd.f32 %v5528, %v5688
        %v5690 = vpop.f32.mrf.mxu0
        %5691 = vmatprep.mubr.bf16.mxu0 %v5125
        %5692 = vmatmul.mubr.bf16.gmra.mxu0 %v5124
        %v5693 = vpop.f32.mrf.mxu0
        %v5694 = vadd.f32 %v5533, %v5693
        %v5695 = vpop.f32.mrf.mxu0
        %v5696 = vpop.f32.mrf.mxu0
        %v5697 = vadd.f32 %v5536, %v5696
        %v5698 = vpop.f32.mrf.mxu0
        %5699 = vmatprep.mubr.bf16.mxu0 %v5129
        %5700 = vmatmul.mubr.bf16.gmra.mxu0 %v5128
        %v5701 = vpop.f32.mrf.mxu0
        %v5702 = vadd.f32 %v5541, %v5701
        %v5703 = vpop.f32.mrf.mxu0
        %v5704 = vpop.f32.mrf.mxu0
        %v5705 = vadd.f32 %v5544, %v5704
        %v5706 = vpop.f32.mrf.mxu0
        %5707 = vdwg.mxu0
        %v5708 = vld [vmem:[%s11] sm:$0x1]
        %v5710 = vlaneseq
        %v5711 = vshrl.u32 %v5710, 7
        %v5712 = vsub.s32 0, %v5711
        %v5713 = vrot.slane %v5708, %v5712
        %v5715 = vmul.f32 %v5582, %v5713
        %v5716 = vmul.f32 %v5585, %v5713
        %v5717 = vmul.f32 %v5590, %v5713
        %v5718 = vmul.f32 %v5593, %v5713
        %v5719 = vmul.f32 %v5598, %v5713
        %v5720 = vmul.f32 %v5601, %v5713
        %v5721 = vmul.f32 %v5606, %v5713
        %v5722 = vmul.f32 %v5609, %v5713
        %v5723 = vmul.f32 %v5614, %v5713
        %v5724 = vmul.f32 %v5617, %v5713
        %v5725 = vmul.f32 %v5622, %v5713
        %v5726 = vmul.f32 %v5625, %v5713
        %v5727 = vmul.f32 %v5630, %v5713
        %v5728 = vmul.f32 %v5633, %v5713
        %v5729 = vmul.f32 %v5638, %v5713
        %v5730 = vmul.f32 %v5641, %v5713
        %v5731 = vmul.f32 %v5646, %v5713
        %v5732 = vmul.f32 %v5649, %v5713
        %v5733 = vmul.f32 %v5654, %v5713
        %v5734 = vmul.f32 %v5657, %v5713
        %v5735 = vmul.f32 %v5662, %v5713
        %v5736 = vmul.f32 %v5665, %v5713
        %v5737 = vmul.f32 %v5670, %v5713
        %v5738 = vmul.f32 %v5673, %v5713
        %v5739 = vmul.f32 %v5678, %v5713
        %v5740 = vmul.f32 %v5681, %v5713
        %v5741 = vmul.f32 %v5686, %v5713
        %v5742 = vmul.f32 %v5689, %v5713
        %v5743 = vmul.f32 %v5694, %v5713
        %v5744 = vmul.f32 %v5697, %v5713
        %v5745 = vmul.f32 %v5702, %v5713
        %v5746 = vmul.f32 %v5705, %v5713
        %v5747 = vld [vmem:[%s12] sm:$0x1]
        %v5749 = vlaneseq
        %v5750 = vshrl.u32 %v5749, 7
        %v5751 = vsub.s32 0, %v5750
        %v5752 = vrot.slane %v5747, %v5751
        %v5754 = vadd.f32 %v5715, %v5752
        %v5755 = vadd.f32 %v5716, %v5752
        %v5756 = vadd.f32 %v5717, %v5752
        %v5757 = vadd.f32 %v5718, %v5752
        %v5758 = vadd.f32 %v5719, %v5752
        %v5759 = vadd.f32 %v5720, %v5752
        %v5760 = vadd.f32 %v5721, %v5752
        %v5761 = vadd.f32 %v5722, %v5752
        %v5762 = vadd.f32 %v5723, %v5752
        %v5763 = vadd.f32 %v5724, %v5752
        %v5764 = vadd.f32 %v5725, %v5752
        %v5765 = vadd.f32 %v5726, %v5752
        %v5766 = vadd.f32 %v5727, %v5752
        %v5767 = vadd.f32 %v5728, %v5752
        %v5768 = vadd.f32 %v5729, %v5752
        %v5769 = vadd.f32 %v5730, %v5752
        %v5770 = vadd.f32 %v5731, %v5752
        %v5771 = vadd.f32 %v5732, %v5752
        %v5772 = vadd.f32 %v5733, %v5752
        %v5773 = vadd.f32 %v5734, %v5752
        %v5774 = vadd.f32 %v5735, %v5752
        %v5775 = vadd.f32 %v5736, %v5752
        %v5776 = vadd.f32 %v5737, %v5752
        %v5777 = vadd.f32 %v5738, %v5752
        %v5778 = vadd.f32 %v5739, %v5752
        %v5779 = vadd.f32 %v5740, %v5752
        %v5780 = vadd.f32 %v5741, %v5752
        %v5781 = vadd.f32 %v5742, %v5752
        %v5782 = vadd.f32 %v5743, %v5752
        %v5783 = vadd.f32 %v5744, %v5752
        %v5784 = vadd.f32 %v5745, %v5752
        %v5785 = vadd.f32 %v5746, %v5752
        %v5786 = vadd.f32 %v5754, %v2980
        %v5787 = vadd.f32 %v5755, %v2981
        %v5788 = vadd.f32 %v5756, %v2982
        %v5789 = vadd.f32 %v5757, %v2983
        %v5790 = vadd.f32 %v5758, %v2984
        %v5791 = vadd.f32 %v5759, %v2985
        %v5792 = vadd.f32 %v5760, %v2986
        %v5793 = vadd.f32 %v5761, %v2987
        %v5794 = vadd.f32 %v5762, %v2988
        %v5795 = vadd.f32 %v5763, %v2989
        %v5796 = vadd.f32 %v5764, %v2990
        %v5797 = vadd.f32 %v5765, %v2991
        %v5798 = vadd.f32 %v5766, %v2992
        %v5799 = vadd.f32 %v5767, %v2993
        %v5800 = vadd.f32 %v5768, %v2994
        %v5801 = vadd.f32 %v5769, %v2995
        %v5802 = vadd.f32 %v5770, %v2996
        %v5803 = vadd.f32 %v5771, %v2997
        %v5804 = vadd.f32 %v5772, %v2998
        %v5805 = vadd.f32 %v5773, %v2999
        %v5806 = vadd.f32 %v5774, %v3000
        %v5807 = vadd.f32 %v5775, %v3001
        %v5808 = vadd.f32 %v5776, %v3002
        %v5809 = vadd.f32 %v5777, %v3003
        %v5810 = vadd.f32 %v5778, %v3004
        %v5811 = vadd.f32 %v5779, %v3005
        %v5812 = vadd.f32 %v5780, %v3006
        %v5813 = vadd.f32 %v5781, %v3007
        %v5814 = vadd.f32 %v5782, %v3008
        %v5815 = vadd.f32 %v5783, %v3009
        %v5816 = vadd.f32 %v5784, %v3010
        %v5817 = vadd.f32 %v5785, %v3011
        %5818 = vst [vmem:[%s566] sm:$0xff] %v5786
        %5819 = vst [vmem:[%s566 + $0x8] sm:$0xff] %v5787
        %5820 = vst [vmem:[%s566 + $0x10] sm:$0xff] %v5788
        %5821 = vst [vmem:[%s566 + $0x18] sm:$0xff] %v5789
        %5822 = vst [vmem:[%s566 + $0x20] sm:$0xff] %v5790
        %5823 = vst [vmem:[%s566 + $0x28] sm:$0xff] %v5791
        %5824 = vst [vmem:[%s566 + $0x30] sm:$0xff] %v5792
        %5825 = vst [vmem:[%s566 + $0x38] sm:$0xff] %v5793
        %5826 = vst [vmem:[%s566 + $0x40] sm:$0xff] %v5794
        %5827 = vst [vmem:[%s566 + $0x48] sm:$0xff] %v5795
        %5828 = vst [vmem:[%s566 + $0x50] sm:$0xff] %v5796
        %5829 = vst [vmem:[%s566 + $0x58] sm:$0xff] %v5797
        %5830 = vst [vmem:[%s566 + $0x60] sm:$0xff] %v5798
        %5831 = vst [vmem:[%s566 + $0x68] sm:$0xff] %v5799
        %5832 = vst [vmem:[%s566 + $0x70] sm:$0xff] %v5800
        %5833 = vst [vmem:[%s566 + $0x78] sm:$0xff] %v5801
        %5834 = vst [vmem:[%s566 + $0x80] sm:$0xff] %v5802
        %5835 = vst [vmem:[%s566 + $0x88] sm:$0xff] %v5803
        %5836 = vst [vmem:[%s566 + $0x90] sm:$0xff] %v5804
        %5837 = vst [vmem:[%s566 + $0x98] sm:$0xff] %v5805
        %5838 = vst [vmem:[%s566 + $0xa0] sm:$0xff] %v5806
        %5839 = vst [vmem:[%s566 + $0xa8] sm:$0xff] %v5807
        %5840 = vst [vmem:[%s566 + $0xb0] sm:$0xff] %v5808
        %5841 = vst [vmem:[%s566 + $0xb8] sm:$0xff] %v5809
        %5842 = vst [vmem:[%s566 + $0xc0] sm:$0xff] %v5810
        %5843 = vst [vmem:[%s566 + $0xc8] sm:$0xff] %v5811
        %5844 = vst [vmem:[%s566 + $0xd0] sm:$0xff] %v5812
        %5845 = vst [vmem:[%s566 + $0xd8] sm:$0xff] %v5813
        %5846 = vst [vmem:[%s566 + $0xe0] sm:$0xff] %v5814
        %5847 = vst [vmem:[%s566 + $0xe8] sm:$0xff] %v5815
        %5848 = vst [vmem:[%s566 + $0xf0] sm:$0xff] %v5816
        %5849 = vst [vmem:[%s566 + $0xf8] sm:$0xff] %v5817
        %s5850 = sand.u32 %s319, 1
        %s5851 = scalar_lea.sflag [#allocation4], %s5850
        %s5852 = sand.u32 %s319, 1
        %s5853 = smul.addr %s5852, 256
        %s5854 = scalar_lea.vmem [#allocation14], %s5853
        // Predicated region
        $region101: #{tpu_custom_call.1} parent=71 // pred_check
          %p5855 = pneg %p329
        $region102: #{tpu_custom_call.1} parent=71 // pred_check_branch
          %5857 = sbr.rel (%p5855) target = $region104
        $region103: #{tpu_custom_call.1} parent=71 // pred_region
          #allocation18 [shape = 'u32[6]{0}', space=smem, size = 0x18, scoped, tag = 'DMA stride descriptor']
          %s5859 = ssub.s32 4096, 4096
          %5860 = vsyncadd %s5851, %s5859
          %s5861 = smul.addr %s33, 8
          %s5862 = smul.addr %s5861, 128
          %s5863 = scalar_lea.hbm %s13, %s5862
          %s5865 = sshll.u32 1, 14
          %s5866 = sxor.u32 4294967295, %s5865
          %s5869 = sshll.u32 7, 18
          %s5870 = sxor.u32 4294967295, %s5869
          %s5871 = sand.u32 0, %s5870
          %s5873 = sor.u32 %s5871, 0
          %s5874 = sshll.u32 %s5854, 4
          %s5875 = int_to_ptr.vmem [resolvable:$true] %s5874
          %5881 = sst [smem:[#allocation18]] 1024
          %s5882 = scalar_lea.smem [#allocation18], 1
          %5883 = sst [smem:[%s5882]] 2048
          %s5884 = scalar_lea.smem [#allocation18], 2
          %5885 = sst [smem:[%s5884]] 8
          %s5886 = scalar_lea.smem [#allocation18], 3
          %5887 = sst [smem:[%s5886]] 128
          %s5888 = scalar_lea.smem [#allocation18], 4
          %5889 = sst [smem:[%s5888]] 128
          %s5890 = scalar_lea.smem [#allocation18], 5
          %5891 = sst [smem:[%s5890]] 8
          %5893 = dma.general %s5875, 4096, %s5863, %s5851, 131072, [#allocation18], %s5873, 0
        $region104: #{tpu_custom_call.1} parent=71 // pred_fallthru
          _
      $region72: #{tpu_custom_call.1} parent=5 // pred_fallthru
        _
      %p5894 = scmp.le.s32.totalorder 2, %s28
      // Predicated region
      $region105: #{tpu_custom_call.1} parent=5 // pred_check
        %p5895 = pneg %p5894
      $region106: #{tpu_custom_call.1} parent=5 // pred_check_branch
        %5897 = sbr.rel (%p5895) target = $region108
      $region107: #{tpu_custom_call.1} parent=5 // pred_region
        %s5898 = ssub.s32 %s28, 2
        // Predicated region
        $region109: #{tpu_custom_call.1} parent=107 // pred_check
          %p5899 = pneg %p335
        $region110: #{tpu_custom_call.1} parent=107 // pred_check_branch
          %5901 = sbr.rel (%p5899) target = $region112
        $region111: #{tpu_custom_call.1} parent=107 // pred_region
          %s5902 = sand.u32 %s320, 1
          %s5903 = scalar_lea.sflag [#allocation4], %s5902
          %s5904 = sand.u32 %s320, 1
          %s5905 = smul.addr %s5904, 256
          %s5906 = scalar_lea.vmem [#allocation14], %s5905
          %5907 = dma.done %s5903, 4096
        $region112: #{tpu_custom_call.1} parent=107 // pred_fallthru
          _
      $region108: #{tpu_custom_call.1} parent=5 // pred_fallthru
        _
    $region6: #{tpu_custom_call.1} parent=1 // loop_footer
      %s32 = sadd.s32 1, %s28
    $region7: #{tpu_custom_call.1} parent=1 // loop_footer_branch
      %27 = sbr.rel target = $region3
    $region8: #{tpu_custom_call.1} parent=1 // loop_exit
      _
    %5908 = vsyncpa [#allocation3], 1
    %s5909 = scalar_lea.sflag [#allocation3], 1
    %5910 = vsyncpa %s5909, 1
    %5911 = vsyncpa [#allocation6], 1
    %5912 = vsyncpa [#allocation9], 1
    %5913 = vsyncpa [#allocation12], 1
    %5914 = vsyncpa [#allocation4], 1
    %s5915 = scalar_lea.sflag [#allocation4], 1
    %5916 = vsyncpa %s5915, 1

</llo_original>
